<compile_context>
chip_gen: v7x
topology: tpu7x:2x2x1
jax: 0.10.0
libtpu: 0.0.40
codegen_flags: <defaults>
</compile_context>

<pallas_src>
import functools
import math

import numpy as np

import jax
import jax.numpy as jnp
from jax import lax
from jax.experimental import pallas as pl
from jax.experimental.pallas import tpu as pltpu

F32 = jnp.float32
BF16 = jnp.bfloat16
LN_EPS = 1e-6                     # timm ViT/DeiT uses LayerNorm(eps=1e-6)
INV_SQRT2 = 1.0 / math.sqrt(2.0)
NPAD = 8                          # sublane-aligned per-frame token slab
NEG_BIG = -1e30                   # additive attention mask value


def _layernorm(v, g, b):
    # var = E[x^2] - mu^2: two independent cross-lane reductions (overlap on XLU)
    mu = jnp.mean(v, axis=-1, keepdims=True)
    ms = jnp.mean(v * v, axis=-1, keepdims=True)
    var = ms - mu * mu
    return (v - mu) * lax.rsqrt(var + LN_EPS) * g + b


def _gelu_exact(x):
    # exact (erf) GELU, matching torch.nn.GELU() default
    return 0.5 * x * (1.0 + lax.erf(x * INV_SQRT2))


# ----------------------------------------------------------------------------
# One fused, grid-less kernel for the whole forward pass.  Activations are at
# most (T*NPAD, hidden) = (16, 128) f32, weights ~200 KB bf16 total, so
# everything is resident in VMEM/vregs; no grid, no BlockSpecs needed.
# ----------------------------------------------------------------------------
def _deit_fused_kernel(
    # inputs
    patches_ref, tok_add_ref, attn_bias_ref, cls_sel_ref, pe_w_ref,
    ln1_g_ref, ln1_b_ref, qkv_w_ref, qkv_b_ref, proj_w_ref, proj_b_ref,
    ln2_g_ref, ln2_b_ref, fc1_w_ref, fc1_b_ref, fc2_w_ref, fc2_b_ref,
    lnf_g_ref, lnf_b_ref, comb_w_ref, comb_b_ref,
    # outputs
    out_ref,
    *, D, heads, depth,
):
    dh = D // heads
    scale = 1.0 / math.sqrt(dh)

    # ---- patch embedding; cls token / pos embed / pe bias folded in tok_add --
    x2 = jnp.dot(patches_ref[...].astype(BF16), pe_w_ref[...],
                 preferred_element_type=jnp.float32) + tok_add_ref[...]

    attn_bias = attn_bias_ref[...]                    # (T*NPAD, T*NPAD), f32

    # ---- transformer blocks (statically unrolled; depth is small) ----------
    for i in range(depth):
        # attention sub-block (pre-norm), all frames batched per head
        h = _layernorm(x2, ln1_g_ref[i], ln1_b_ref[i])
        qkv = jnp.dot(h.astype(BF16), qkv_w_ref[i],
                      preferred_element_type=jnp.float32) + qkv_b_ref[i]
        attn_out = x2 + proj_b_ref[i]                 # residual + proj bias
        for hd in range(heads):
            c0 = hd * dh
            q = qkv[:, c0:c0 + dh]                    # (T*NPAD, dh)
            k = qkv[:, D + c0:D + c0 + dh]
            v = qkv[:, 2 * D + c0:2 * D + c0 + dh]
            s = lax.dot_general(
                q, k, (((1,), (1,)), ((), ())),
                preferred_element_type=jnp.float32) * scale
            s = s + attn_bias                         # block-diag + pad mask
            s = s - jnp.max(s, axis=-1, keepdims=True)
            p = jnp.exp(s)
            p = p * pl.reciprocal(
                jnp.sum(p, axis=-1, keepdims=True), approx=True)
            a = jnp.dot(p, v, preferred_element_type=jnp.float32)
            # fold the head-output lane concat into the output projection
            attn_out = attn_out + jnp.dot(
                a.astype(BF16), proj_w_ref[i, hd, :, :],
                preferred_element_type=jnp.float32)
        x2 = attn_out

        # MLP sub-block (pre-norm)
        h = _layernorm(x2, ln2_g_ref[i], ln2_b_ref[i])
        h = jnp.dot(h.astype(BF16), fc1_w_ref[i],
                    preferred_element_type=jnp.float32) + fc1_b_ref[i]
        h = _gelu_exact(h)
        x2 = jnp.dot(h.astype(BF16), fc2_w_ref[i],
                     preferred_element_type=jnp.float32) + fc2_b_ref[i] + x2

    # ---- epilogue: cls gather (before final LN), LN, folded head+classifier -
    cls_feat = jnp.dot(cls_sel_ref[...], x2,
                       preferred_element_type=jnp.float32)        # (T, D)
    cls_feat = _layernorm(cls_feat, lnf_g_ref[...], lnf_b_ref[...])
    logits = jnp.dot(cls_feat, comb_w_ref[...],
                     preferred_element_type=jnp.float32) + comb_b_ref[...]
    logits = logits - jnp.max(logits, axis=-1, keepdims=True)
    pr = jnp.exp(logits)
    pr = pr / jnp.sum(pr, axis=-1, keepdims=True)     # exact: rows sum to 1
    out_ref[...] = jnp.mean(pr, axis=0, keepdims=True)


# ----------------------------------------------------------------------------
# Forward pass (DeiT_Tiny.forward equivalent, inference mode: dropout = id)
# ----------------------------------------------------------------------------
def deit_tiny_forward(video, params, cfg):
    video = jnp.squeeze(video, axis=0)                # (T, C, H, W) == video.squeeze(0)
    T, C, H, W = video.shape
    p, D = cfg["patch"], cfg["D"]
    heads, depth = cfg["heads"], cfg["depth"]
    hp, wp = H // p, W // p
    P = hp * wp

    # patch-embed conv (k=s=patch) as patchify; flatten order (c, kh, kw)
    # matches flattening the conv weight.  Each frame's patch block is padded
    # to NPAD rows: row 0 = cls slot, rows 1..P = patches, rest = padding.
    patches = (video.reshape(T, C, hp, p, wp, p)
               .transpose(0, 2, 4, 1, 3, 5)
               .reshape(T, P, C * p * p))
    patches_pad = jnp.pad(
        patches, ((0, 0), (1, NPAD - 1 - P), (0, 0))).reshape(T * NPAD, -1)

    kernel = functools.partial(
        _deit_fused_kernel, D=D, heads=heads, depth=depth)
    return pl.pallas_call(
        kernel,
        out_shape=jax.ShapeDtypeStruct((1, cfg["num_class"]), F32),
        compiler_params=pltpu.CompilerParams(
            vmem_limit_bytes=32 * 1024 * 1024),   # footprint < 1 MiB; headroom
    )(
        patches_pad,
        params["tok_add"], params["attn_bias"], params["cls_sel"],
        params["pe_w"],
        params["ln1_g"], params["ln1_b"], params["qkv_w"], params["qkv_b"],
        params["proj_w"], params["proj_b"],
        params["ln2_g"], params["ln2_b"], params["fc1_w"], params["fc1_b"],
        params["fc2_w"], params["fc2_b"],
        params["lnf_g"], params["lnf_b"], params["comb_w"], params["comb_b"],
    )


# ----------------------------------------------------------------------------
# Parameters (deterministic synthetic init; deit-tiny structure scaled down:
# embed=32, heads=2, depth=2, patch=16, img=32).  Matmul weights are stored
# bf16 (MXU operands); biases / LN params stay f32.  Head(D->1000) and
# classifier(1000->2) are folded into one (D,2) matmul in f32 at init time.
# ----------------------------------------------------------------------------
def init_params(key, cfg):
    C, p, D = cfg["C"], cfg["patch"], cfg["D"]
    depth, heads = cfg["depth"], cfg["heads"]
    hidden = cfg["mlp_ratio"] * D
    T = cfg["T"]
    P = (cfg["H"] // p) * (cfg["W"] // p)
    Ntok = P + 1
    nb = cfg["backbone_classes"]
    nc = cfg["num_class"]
    dh = D // heads

    def nrm(k, shape, scale=0.02):
        return (scale * jax.random.normal(k, shape)).astype(F32)

    keys = jax.random.split(key, 5 + depth)
    pe_w = nrm(keys[0], (C * p * p, D))
    pe_b = jnp.zeros((1, D), F32)
    cls_token = nrm(keys[1], (1, D))
    pos_embed = nrm(keys[2], (Ntok, D))
    head_w = nrm(keys[3], (D, nb))
    head_b = jnp.zeros((1, nb), F32)
    cls_w = nrm(keys[4], (nb, nc))
    cls_b = jnp.zeros((1, nc), F32)

    # fold backbone head and classifier (no nonlinearity between them), f32
    comb_w = jnp.dot(head_w, cls_w)                       # (D, nc)
    comb_b = jnp.dot(head_b, cls_w) + cls_b               # (1, nc)

    # fold cls token, positional embedding and patch-embed bias into one
    # additive (T*NPAD, D) slab; padded rows stay zero.
    frame_add = jnp.zeros((NPAD, D), F32)
    frame_add = frame_add.at[0:1].set(cls_token + pos_embed[0:1])
    frame_add = frame_add.at[1:1 + P].set(pos_embed[1:1 + P] + pe_b)
    tok_add = jnp.tile(frame_add, (T, 1))                 # (T*NPAD, D)

    # additive attention mask: block-diagonal over frames + padded-key mask
    ridx = np.arange(T * NPAD)
    same_frame = (ridx[:, None] // NPAD) == (ridx[None, :] // NPAD)
    key_valid = (ridx[None, :] % NPAD) < Ntok
    attn_bias = jnp.asarray(
        np.where(same_frame & key_valid, 0.0, NEG_BIG), dtype=F32)

    # selector that gathers each frame's cls row via a single MXU matmul
    sel = np.zeros((T, T * NPAD), np.float32)
    sel[np.arange(T), np.arange(T) * NPAD] = 1.0
    cls_sel = jnp.asarray(sel)

    params = {
        "pe_w": pe_w.astype(BF16),
        "tok_add": tok_add,
        "attn_bias": attn_bias,
        "cls_sel": cls_sel,
        "lnf_g": jnp.ones((1, D), F32),
        "lnf_b": jnp.zeros((1, D), F32),
        "comb_w": comb_w,
        "comb_b": comb_b,
    }
    qkv_w, proj_w, fc1_w, fc2_w = [], [], [], []
    for i in range(depth):
        bk = jax.random.split(keys[5 + i], 4)
        qkv_w.append(nrm(bk[0], (D, 3 * D)))
        proj_w.append(nrm(bk[1], (D, D)))
        fc1_w.append(nrm(bk[2], (D, hidden)))
        fc2_w.append(nrm(bk[3], (hidden, D)))
    params.update({
        "ln1_g": jnp.ones((depth, 1, D), F32),
        "ln1_b": jnp.zeros((depth, 1, D), F32),
        "qkv_w": jnp.stack(qkv_w).astype(BF16),
        "qkv_b": jnp.zeros((depth, 1, 3 * D), F32),
        # per-head split of the output projection: rows c0:c0+dh -> head hd
        "proj_w": jnp.stack(proj_w).reshape(depth, heads, dh, D).astype(BF16),
        "proj_b": jnp.zeros((depth, 1, D), F32),
        "ln2_g": jnp.ones((depth, 1, D), F32),
        "ln2_b": jnp.zeros((depth, 1, D), F32),
        "fc1_w": jnp.stack(fc1_w).astype(BF16),
        "fc1_b": jnp.zeros((depth, 1, hidden), F32),
        "fc2_w": jnp.stack(fc2_w).astype(BF16),
        "fc2_b": jnp.zeros((depth, 1, D), F32),
    })
    return params


if __name__ == "__main__":
    cfg = dict(
        T=2,            # frames in the "video"
        C=3, H=32, W=32,
        patch=16,       # -> 4 patches per frame, 5 tokens with cls (padded to 8)
        D=32,           # embed dim (scaled-down deit-tiny)
        heads=2,
        depth=2,
        mlp_ratio=4,
        backbone_classes=1000,  # deit head output, feeds Linear(1000, 2)
        num_class=2,
    )
    key = jax.random.PRNGKey(0)
    k_in, k_param = jax.random.split(key)
    video = jax.random.normal(
        k_in, (1, cfg["T"], cfg["C"], cfg["H"], cfg["W"]), dtype=F32
    )
    params = init_params(k_param, cfg)

    forward = jax.jit(lambda v, prm: deit_tiny_forward(v, prm, cfg))
    out = jax.block_until_ready(forward(video, params))

    assert out.shape == (1, cfg["num_class"])
    # softmax rows averaged over frames still sum to ~1
    assert abs(float(jnp.sum(out)) - 1.0) < 1e-4
    print("KERNEL_OK")
</pallas_src>

<mosaic_0001>
module attributes {stable_mosaic.version = 11 : i64} {
  func.func @_deit_fused_kernel(%arg0: memref<16x768xf32, #tpu.memory_space<vmem>>, %arg1: memref<16x32xf32, #tpu.memory_space<vmem>>, %arg2: memref<16x16xf32, #tpu.memory_space<vmem>>, %arg3: memref<2x16xf32, #tpu.memory_space<vmem>>, %arg4: memref<768x32xbf16, #tpu.memory_space<vmem>>, %arg5: memref<2x1x32xf32, #tpu.memory_space<vmem>>, %arg6: memref<2x1x32xf32, #tpu.memory_space<vmem>>, %arg7: memref<2x32x96xbf16, #tpu.memory_space<vmem>>, %arg8: memref<2x1x96xf32, #tpu.memory_space<vmem>>, %arg9: memref<2x2x16x32xbf16, #tpu.memory_space<vmem>>, %arg10: memref<2x1x32xf32, #tpu.memory_space<vmem>>, %arg11: memref<2x1x32xf32, #tpu.memory_space<vmem>>, %arg12: memref<2x1x32xf32, #tpu.memory_space<vmem>>, %arg13: memref<2x32x128xbf16, #tpu.memory_space<vmem>>, %arg14: memref<2x1x128xf32, #tpu.memory_space<vmem>>, %arg15: memref<2x128x32xbf16, #tpu.memory_space<vmem>>, %arg16: memref<2x1x32xf32, #tpu.memory_space<vmem>>, %arg17: memref<1x32xf32, #tpu.memory_space<vmem>>, %arg18: memref<1x32xf32, #tpu.memory_space<vmem>>, %arg19: memref<32x2xf32, #tpu.memory_space<vmem>>, %arg20: memref<1x2xf32, #tpu.memory_space<vmem>>, %arg21: memref<1x2xf32, #tpu.memory_space<vmem>>) attributes {dimension_semantics = [], scalar_prefetch = 0 : i64, scratch_operands = 0 : i64, tpu.core_type = #tpu.core_type<tc>} {
    %c0 = arith.constant 0 : index
    %c0_0 = arith.constant 0 : index
    %0 = vector.load %arg0[%c0, %c0_0] : memref<16x768xf32, #tpu.memory_space<vmem>>, vector<16x768xf32>
    %1 = arith.truncf %0 : vector<16x768xf32> to vector<16x768xbf16>
    %c0_1 = arith.constant 0 : index
    %c0_2 = arith.constant 0 : index
    %2 = vector.load %arg4[%c0_1, %c0_2] : memref<768x32xbf16, #tpu.memory_space<vmem>>, vector<768x32xbf16>
    %cst = arith.constant dense<0.000000e+00> : vector<16x32xf32>
    %3 = tpu.matmul %1, %2, %cst {dimension_numbers = #tpu.dot_dimension_numbers<[1], [0], [0], [1], [0, 0, 1, 1], [], []>} : vector<16x768xbf16>, vector<768x32xbf16>, vector<16x32xf32> -> vector<16x32xf32>
    %c0_3 = arith.constant 0 : index
    %c0_4 = arith.constant 0 : index
    %4 = vector.load %arg1[%c0_3, %c0_4] : memref<16x32xf32, #tpu.memory_space<vmem>>, vector<16x32xf32>
    %5 = arith.addf %3, %4 : vector<16x32xf32>
    %c0_5 = arith.constant 0 : index
    %c0_6 = arith.constant 0 : index
    %6 = vector.load %arg2[%c0_5, %c0_6] : memref<16x16xf32, #tpu.memory_space<vmem>>, vector<16x16xf32>
    %c0_7 = arith.constant 0 : index
    %c0_8 = arith.constant 0 : index
    %c0_9 = arith.constant 0 : index
    %7 = vector.load %arg5[%c0_7, %c0_8, %c0_9] : memref<2x1x32xf32, #tpu.memory_space<vmem>>, vector<1x1x32xf32>
    %8 = vector.shape_cast %7 : vector<1x1x32xf32> to vector<1x32xf32>
    %c0_10 = arith.constant 0 : index
    %c0_11 = arith.constant 0 : index
    %c0_12 = arith.constant 0 : index
    %9 = vector.load %arg6[%c0_10, %c0_11, %c0_12] : memref<2x1x32xf32, #tpu.memory_space<vmem>>, vector<1x1x32xf32>
    %10 = vector.shape_cast %9 : vector<1x1x32xf32> to vector<1x32xf32>
    %cst_13 = arith.constant dense<0.000000e+00> : vector<16xf32>
    %11 = vector.multi_reduction <add>, %5, %cst_13 [1] : vector<16x32xf32> to vector<16xf32>
    %12 = vector.shape_cast %11 : vector<16xf32> to vector<16x1xf32>
    %cst_14 = arith.constant 3.200000e+01 : f32
    %13 = vector.broadcast %cst_14 : f32 to vector<16x1xf32>
    %14 = arith.divf %12, %13 : vector<16x1xf32>
    %15 = arith.mulf %5, %5 : vector<16x32xf32>
    %cst_15 = arith.constant dense<0.000000e+00> : vector<16xf32>
    %16 = vector.multi_reduction <add>, %15, %cst_15 [1] : vector<16x32xf32> to vector<16xf32>
    %17 = vector.shape_cast %16 : vector<16xf32> to vector<16x1xf32>
    %cst_16 = arith.constant 3.200000e+01 : f32
    %18 = vector.broadcast %cst_16 : f32 to vector<16x1xf32>
    %19 = arith.divf %17, %18 : vector<16x1xf32>
    %20 = arith.mulf %14, %14 : vector<16x1xf32>
    %21 = arith.subf %19, %20 : vector<16x1xf32>
    %22 = vector.broadcast %14 : vector<16x1xf32> to vector<16x32xf32>
    %23 = arith.subf %5, %22 : vector<16x32xf32>
    %cst_17 = arith.constant 9.99999997E-7 : f32
    %24 = vector.broadcast %cst_17 : f32 to vector<16x1xf32>
    %25 = arith.addf %21, %24 : vector<16x1xf32>
    %26 = math.rsqrt %25 : vector<16x1xf32>
    %27 = vector.broadcast %26 : vector<16x1xf32> to vector<16x32xf32>
    %28 = arith.mulf %23, %27 : vector<16x32xf32>
    %29 = vector.broadcast %8 : vector<1x32xf32> to vector<16x32xf32>
    %30 = arith.mulf %28, %29 : vector<16x32xf32>
    %31 = vector.broadcast %10 : vector<1x32xf32> to vector<16x32xf32>
    %32 = arith.addf %30, %31 : vector<16x32xf32>
    %33 = arith.truncf %32 : vector<16x32xf32> to vector<16x32xbf16>
    %c0_18 = arith.constant 0 : index
    %c0_19 = arith.constant 0 : index
    %c0_20 = arith.constant 0 : index
    %34 = vector.load %arg7[%c0_18, %c0_19, %c0_20] : memref<2x32x96xbf16, #tpu.memory_space<vmem>>, vector<1x32x96xbf16>
    %35 = vector.shape_cast %34 : vector<1x32x96xbf16> to vector<32x96xbf16>
    %cst_21 = arith.constant dense<0.000000e+00> : vector<16x96xf32>
    %36 = tpu.matmul %33, %35, %cst_21 {dimension_numbers = #tpu.dot_dimension_numbers<[1], [0], [0], [1], [0, 0, 1, 1], [], []>} : vector<16x32xbf16>, vector<32x96xbf16>, vector<16x96xf32> -> vector<16x96xf32>
    %c0_22 = arith.constant 0 : index
    %c0_23 = arith.constant 0 : index
    %c0_24 = arith.constant 0 : index
    %37 = vector.load %arg8[%c0_22, %c0_23, %c0_24] : memref<2x1x96xf32, #tpu.memory_space<vmem>>, vector<1x1x96xf32>
    %38 = vector.shape_cast %37 : vector<1x1x96xf32> to vector<1x96xf32>
    %39 = vector.broadcast %38 : vector<1x96xf32> to vector<16x96xf32>
    %40 = arith.addf %36, %39 : vector<16x96xf32>
    %c0_25 = arith.constant 0 : index
    %c0_26 = arith.constant 0 : index
    %c0_27 = arith.constant 0 : index
    %41 = vector.load %arg10[%c0_25, %c0_26, %c0_27] : memref<2x1x32xf32, #tpu.memory_space<vmem>>, vector<1x1x32xf32>
    %42 = vector.shape_cast %41 : vector<1x1x32xf32> to vector<1x32xf32>
    %43 = vector.broadcast %42 : vector<1x32xf32> to vector<16x32xf32>
    %44 = arith.addf %5, %43 : vector<16x32xf32>
    %45 = vector.extract_strided_slice %40 {offsets = [0, 0], sizes = [16, 16], strides = [1, 1]} : vector<16x96xf32> to vector<16x16xf32>
    %46 = vector.extract_strided_slice %40 {offsets = [0, 32], sizes = [16, 16], strides = [1, 1]} : vector<16x96xf32> to vector<16x16xf32>
    %47 = vector.extract_strided_slice %40 {offsets = [0, 64], sizes = [16, 16], strides = [1, 1]} : vector<16x96xf32> to vector<16x16xf32>
    %cst_28 = arith.constant dense<0.000000e+00> : vector<16x16xf32>
    %48 = tpu.matmul %45, %46, %cst_28 {dimension_numbers = #tpu.dot_dimension_numbers<[1], [1], [0], [0], [0, 0, 1, 0], [], []>} : vector<16x16xf32>, vector<16x16xf32>, vector<16x16xf32> -> vector<16x16xf32>
    %cst_29 = arith.constant 2.500000e-01 : f32
    %49 = vector.broadcast %cst_29 : f32 to vector<16x16xf32>
    %50 = arith.mulf %48, %49 : vector<16x16xf32>
    %51 = arith.addf %50, %6 : vector<16x16xf32>
    %cst_30 = arith.constant dense<0xFF800000> : vector<16xf32>
    %52 = vector.multi_reduction <maximumf>, %51, %cst_30 [1] : vector<16x16xf32> to vector<16xf32>
    %53 = vector.shape_cast %52 : vector<16xf32> to vector<16x1xf32>
    %54 = vector.broadcast %53 : vector<16x1xf32> to vector<16x16xf32>
    %55 = arith.subf %51, %54 : vector<16x16xf32>
    %56 = math.exp %55 : vector<16x16xf32>
    %cst_31 = arith.constant dense<0.000000e+00> : vector<16xf32>
    %57 = vector.multi_reduction <add>, %56, %cst_31 [1] : vector<16x16xf32> to vector<16xf32>
    %58 = vector.shape_cast %57 : vector<16xf32> to vector<16x1xf32>
    %59 = tpu.reciprocal %58 {approx = true} : vector<16x1xf32> -> vector<16x1xf32>
    %60 = vector.broadcast %59 : vector<16x1xf32> to vector<16x16xf32>
    %61 = arith.mulf %56, %60 : vector<16x16xf32>
    %cst_32 = arith.constant dense<0.000000e+00> : vector<16x16xf32>
    %62 = tpu.matmul %61, %47, %cst_32 {dimension_numbers = #tpu.dot_dimension_numbers<[1], [0], [0], [1], [0, 0, 1, 1], [], []>} : vector<16x16xf32>, vector<16x16xf32>, vector<16x16xf32> -> vector<16x16xf32>
    %63 = arith.truncf %62 : vector<16x16xf32> to vector<16x16xbf16>
    %c0_33 = arith.constant 0 : index
    %c0_34 = arith.constant 0 : index
    %c0_35 = arith.constant 0 : index
    %c0_36 = arith.constant 0 : index
    %64 = vector.load %arg9[%c0_33, %c0_34, %c0_35, %c0_36] : memref<2x2x16x32xbf16, #tpu.memory_space<vmem>>, vector<1x1x16x32xbf16>
    %65 = vector.shape_cast %64 : vector<1x1x16x32xbf16> to vector<16x32xbf16>
    %cst_37 = arith.constant dense<0.000000e+00> : vector<16x32xf32>
    %66 = tpu.matmul %63, %65, %cst_37 {dimension_numbers = #tpu.dot_dimension_numbers<[1], [0], [0], [1], [0, 0, 1, 1], [], []>} : vector<16x16xbf16>, vector<16x32xbf16>, vector<16x32xf32> -> vector<16x32xf32>
    %67 = arith.addf %44, %66 : vector<16x32xf32>
    %68 = vector.extract_strided_slice %40 {offsets = [0, 16], sizes = [16, 16], strides = [1, 1]} : vector<16x96xf32> to vector<16x16xf32>
    %69 = vector.extract_strided_slice %40 {offsets = [0, 48], sizes = [16, 16], strides = [1, 1]} : vector<16x96xf32> to vector<16x16xf32>
    %70 = vector.extract_strided_slice %40 {offsets = [0, 80], sizes = [16, 16], strides = [1, 1]} : vector<16x96xf32> to vector<16x16xf32>
    %cst_38 = arith.constant dense<0.000000e+00> : vector<16x16xf32>
    %71 = tpu.matmul %68, %69, %cst_38 {dimension_numbers = #tpu.dot_dimension_numbers<[1], [1], [0], [0], [0, 0, 1, 0], [], []>} : vector<16x16xf32>, vector<16x16xf32>, vector<16x16xf32> -> vector<16x16xf32>
    %cst_39 = arith.constant 2.500000e-01 : f32
    %72 = vector.broadcast %cst_39 : f32 to vector<16x16xf32>
    %73 = arith.mulf %71, %72 : vector<16x16xf32>
    %74 = arith.addf %73, %6 : vector<16x16xf32>
    %cst_40 = arith.constant dense<0xFF800000> : vector<16xf32>
    %75 = vector.multi_reduction <maximumf>, %74, %cst_40 [1] : vector<16x16xf32> to vector<16xf32>
    %76 = vector.shape_cast %75 : vector<16xf32> to vector<16x1xf32>
    %77 = vector.broadcast %76 : vector<16x1xf32> to vector<16x16xf32>
    %78 = arith.subf %74, %77 : vector<16x16xf32>
    %79 = math.exp %78 : vector<16x16xf32>
    %cst_41 = arith.constant dense<0.000000e+00> : vector<16xf32>
    %80 = vector.multi_reduction <add>, %79, %cst_41 [1] : vector<16x16xf32> to vector<16xf32>
    %81 = vector.shape_cast %80 : vector<16xf32> to vector<16x1xf32>
    %82 = tpu.reciprocal %81 {approx = true} : vector<16x1xf32> -> vector<16x1xf32>
    %83 = vector.broadcast %82 : vector<16x1xf32> to vector<16x16xf32>
    %84 = arith.mulf %79, %83 : vector<16x16xf32>
    %cst_42 = arith.constant dense<0.000000e+00> : vector<16x16xf32>
    %85 = tpu.matmul %84, %70, %cst_42 {dimension_numbers = #tpu.dot_dimension_numbers<[1], [0], [0], [1], [0, 0, 1, 1], [], []>} : vector<16x16xf32>, vector<16x16xf32>, vector<16x16xf32> -> vector<16x16xf32>
    %86 = arith.truncf %85 : vector<16x16xf32> to vector<16x16xbf16>
    %c0_43 = arith.constant 0 : index
    %c1 = arith.constant 1 : index
    %c0_44 = arith.constant 0 : index
    %c0_45 = arith.constant 0 : index
    %87 = vector.load %arg9[%c0_43, %c1, %c0_44, %c0_45] : memref<2x2x16x32xbf16, #tpu.memory_space<vmem>>, vector<1x1x16x32xbf16>
    %88 = vector.shape_cast %87 : vector<1x1x16x32xbf16> to vector<16x32xbf16>
    %cst_46 = arith.constant dense<0.000000e+00> : vector<16x32xf32>
    %89 = tpu.matmul %86, %88, %cst_46 {dimension_numbers = #tpu.dot_dimension_numbers<[1], [0], [0], [1], [0, 0, 1, 1], [], []>} : vector<16x16xbf16>, vector<16x32xbf16>, vector<16x32xf32> -> vector<16x32xf32>
    %90 = arith.addf %67, %89 : vector<16x32xf32>
    %c0_47 = arith.constant 0 : index
    %c0_48 = arith.constant 0 : index
    %c0_49 = arith.constant 0 : index
    %91 = vector.load %arg11[%c0_47, %c0_48, %c0_49] : memref<2x1x32xf32, #tpu.memory_space<vmem>>, vector<1x1x32xf32>
    %92 = vector.shape_cast %91 : vector<1x1x32xf32> to vector<1x32xf32>
    %c0_50 = arith.constant 0 : index
    %c0_51 = arith.constant 0 : index
    %c0_52 = arith.constant 0 : index
    %93 = vector.load %arg12[%c0_50, %c0_51, %c0_52] : memref<2x1x32xf32, #tpu.memory_space<vmem>>, vector<1x1x32xf32>
    %94 = vector.shape_cast %93 : vector<1x1x32xf32> to vector<1x32xf32>
    %cst_53 = arith.constant dense<0.000000e+00> : vector<16xf32>
    %95 = vector.multi_reduction <add>, %90, %cst_53 [1] : vector<16x32xf32> to vector<16xf32>
    %96 = vector.shape_cast %95 : vector<16xf32> to vector<16x1xf32>
    %cst_54 = arith.constant 3.200000e+01 : f32
    %97 = vector.broadcast %cst_54 : f32 to vector<16x1xf32>
    %98 = arith.divf %96, %97 : vector<16x1xf32>
    %99 = arith.mulf %90, %90 : vector<16x32xf32>
    %cst_55 = arith.constant dense<0.000000e+00> : vector<16xf32>
    %100 = vector.multi_reduction <add>, %99, %cst_55 [1] : vector<16x32xf32> to vector<16xf32>
    %101 = vector.shape_cast %100 : vector<16xf32> to vector<16x1xf32>
    %cst_56 = arith.constant 3.200000e+01 : f32
    %102 = vector.broadcast %cst_56 : f32 to vector<16x1xf32>
    %103 = arith.divf %101, %102 : vector<16x1xf32>
    %104 = arith.mulf %98, %98 : vector<16x1xf32>
    %105 = arith.subf %103, %104 : vector<16x1xf32>
    %106 = vector.broadcast %98 : vector<16x1xf32> to vector<16x32xf32>
    %107 = arith.subf %90, %106 : vector<16x32xf32>
    %cst_57 = arith.constant 9.99999997E-7 : f32
    %108 = vector.broadcast %cst_57 : f32 to vector<16x1xf32>
    %109 = arith.addf %105, %108 : vector<16x1xf32>
    %110 = math.rsqrt %109 : vector<16x1xf32>
    %111 = vector.broadcast %110 : vector<16x1xf32> to vector<16x32xf32>
    %112 = arith.mulf %107, %111 : vector<16x32xf32>
    %113 = vector.broadcast %92 : vector<1x32xf32> to vector<16x32xf32>
    %114 = arith.mulf %112, %113 : vector<16x32xf32>
    %115 = vector.broadcast %94 : vector<1x32xf32> to vector<16x32xf32>
    %116 = arith.addf %114, %115 : vector<16x32xf32>
    %117 = arith.truncf %116 : vector<16x32xf32> to vector<16x32xbf16>
    %c0_58 = arith.constant 0 : index
    %c0_59 = arith.constant 0 : index
    %c0_60 = arith.constant 0 : index
    %118 = vector.load %arg13[%c0_58, %c0_59, %c0_60] : memref<2x32x128xbf16, #tpu.memory_space<vmem>>, vector<1x32x128xbf16>
    %119 = vector.shape_cast %118 : vector<1x32x128xbf16> to vector<32x128xbf16>
    %cst_61 = arith.constant dense<0.000000e+00> : vector<16x128xf32>
    %120 = tpu.matmul %117, %119, %cst_61 {dimension_numbers = #tpu.dot_dimension_numbers<[1], [0], [0], [1], [0, 0, 1, 1], [], []>} : vector<16x32xbf16>, vector<32x128xbf16>, vector<16x128xf32> -> vector<16x128xf32>
    %c0_62 = arith.constant 0 : index
    %c0_63 = arith.constant 0 : index
    %c0_64 = arith.constant 0 : index
    %121 = vector.load %arg14[%c0_62, %c0_63, %c0_64] : memref<2x1x128xf32, #tpu.memory_space<vmem>>, vector<1x1x128xf32>
    %122 = vector.shape_cast %121 : vector<1x1x128xf32> to vector<1x128xf32>
    %123 = vector.broadcast %122 : vector<1x128xf32> to vector<16x128xf32>
    %124 = arith.addf %120, %123 : vector<16x128xf32>
    %cst_65 = arith.constant 5.000000e-01 : f32
    %125 = vector.broadcast %cst_65 : f32 to vector<16x128xf32>
    %126 = arith.mulf %125, %124 : vector<16x128xf32>
    %cst_66 = arith.constant 0.707106769 : f32
    %127 = vector.broadcast %cst_66 : f32 to vector<16x128xf32>
    %128 = arith.mulf %124, %127 : vector<16x128xf32>
    %129 = math.erf %128 : vector<16x128xf32>
    %cst_67 = arith.constant 1.000000e+00 : f32
    %130 = vector.broadcast %cst_67 : f32 to vector<16x128xf32>
    %131 = arith.addf %130, %129 : vector<16x128xf32>
    %132 = arith.mulf %126, %131 : vector<16x128xf32>
    %133 = arith.truncf %132 : vector<16x128xf32> to vector<16x128xbf16>
    %c0_68 = arith.constant 0 : index
    %c0_69 = arith.constant 0 : index
    %c0_70 = arith.constant 0 : index
    %134 = vector.load %arg15[%c0_68, %c0_69, %c0_70] : memref<2x128x32xbf16, #tpu.memory_space<vmem>>, vector<1x128x32xbf16>
    %135 = vector.shape_cast %134 : vector<1x128x32xbf16> to vector<128x32xbf16>
    %cst_71 = arith.constant dense<0.000000e+00> : vector<16x32xf32>
    %136 = tpu.matmul %133, %135, %cst_71 {dimension_numbers = #tpu.dot_dimension_numbers<[1], [0], [0], [1], [0, 0, 1, 1], [], []>} : vector<16x128xbf16>, vector<128x32xbf16>, vector<16x32xf32> -> vector<16x32xf32>
    %c0_72 = arith.constant 0 : index
    %c0_73 = arith.constant 0 : index
    %c0_74 = arith.constant 0 : index
    %137 = vector.load %arg16[%c0_72, %c0_73, %c0_74] : memref<2x1x32xf32, #tpu.memory_space<vmem>>, vector<1x1x32xf32>
    %138 = vector.shape_cast %137 : vector<1x1x32xf32> to vector<1x32xf32>
    %139 = vector.broadcast %138 : vector<1x32xf32> to vector<16x32xf32>
    %140 = arith.addf %136, %139 : vector<16x32xf32>
    %141 = arith.addf %140, %90 : vector<16x32xf32>
    %c1_75 = arith.constant 1 : index
    %c0_76 = arith.constant 0 : index
    %c0_77 = arith.constant 0 : index
    %142 = vector.load %arg5[%c1_75, %c0_76, %c0_77] : memref<2x1x32xf32, #tpu.memory_space<vmem>>, vector<1x1x32xf32>
    %143 = vector.shape_cast %142 : vector<1x1x32xf32> to vector<1x32xf32>
    %c1_78 = arith.constant 1 : index
    %c0_79 = arith.constant 0 : index
    %c0_80 = arith.constant 0 : index
    %144 = vector.load %arg6[%c1_78, %c0_79, %c0_80] : memref<2x1x32xf32, #tpu.memory_space<vmem>>, vector<1x1x32xf32>
    %145 = vector.shape_cast %144 : vector<1x1x32xf32> to vector<1x32xf32>
    %cst_81 = arith.constant dense<0.000000e+00> : vector<16xf32>
    %146 = vector.multi_reduction <add>, %141, %cst_81 [1] : vector<16x32xf32> to vector<16xf32>
    %147 = vector.shape_cast %146 : vector<16xf32> to vector<16x1xf32>
    %cst_82 = arith.constant 3.200000e+01 : f32
    %148 = vector.broadcast %cst_82 : f32 to vector<16x1xf32>
    %149 = arith.divf %147, %148 : vector<16x1xf32>
    %150 = arith.mulf %141, %141 : vector<16x32xf32>
    %cst_83 = arith.constant dense<0.000000e+00> : vector<16xf32>
    %151 = vector.multi_reduction <add>, %150, %cst_83 [1] : vector<16x32xf32> to vector<16xf32>
    %152 = vector.shape_cast %151 : vector<16xf32> to vector<16x1xf32>
    %cst_84 = arith.constant 3.200000e+01 : f32
    %153 = vector.broadcast %cst_84 : f32 to vector<16x1xf32>
    %154 = arith.divf %152, %153 : vector<16x1xf32>
    %155 = arith.mulf %149, %149 : vector<16x1xf32>
    %156 = arith.subf %154, %155 : vector<16x1xf32>
    %157 = vector.broadcast %149 : vector<16x1xf32> to vector<16x32xf32>
    %158 = arith.subf %141, %157 : vector<16x32xf32>
    %cst_85 = arith.constant 9.99999997E-7 : f32
    %159 = vector.broadcast %cst_85 : f32 to vector<16x1xf32>
    %160 = arith.addf %156, %159 : vector<16x1xf32>
    %161 = math.rsqrt %160 : vector<16x1xf32>
    %162 = vector.broadcast %161 : vector<16x1xf32> to vector<16x32xf32>
    %163 = arith.mulf %158, %162 : vector<16x32xf32>
    %164 = vector.broadcast %143 : vector<1x32xf32> to vector<16x32xf32>
    %165 = arith.mulf %163, %164 : vector<16x32xf32>
    %166 = vector.broadcast %145 : vector<1x32xf32> to vector<16x32xf32>
    %167 = arith.addf %165, %166 : vector<16x32xf32>
    %168 = arith.truncf %167 : vector<16x32xf32> to vector<16x32xbf16>
    %c1_86 = arith.constant 1 : index
    %c0_87 = arith.constant 0 : index
    %c0_88 = arith.constant 0 : index
    %169 = vector.load %arg7[%c1_86, %c0_87, %c0_88] : memref<2x32x96xbf16, #tpu.memory_space<vmem>>, vector<1x32x96xbf16>
    %170 = vector.shape_cast %169 : vector<1x32x96xbf16> to vector<32x96xbf16>
    %cst_89 = arith.constant dense<0.000000e+00> : vector<16x96xf32>
    %171 = tpu.matmul %168, %170, %cst_89 {dimension_numbers = #tpu.dot_dimension_numbers<[1], [0], [0], [1], [0, 0, 1, 1], [], []>} : vector<16x32xbf16>, vector<32x96xbf16>, vector<16x96xf32> -> vector<16x96xf32>
    %c1_90 = arith.constant 1 : index
    %c0_91 = arith.constant 0 : index
    %c0_92 = arith.constant 0 : index
    %172 = vector.load %arg8[%c1_90, %c0_91, %c0_92] : memref<2x1x96xf32, #tpu.memory_space<vmem>>, vector<1x1x96xf32>
    %173 = vector.shape_cast %172 : vector<1x1x96xf32> to vector<1x96xf32>
    %174 = vector.broadcast %173 : vector<1x96xf32> to vector<16x96xf32>
    %175 = arith.addf %171, %174 : vector<16x96xf32>
    %c1_93 = arith.constant 1 : index
    %c0_94 = arith.constant 0 : index
    %c0_95 = arith.constant 0 : index
    %176 = vector.load %arg10[%c1_93, %c0_94, %c0_95] : memref<2x1x32xf32, #tpu.memory_space<vmem>>, vector<1x1x32xf32>
    %177 = vector.shape_cast %176 : vector<1x1x32xf32> to vector<1x32xf32>
    %178 = vector.broadcast %177 : vector<1x32xf32> to vector<16x32xf32>
    %179 = arith.addf %141, %178 : vector<16x32xf32>
    %180 = vector.extract_strided_slice %175 {offsets = [0, 0], sizes = [16, 16], strides = [1, 1]} : vector<16x96xf32> to vector<16x16xf32>
    %181 = vector.extract_strided_slice %175 {offsets = [0, 32], sizes = [16, 16], strides = [1, 1]} : vector<16x96xf32> to vector<16x16xf32>
    %182 = vector.extract_strided_slice %175 {offsets = [0, 64], sizes = [16, 16], strides = [1, 1]} : vector<16x96xf32> to vector<16x16xf32>
    %cst_96 = arith.constant dense<0.000000e+00> : vector<16x16xf32>
    %183 = tpu.matmul %180, %181, %cst_96 {dimension_numbers = #tpu.dot_dimension_numbers<[1], [1], [0], [0], [0, 0, 1, 0], [], []>} : vector<16x16xf32>, vector<16x16xf32>, vector<16x16xf32> -> vector<16x16xf32>
    %cst_97 = arith.constant 2.500000e-01 : f32
    %184 = vector.broadcast %cst_97 : f32 to vector<16x16xf32>
    %185 = arith.mulf %183, %184 : vector<16x16xf32>
    %186 = arith.addf %185, %6 : vector<16x16xf32>
    %cst_98 = arith.constant dense<0xFF800000> : vector<16xf32>
    %187 = vector.multi_reduction <maximumf>, %186, %cst_98 [1] : vector<16x16xf32> to vector<16xf32>
    %188 = vector.shape_cast %187 : vector<16xf32> to vector<16x1xf32>
    %189 = vector.broadcast %188 : vector<16x1xf32> to vector<16x16xf32>
    %190 = arith.subf %186, %189 : vector<16x16xf32>
    %191 = math.exp %190 : vector<16x16xf32>
    %cst_99 = arith.constant dense<0.000000e+00> : vector<16xf32>
    %192 = vector.multi_reduction <add>, %191, %cst_99 [1] : vector<16x16xf32> to vector<16xf32>
    %193 = vector.shape_cast %192 : vector<16xf32> to vector<16x1xf32>
    %194 = tpu.reciprocal %193 {approx = true} : vector<16x1xf32> -> vector<16x1xf32>
    %195 = vector.broadcast %194 : vector<16x1xf32> to vector<16x16xf32>
    %196 = arith.mulf %191, %195 : vector<16x16xf32>
    %cst_100 = arith.constant dense<0.000000e+00> : vector<16x16xf32>
    %197 = tpu.matmul %196, %182, %cst_100 {dimension_numbers = #tpu.dot_dimension_numbers<[1], [0], [0], [1], [0, 0, 1, 1], [], []>} : vector<16x16xf32>, vector<16x16xf32>, vector<16x16xf32> -> vector<16x16xf32>
    %198 = arith.truncf %197 : vector<16x16xf32> to vector<16x16xbf16>
    %c1_101 = arith.constant 1 : index
    %c0_102 = arith.constant 0 : index
    %c0_103 = arith.constant 0 : index
    %c0_104 = arith.constant 0 : index
    %199 = vector.load %arg9[%c1_101, %c0_102, %c0_103, %c0_104] : memref<2x2x16x32xbf16, #tpu.memory_space<vmem>>, vector<1x1x16x32xbf16>
    %200 = vector.shape_cast %199 : vector<1x1x16x32xbf16> to vector<16x32xbf16>
    %cst_105 = arith.constant dense<0.000000e+00> : vector<16x32xf32>
    %201 = tpu.matmul %198, %200, %cst_105 {dimension_numbers = #tpu.dot_dimension_numbers<[1], [0], [0], [1], [0, 0, 1, 1], [], []>} : vector<16x16xbf16>, vector<16x32xbf16>, vector<16x32xf32> -> vector<16x32xf32>
    %202 = arith.addf %179, %201 : vector<16x32xf32>
    %203 = vector.extract_strided_slice %175 {offsets = [0, 16], sizes = [16, 16], strides = [1, 1]} : vector<16x96xf32> to vector<16x16xf32>
    %204 = vector.extract_strided_slice %175 {offsets = [0, 48], sizes = [16, 16], strides = [1, 1]} : vector<16x96xf32> to vector<16x16xf32>
    %205 = vector.extract_strided_slice %175 {offsets = [0, 80], sizes = [16, 16], strides = [1, 1]} : vector<16x96xf32> to vector<16x16xf32>
    %cst_106 = arith.constant dense<0.000000e+00> : vector<16x16xf32>
    %206 = tpu.matmul %203, %204, %cst_106 {dimension_numbers = #tpu.dot_dimension_numbers<[1], [1], [0], [0], [0, 0, 1, 0], [], []>} : vector<16x16xf32>, vector<16x16xf32>, vector<16x16xf32> -> vector<16x16xf32>
    %cst_107 = arith.constant 2.500000e-01 : f32
    %207 = vector.broadcast %cst_107 : f32 to vector<16x16xf32>
    %208 = arith.mulf %206, %207 : vector<16x16xf32>
    %209 = arith.addf %208, %6 : vector<16x16xf32>
    %cst_108 = arith.constant dense<0xFF800000> : vector<16xf32>
    %210 = vector.multi_reduction <maximumf>, %209, %cst_108 [1] : vector<16x16xf32> to vector<16xf32>
    %211 = vector.shape_cast %210 : vector<16xf32> to vector<16x1xf32>
    %212 = vector.broadcast %211 : vector<16x1xf32> to vector<16x16xf32>
    %213 = arith.subf %209, %212 : vector<16x16xf32>
    %214 = math.exp %213 : vector<16x16xf32>
    %cst_109 = arith.constant dense<0.000000e+00> : vector<16xf32>
    %215 = vector.multi_reduction <add>, %214, %cst_109 [1] : vector<16x16xf32> to vector<16xf32>
    %216 = vector.shape_cast %215 : vector<16xf32> to vector<16x1xf32>
    %217 = tpu.reciprocal %216 {approx = true} : vector<16x1xf32> -> vector<16x1xf32>
    %218 = vector.broadcast %217 : vector<16x1xf32> to vector<16x16xf32>
    %219 = arith.mulf %214, %218 : vector<16x16xf32>
    %cst_110 = arith.constant dense<0.000000e+00> : vector<16x16xf32>
    %220 = tpu.matmul %219, %205, %cst_110 {dimension_numbers = #tpu.dot_dimension_numbers<[1], [0], [0], [1], [0, 0, 1, 1], [], []>} : vector<16x16xf32>, vector<16x16xf32>, vector<16x16xf32> -> vector<16x16xf32>
    %221 = arith.truncf %220 : vector<16x16xf32> to vector<16x16xbf16>
    %c1_111 = arith.constant 1 : index
    %c1_112 = arith.constant 1 : index
    %c0_113 = arith.constant 0 : index
    %c0_114 = arith.constant 0 : index
    %222 = vector.load %arg9[%c1_111, %c1_112, %c0_113, %c0_114] : memref<2x2x16x32xbf16, #tpu.memory_space<vmem>>, vector<1x1x16x32xbf16>
    %223 = vector.shape_cast %222 : vector<1x1x16x32xbf16> to vector<16x32xbf16>
    %cst_115 = arith.constant dense<0.000000e+00> : vector<16x32xf32>
    %224 = tpu.matmul %221, %223, %cst_115 {dimension_numbers = #tpu.dot_dimension_numbers<[1], [0], [0], [1], [0, 0, 1, 1], [], []>} : vector<16x16xbf16>, vector<16x32xbf16>, vector<16x32xf32> -> vector<16x32xf32>
    %225 = arith.addf %202, %224 : vector<16x32xf32>
    %c1_116 = arith.constant 1 : index
    %c0_117 = arith.constant 0 : index
    %c0_118 = arith.constant 0 : index
    %226 = vector.load %arg11[%c1_116, %c0_117, %c0_118] : memref<2x1x32xf32, #tpu.memory_space<vmem>>, vector<1x1x32xf32>
    %227 = vector.shape_cast %226 : vector<1x1x32xf32> to vector<1x32xf32>
    %c1_119 = arith.constant 1 : index
    %c0_120 = arith.constant 0 : index
    %c0_121 = arith.constant 0 : index
    %228 = vector.load %arg12[%c1_119, %c0_120, %c0_121] : memref<2x1x32xf32, #tpu.memory_space<vmem>>, vector<1x1x32xf32>
    %229 = vector.shape_cast %228 : vector<1x1x32xf32> to vector<1x32xf32>
    %cst_122 = arith.constant dense<0.000000e+00> : vector<16xf32>
    %230 = vector.multi_reduction <add>, %225, %cst_122 [1] : vector<16x32xf32> to vector<16xf32>
    %231 = vector.shape_cast %230 : vector<16xf32> to vector<16x1xf32>
    %cst_123 = arith.constant 3.200000e+01 : f32
    %232 = vector.broadcast %cst_123 : f32 to vector<16x1xf32>
    %233 = arith.divf %231, %232 : vector<16x1xf32>
    %234 = arith.mulf %225, %225 : vector<16x32xf32>
    %cst_124 = arith.constant dense<0.000000e+00> : vector<16xf32>
    %235 = vector.multi_reduction <add>, %234, %cst_124 [1] : vector<16x32xf32> to vector<16xf32>
    %236 = vector.shape_cast %235 : vector<16xf32> to vector<16x1xf32>
    %cst_125 = arith.constant 3.200000e+01 : f32
    %237 = vector.broadcast %cst_125 : f32 to vector<16x1xf32>
    %238 = arith.divf %236, %237 : vector<16x1xf32>
    %239 = arith.mulf %233, %233 : vector<16x1xf32>
    %240 = arith.subf %238, %239 : vector<16x1xf32>
    %241 = vector.broadcast %233 : vector<16x1xf32> to vector<16x32xf32>
    %242 = arith.subf %225, %241 : vector<16x32xf32>
    %cst_126 = arith.constant 9.99999997E-7 : f32
    %243 = vector.broadcast %cst_126 : f32 to vector<16x1xf32>
    %244 = arith.addf %240, %243 : vector<16x1xf32>
    %245 = math.rsqrt %244 : vector<16x1xf32>
    %246 = vector.broadcast %245 : vector<16x1xf32> to vector<16x32xf32>
    %247 = arith.mulf %242, %246 : vector<16x32xf32>
    %248 = vector.broadcast %227 : vector<1x32xf32> to vector<16x32xf32>
    %249 = arith.mulf %247, %248 : vector<16x32xf32>
    %250 = vector.broadcast %229 : vector<1x32xf32> to vector<16x32xf32>
    %251 = arith.addf %249, %250 : vector<16x32xf32>
    %252 = arith.truncf %251 : vector<16x32xf32> to vector<16x32xbf16>
    %c1_127 = arith.constant 1 : index
    %c0_128 = arith.constant 0 : index
    %c0_129 = arith.constant 0 : index
    %253 = vector.load %arg13[%c1_127, %c0_128, %c0_129] : memref<2x32x128xbf16, #tpu.memory_space<vmem>>, vector<1x32x128xbf16>
    %254 = vector.shape_cast %253 : vector<1x32x128xbf16> to vector<32x128xbf16>
    %cst_130 = arith.constant dense<0.000000e+00> : vector<16x128xf32>
    %255 = tpu.matmul %252, %254, %cst_130 {dimension_numbers = #tpu.dot_dimension_numbers<[1], [0], [0], [1], [0, 0, 1, 1], [], []>} : vector<16x32xbf16>, vector<32x128xbf16>, vector<16x128xf32> -> vector<16x128xf32>
    %c1_131 = arith.constant 1 : index
    %c0_132 = arith.constant 0 : index
    %c0_133 = arith.constant 0 : index
    %256 = vector.load %arg14[%c1_131, %c0_132, %c0_133] : memref<2x1x128xf32, #tpu.memory_space<vmem>>, vector<1x1x128xf32>
    %257 = vector.shape_cast %256 : vector<1x1x128xf32> to vector<1x128xf32>
    %258 = vector.broadcast %257 : vector<1x128xf32> to vector<16x128xf32>
    %259 = arith.addf %255, %258 : vector<16x128xf32>
    %cst_134 = arith.constant 5.000000e-01 : f32
    %260 = vector.broadcast %cst_134 : f32 to vector<16x128xf32>
    %261 = arith.mulf %260, %259 : vector<16x128xf32>
    %cst_135 = arith.constant 0.707106769 : f32
    %262 = vector.broadcast %cst_135 : f32 to vector<16x128xf32>
    %263 = arith.mulf %259, %262 : vector<16x128xf32>
    %264 = math.erf %263 : vector<16x128xf32>
    %cst_136 = arith.constant 1.000000e+00 : f32
    %265 = vector.broadcast %cst_136 : f32 to vector<16x128xf32>
    %266 = arith.addf %265, %264 : vector<16x128xf32>
    %267 = arith.mulf %261, %266 : vector<16x128xf32>
    %268 = arith.truncf %267 : vector<16x128xf32> to vector<16x128xbf16>
    %c1_137 = arith.constant 1 : index
    %c0_138 = arith.constant 0 : index
    %c0_139 = arith.constant 0 : index
    %269 = vector.load %arg15[%c1_137, %c0_138, %c0_139] : memref<2x128x32xbf16, #tpu.memory_space<vmem>>, vector<1x128x32xbf16>
    %270 = vector.shape_cast %269 : vector<1x128x32xbf16> to vector<128x32xbf16>
    %cst_140 = arith.constant dense<0.000000e+00> : vector<16x32xf32>
    %271 = tpu.matmul %268, %270, %cst_140 {dimension_numbers = #tpu.dot_dimension_numbers<[1], [0], [0], [1], [0, 0, 1, 1], [], []>} : vector<16x128xbf16>, vector<128x32xbf16>, vector<16x32xf32> -> vector<16x32xf32>
    %c1_141 = arith.constant 1 : index
    %c0_142 = arith.constant 0 : index
    %c0_143 = arith.constant 0 : index
    %272 = vector.load %arg16[%c1_141, %c0_142, %c0_143] : memref<2x1x32xf32, #tpu.memory_space<vmem>>, vector<1x1x32xf32>
    %273 = vector.shape_cast %272 : vector<1x1x32xf32> to vector<1x32xf32>
    %274 = vector.broadcast %273 : vector<1x32xf32> to vector<16x32xf32>
    %275 = arith.addf %271, %274 : vector<16x32xf32>
    %276 = arith.addf %275, %225 : vector<16x32xf32>
    %c0_144 = arith.constant 0 : index
    %c0_145 = arith.constant 0 : index
    %277 = vector.load %arg3[%c0_144, %c0_145] : memref<2x16xf32, #tpu.memory_space<vmem>>, vector<2x16xf32>
    %cst_146 = arith.constant dense<0.000000e+00> : vector<2x32xf32>
    %278 = tpu.matmul %277, %276, %cst_146 {dimension_numbers = #tpu.dot_dimension_numbers<[1], [0], [0], [1], [0, 0, 1, 1], [], []>} : vector<2x16xf32>, vector<16x32xf32>, vector<2x32xf32> -> vector<2x32xf32>
    %c0_147 = arith.constant 0 : index
    %c0_148 = arith.constant 0 : index
    %279 = vector.load %arg17[%c0_147, %c0_148] : memref<1x32xf32, #tpu.memory_space<vmem>>, vector<1x32xf32>
    %c0_149 = arith.constant 0 : index
    %c0_150 = arith.constant 0 : index
    %280 = vector.load %arg18[%c0_149, %c0_150] : memref<1x32xf32, #tpu.memory_space<vmem>>, vector<1x32xf32>
    %cst_151 = arith.constant dense<0.000000e+00> : vector<2xf32>
    %281 = vector.multi_reduction <add>, %278, %cst_151 [1] : vector<2x32xf32> to vector<2xf32>
    %282 = vector.shape_cast %281 : vector<2xf32> to vector<2x1xf32>
    %cst_152 = arith.constant 3.200000e+01 : f32
    %283 = vector.broadcast %cst_152 : f32 to vector<2x1xf32>
    %284 = arith.divf %282, %283 : vector<2x1xf32>
    %285 = arith.mulf %278, %278 : vector<2x32xf32>
    %cst_153 = arith.constant dense<0.000000e+00> : vector<2xf32>
    %286 = vector.multi_reduction <add>, %285, %cst_153 [1] : vector<2x32xf32> to vector<2xf32>
    %287 = vector.shape_cast %286 : vector<2xf32> to vector<2x1xf32>
    %cst_154 = arith.constant 3.200000e+01 : f32
    %288 = vector.broadcast %cst_154 : f32 to vector<2x1xf32>
    %289 = arith.divf %287, %288 : vector<2x1xf32>
    %290 = arith.mulf %284, %284 : vector<2x1xf32>
    %291 = arith.subf %289, %290 : vector<2x1xf32>
    %292 = vector.broadcast %284 : vector<2x1xf32> to vector<2x32xf32>
    %293 = arith.subf %278, %292 : vector<2x32xf32>
    %cst_155 = arith.constant 9.99999997E-7 : f32
    %294 = vector.broadcast %cst_155 : f32 to vector<2x1xf32>
    %295 = arith.addf %291, %294 : vector<2x1xf32>
    %296 = math.rsqrt %295 : vector<2x1xf32>
    %297 = vector.broadcast %296 : vector<2x1xf32> to vector<2x32xf32>
    %298 = arith.mulf %293, %297 : vector<2x32xf32>
    %299 = vector.broadcast %279 : vector<1x32xf32> to vector<2x32xf32>
    %300 = arith.mulf %298, %299 : vector<2x32xf32>
    %301 = vector.broadcast %280 : vector<1x32xf32> to vector<2x32xf32>
    %302 = arith.addf %300, %301 : vector<2x32xf32>
    %c0_156 = arith.constant 0 : index
    %c0_157 = arith.constant 0 : index
    %303 = vector.load %arg19[%c0_156, %c0_157] : memref<32x2xf32, #tpu.memory_space<vmem>>, vector<32x2xf32>
    %cst_158 = arith.constant dense<0.000000e+00> : vector<2x2xf32>
    %304 = tpu.matmul %302, %303, %cst_158 {dimension_numbers = #tpu.dot_dimension_numbers<[1], [0], [0], [1], [0, 0, 1, 1], [], []>} : vector<2x32xf32>, vector<32x2xf32>, vector<2x2xf32> -> vector<2x2xf32>
    %c0_159 = arith.constant 0 : index
    %c0_160 = arith.constant 0 : index
    %305 = vector.load %arg20[%c0_159, %c0_160] : memref<1x2xf32, #tpu.memory_space<vmem>>, vector<1x2xf32>
    %306 = vector.broadcast %305 : vector<1x2xf32> to vector<2x2xf32>
    %307 = arith.addf %304, %306 : vector<2x2xf32>
    %cst_161 = arith.constant dense<0xFF800000> : vector<2xf32>
    %308 = vector.multi_reduction <maximumf>, %307, %cst_161 [1] : vector<2x2xf32> to vector<2xf32>
    %309 = vector.shape_cast %308 : vector<2xf32> to vector<2x1xf32>
    %310 = vector.broadcast %309 : vector<2x1xf32> to vector<2x2xf32>
    %311 = arith.subf %307, %310 : vector<2x2xf32>
    %312 = math.exp %311 : vector<2x2xf32>
    %cst_162 = arith.constant dense<0.000000e+00> : vector<2xf32>
    %313 = vector.multi_reduction <add>, %312, %cst_162 [1] : vector<2x2xf32> to vector<2xf32>
    %314 = vector.shape_cast %313 : vector<2xf32> to vector<2x1xf32>
    %315 = vector.broadcast %314 : vector<2x1xf32> to vector<2x2xf32>
    %316 = arith.divf %312, %315 : vector<2x2xf32>
    %cst_163 = arith.constant dense<0.000000e+00> : vector<2xf32>
    %317 = vector.multi_reduction <add>, %316, %cst_163 [0] : vector<2x2xf32> to vector<2xf32>
    %318 = vector.shape_cast %317 : vector<2xf32> to vector<1x2xf32>
    %cst_164 = arith.constant 2.000000e+00 : f32
    %319 = vector.broadcast %cst_164 : f32 to vector<1x2xf32>
    %320 = arith.divf %318, %319 : vector<1x2xf32>
    %c0_165 = arith.constant 0 : index
    %c0_166 = arith.constant 0 : index
    %321 = vector.load %arg21[%c0_165, %c0_166] : memref<1x2xf32, #tpu.memory_space<vmem>>, vector<1x2xf32>
    tpu.vector_store %arg21[%c0_165, %c0_166], %320 {strides = array<i32>} : memref<1x2xf32, #tpu.memory_space<vmem>>, vector<1x2xf32>,
    return
  }
}

</mosaic_0001>

<llo_original>
// kernel: squeeze.1
$region0: #{squeeze.1}
  %s0 = inlined_call_operand.hbm [shape: f32[1,2,3,32,32], index: 0, kind: input, shape index: {}]
  %s1 = inlined_call_operand.vmem [shape: f32[2,3,2,16,2,16], index: 1, kind: output, shape index: {}]
  $region1: #{squeeze.1} parent=0
    #allocation0 [shape = 'u8[98304]{0}', space=vmem, size = 0x18000, scoped, tag = 'operand span for operand 0']
    #allocation1 [shape = 's32[1]{0}', space=sflag, size = 0x4, scoped, tag = 'scoped memory for squeeze.1']
    #allocation2 [shape = 'u8[786432]{0}', space=vmem, size = 0xc0000, scoped, tag = 'scoped mem for output reshape']
    %2 = vsyncpa [#allocation1], 0
    %s4 = ssub.s32 3072, 3072
    %5 = vsyncadd [#allocation1], %s4
    %s7 = sshll.u32 [#allocation0], 4
    %s8 = int_to_ptr.vmem [resolvable:$true] %s7
    %10 = dma.hbm_to_vmem [thread:$0]  %s0, 3072, %s8, [#allocation1]
    %11 = dma.done [#allocation1], 3072
    %v12 = vld [vmem:[#allocation0] sm:$0xff]
    %vm13 = vcmask 130048
    %14 = vst.msk [vmem:[#allocation2] ss:$8 sm:$0xf] %vm13, %v12
    %15 = vst.msk [vmem:[#allocation2] ss:$8 sm:$0xf0] %vm13, %v12
    %s16 = scalar_lea.vmem [#allocation0], 8
    %v17 = vld [vmem:[%s16] sm:$0xff]
    %vm18 = vcmask 130048
    %s19 = scalar_lea.vmem [#allocation2], 64
    %20 = vst.msk [vmem:[%s19] ss:$8 sm:$0xf] %vm18, %v17
    %s21 = scalar_lea.vmem [#allocation2], 64
    %22 = vst.msk [vmem:[%s21] ss:$8 sm:$0xf0] %vm18, %v17
    %s23 = scalar_lea.vmem [#allocation0], 16
    %v24 = vld [vmem:[%s23] sm:$0xff]
    %vm25 = vcmask 130048
    %s26 = scalar_lea.vmem [#allocation2], 128
    %27 = vst.msk [vmem:[%s26] ss:$8 sm:$0xf] %vm25, %v24
    %s28 = scalar_lea.vmem [#allocation2], 128
    %29 = vst.msk [vmem:[%s28] ss:$8 sm:$0xf0] %vm25, %v24
    %s30 = scalar_lea.vmem [#allocation0], 24
    %v31 = vld [vmem:[%s30] sm:$0xff]
    %vm32 = vcmask 130048
    %s33 = scalar_lea.vmem [#allocation2], 192
    %34 = vst.msk [vmem:[%s33] ss:$8 sm:$0xf] %vm32, %v31
    %s35 = scalar_lea.vmem [#allocation2], 192
    %36 = vst.msk [vmem:[%s35] ss:$8 sm:$0xf0] %vm32, %v31
    %s37 = scalar_lea.vmem [#allocation0], 32
    %v38 = vld [vmem:[%s37] sm:$0xff]
    %vm39 = vcmask 130048
    %s40 = scalar_lea.vmem [#allocation2], 256
    %41 = vst.msk [vmem:[%s40] ss:$8 sm:$0xf] %vm39, %v38
    %s42 = scalar_lea.vmem [#allocation2], 256
    %43 = vst.msk [vmem:[%s42] ss:$8 sm:$0xf0] %vm39, %v38
    %s44 = scalar_lea.vmem [#allocation0], 40
    %v45 = vld [vmem:[%s44] sm:$0xff]
    %vm46 = vcmask 130048
    %s47 = scalar_lea.vmem [#allocation2], 320
    %48 = vst.msk [vmem:[%s47] ss:$8 sm:$0xf] %vm46, %v45
    %s49 = scalar_lea.vmem [#allocation2], 320
    %50 = vst.msk [vmem:[%s49] ss:$8 sm:$0xf0] %vm46, %v45
    %s51 = scalar_lea.vmem [#allocation0], 48
    %v52 = vld [vmem:[%s51] sm:$0xff]
    %vm53 = vcmask 130048
    %s54 = scalar_lea.vmem [#allocation2], 384
    %55 = vst.msk [vmem:[%s54] ss:$8 sm:$0xf] %vm53, %v52
    %s56 = scalar_lea.vmem [#allocation2], 384
    %57 = vst.msk [vmem:[%s56] ss:$8 sm:$0xf0] %vm53, %v52
    %s58 = scalar_lea.vmem [#allocation0], 56
    %v59 = vld [vmem:[%s58] sm:$0xff]
    %vm60 = vcmask 130048
    %s61 = scalar_lea.vmem [#allocation2], 448
    %62 = vst.msk [vmem:[%s61] ss:$8 sm:$0xf] %vm60, %v59
    %s63 = scalar_lea.vmem [#allocation2], 448
    %64 = vst.msk [vmem:[%s63] ss:$8 sm:$0xf0] %vm60, %v59
    %s65 = scalar_lea.vmem [#allocation0], 64
    %v66 = vld [vmem:[%s65] sm:$0xff]
    %vm67 = vcmask 130048
    %s68 = scalar_lea.vmem [#allocation2], 512
    %69 = vst.msk [vmem:[%s68] ss:$8 sm:$0xf] %vm67, %v66
    %s70 = scalar_lea.vmem [#allocation2], 512
    %71 = vst.msk [vmem:[%s70] ss:$8 sm:$0xf0] %vm67, %v66
    %s72 = scalar_lea.vmem [#allocation0], 72
    %v73 = vld [vmem:[%s72] sm:$0xff]
    %vm74 = vcmask 130048
    %s75 = scalar_lea.vmem [#allocation2], 576
    %76 = vst.msk [vmem:[%s75] ss:$8 sm:$0xf] %vm74, %v73
    %s77 = scalar_lea.vmem [#allocation2], 576
    %78 = vst.msk [vmem:[%s77] ss:$8 sm:$0xf0] %vm74, %v73
    %s79 = scalar_lea.vmem [#allocation0], 80
    %v80 = vld [vmem:[%s79] sm:$0xff]
    %vm81 = vcmask 130048
    %s82 = scalar_lea.vmem [#allocation2], 640
    %83 = vst.msk [vmem:[%s82] ss:$8 sm:$0xf] %vm81, %v80
    %s84 = scalar_lea.vmem [#allocation2], 640
    %85 = vst.msk [vmem:[%s84] ss:$8 sm:$0xf0] %vm81, %v80
    %s86 = scalar_lea.vmem [#allocation0], 88
    %v87 = vld [vmem:[%s86] sm:$0xff]
    %vm88 = vcmask 130048
    %s89 = scalar_lea.vmem [#allocation2], 704
    %90 = vst.msk [vmem:[%s89] ss:$8 sm:$0xf] %vm88, %v87
    %s91 = scalar_lea.vmem [#allocation2], 704
    %92 = vst.msk [vmem:[%s91] ss:$8 sm:$0xf0] %vm88, %v87
    %s93 = scalar_lea.vmem [#allocation0], 96
    %v94 = vld [vmem:[%s93] sm:$0xff]
    %vm95 = vcmask 130048
    %s96 = scalar_lea.vmem [#allocation2], 768
    %97 = vst.msk [vmem:[%s96] ss:$8 sm:$0xf] %vm95, %v94
    %s98 = scalar_lea.vmem [#allocation2], 768
    %99 = vst.msk [vmem:[%s98] ss:$8 sm:$0xf0] %vm95, %v94
    %s100 = scalar_lea.vmem [#allocation0], 104
    %v101 = vld [vmem:[%s100] sm:$0xff]
    %vm102 = vcmask 130048
    %s103 = scalar_lea.vmem [#allocation2], 832
    %104 = vst.msk [vmem:[%s103] ss:$8 sm:$0xf] %vm102, %v101
    %s105 = scalar_lea.vmem [#allocation2], 832
    %106 = vst.msk [vmem:[%s105] ss:$8 sm:$0xf0] %vm102, %v101
    %s107 = scalar_lea.vmem [#allocation0], 112
    %v108 = vld [vmem:[%s107] sm:$0xff]
    %vm109 = vcmask 130048
    %s110 = scalar_lea.vmem [#allocation2], 896
    %111 = vst.msk [vmem:[%s110] ss:$8 sm:$0xf] %vm109, %v108
    %s112 = scalar_lea.vmem [#allocation2], 896
    %113 = vst.msk [vmem:[%s112] ss:$8 sm:$0xf0] %vm109, %v108
    %s114 = scalar_lea.vmem [#allocation0], 120
    %v115 = vld [vmem:[%s114] sm:$0xff]
    %vm116 = vcmask 130048
    %s117 = scalar_lea.vmem [#allocation2], 960
    %118 = vst.msk [vmem:[%s117] ss:$8 sm:$0xf] %vm116, %v115
    %s119 = scalar_lea.vmem [#allocation2], 960
    %120 = vst.msk [vmem:[%s119] ss:$8 sm:$0xf0] %vm116, %v115
    %s121 = scalar_lea.vmem [#allocation0], 128
    %v122 = vld [vmem:[%s121] sm:$0xff]
    %vm123 = vcmask 130048
    %s124 = scalar_lea.vmem [#allocation2], 1024
    %125 = vst.msk [vmem:[%s124] ss:$8 sm:$0xf] %vm123, %v122
    %s126 = scalar_lea.vmem [#allocation2], 1024
    %127 = vst.msk [vmem:[%s126] ss:$8 sm:$0xf0] %vm123, %v122
    %s128 = scalar_lea.vmem [#allocation0], 136
    %v129 = vld [vmem:[%s128] sm:$0xff]
    %vm130 = vcmask 130048
    %s131 = scalar_lea.vmem [#allocation2], 1088
    %132 = vst.msk [vmem:[%s131] ss:$8 sm:$0xf] %vm130, %v129
    %s133 = scalar_lea.vmem [#allocation2], 1088
    %134 = vst.msk [vmem:[%s133] ss:$8 sm:$0xf0] %vm130, %v129
    %s135 = scalar_lea.vmem [#allocation0], 144
    %v136 = vld [vmem:[%s135] sm:$0xff]
    %vm137 = vcmask 130048
    %s138 = scalar_lea.vmem [#allocation2], 1152
    %139 = vst.msk [vmem:[%s138] ss:$8 sm:$0xf] %vm137, %v136
    %s140 = scalar_lea.vmem [#allocation2], 1152
    %141 = vst.msk [vmem:[%s140] ss:$8 sm:$0xf0] %vm137, %v136
    %s142 = scalar_lea.vmem [#allocation0], 152
    %v143 = vld [vmem:[%s142] sm:$0xff]
    %vm144 = vcmask 130048
    %s145 = scalar_lea.vmem [#allocation2], 1216
    %146 = vst.msk [vmem:[%s145] ss:$8 sm:$0xf] %vm144, %v143
    %s147 = scalar_lea.vmem [#allocation2], 1216
    %148 = vst.msk [vmem:[%s147] ss:$8 sm:$0xf0] %vm144, %v143
    %s149 = scalar_lea.vmem [#allocation0], 160
    %v150 = vld [vmem:[%s149] sm:$0xff]
    %vm151 = vcmask 130048
    %s152 = scalar_lea.vmem [#allocation2], 1280
    %153 = vst.msk [vmem:[%s152] ss:$8 sm:$0xf] %vm151, %v150
    %s154 = scalar_lea.vmem [#allocation2], 1280
    %155 = vst.msk [vmem:[%s154] ss:$8 sm:$0xf0] %vm151, %v150
    %s156 = scalar_lea.vmem [#allocation0], 168
    %v157 = vld [vmem:[%s156] sm:$0xff]
    %vm158 = vcmask 130048
    %s159 = scalar_lea.vmem [#allocation2], 1344
    %160 = vst.msk [vmem:[%s159] ss:$8 sm:$0xf] %vm158, %v157
    %s161 = scalar_lea.vmem [#allocation2], 1344
    %162 = vst.msk [vmem:[%s161] ss:$8 sm:$0xf0] %vm158, %v157
    %s163 = scalar_lea.vmem [#allocation0], 176
    %v164 = vld [vmem:[%s163] sm:$0xff]
    %vm165 = vcmask 130048
    %s166 = scalar_lea.vmem [#allocation2], 1408
    %167 = vst.msk [vmem:[%s166] ss:$8 sm:$0xf] %vm165, %v164
    %s168 = scalar_lea.vmem [#allocation2], 1408
    %169 = vst.msk [vmem:[%s168] ss:$8 sm:$0xf0] %vm165, %v164
    %s170 = scalar_lea.vmem [#allocation0], 184
    %v171 = vld [vmem:[%s170] sm:$0xff]
    %vm172 = vcmask 130048
    %s173 = scalar_lea.vmem [#allocation2], 1472
    %174 = vst.msk [vmem:[%s173] ss:$8 sm:$0xf] %vm172, %v171
    %s175 = scalar_lea.vmem [#allocation2], 1472
    %176 = vst.msk [vmem:[%s175] ss:$8 sm:$0xf0] %vm172, %v171
    %v177 = vld [vmem:[#allocation0] sm:$0xff]
    %178 = vrot.lane.b32.xlu0 %v177, 112
    %v179 = vpop.permute.xlu0 %178
    %vm180 = vcmask 130048
    %s181 = scalar_lea.vmem [#allocation2], 1
    %182 = vst.msk [vmem:[%s181] ss:$8 sm:$0xf] %vm180, %v179
    %s183 = scalar_lea.vmem [#allocation2], 1
    %184 = vst.msk [vmem:[%s183] ss:$8 sm:$0xf0] %vm180, %v179
    %s185 = scalar_lea.vmem [#allocation0], 8
    %v186 = vld [vmem:[%s185] sm:$0xff]
    %187 = vrot.lane.b32.xlu0 %v186, 112
    %v188 = vpop.permute.xlu0 %187
    %vm189 = vcmask 130048
    %s190 = scalar_lea.vmem [#allocation2], 65
    %191 = vst.msk [vmem:[%s190] ss:$8 sm:$0xf] %vm189, %v188
    %s192 = scalar_lea.vmem [#allocation2], 65
    %193 = vst.msk [vmem:[%s192] ss:$8 sm:$0xf0] %vm189, %v188
    %s194 = scalar_lea.vmem [#allocation0], 16
    %v195 = vld [vmem:[%s194] sm:$0xff]
    %196 = vrot.lane.b32.xlu0 %v195, 112
    %v197 = vpop.permute.xlu0 %196
    %vm198 = vcmask 130048
    %s199 = scalar_lea.vmem [#allocation2], 129
    %200 = vst.msk [vmem:[%s199] ss:$8 sm:$0xf] %vm198, %v197
    %s201 = scalar_lea.vmem [#allocation2], 129
    %202 = vst.msk [vmem:[%s201] ss:$8 sm:$0xf0] %vm198, %v197
    %s203 = scalar_lea.vmem [#allocation0], 24
    %v204 = vld [vmem:[%s203] sm:$0xff]
    %205 = vrot.lane.b32.xlu0 %v204, 112
    %v206 = vpop.permute.xlu0 %205
    %vm207 = vcmask 130048
    %s208 = scalar_lea.vmem [#allocation2], 193
    %209 = vst.msk [vmem:[%s208] ss:$8 sm:$0xf] %vm207, %v206
    %s210 = scalar_lea.vmem [#allocation2], 193
    %211 = vst.msk [vmem:[%s210] ss:$8 sm:$0xf0] %vm207, %v206
    %s212 = scalar_lea.vmem [#allocation0], 32
    %v213 = vld [vmem:[%s212] sm:$0xff]
    %214 = vrot.lane.b32.xlu0 %v213, 112
    %v215 = vpop.permute.xlu0 %214
    %vm216 = vcmask 130048
    %s217 = scalar_lea.vmem [#allocation2], 257
    %218 = vst.msk [vmem:[%s217] ss:$8 sm:$0xf] %vm216, %v215
    %s219 = scalar_lea.vmem [#allocation2], 257
    %220 = vst.msk [vmem:[%s219] ss:$8 sm:$0xf0] %vm216, %v215
    %s221 = scalar_lea.vmem [#allocation0], 40
    %v222 = vld [vmem:[%s221] sm:$0xff]
    %223 = vrot.lane.b32.xlu0 %v222, 112
    %v224 = vpop.permute.xlu0 %223
    %vm225 = vcmask 130048
    %s226 = scalar_lea.vmem [#allocation2], 321
    %227 = vst.msk [vmem:[%s226] ss:$8 sm:$0xf] %vm225, %v224
    %s228 = scalar_lea.vmem [#allocation2], 321
    %229 = vst.msk [vmem:[%s228] ss:$8 sm:$0xf0] %vm225, %v224
    %s230 = scalar_lea.vmem [#allocation0], 48
    %v231 = vld [vmem:[%s230] sm:$0xff]
    %232 = vrot.lane.b32.xlu0 %v231, 112
    %v233 = vpop.permute.xlu0 %232
    %vm234 = vcmask 130048
    %s235 = scalar_lea.vmem [#allocation2], 385
    %236 = vst.msk [vmem:[%s235] ss:$8 sm:$0xf] %vm234, %v233
    %s237 = scalar_lea.vmem [#allocation2], 385
    %238 = vst.msk [vmem:[%s237] ss:$8 sm:$0xf0] %vm234, %v233
    %s239 = scalar_lea.vmem [#allocation0], 56
    %v240 = vld [vmem:[%s239] sm:$0xff]
    %241 = vrot.lane.b32.xlu0 %v240, 112
    %v242 = vpop.permute.xlu0 %241
    %vm243 = vcmask 130048
    %s244 = scalar_lea.vmem [#allocation2], 449
    %245 = vst.msk [vmem:[%s244] ss:$8 sm:$0xf] %vm243, %v242
    %s246 = scalar_lea.vmem [#allocation2], 449
    %247 = vst.msk [vmem:[%s246] ss:$8 sm:$0xf0] %vm243, %v242
    %s248 = scalar_lea.vmem [#allocation0], 64
    %v249 = vld [vmem:[%s248] sm:$0xff]
    %250 = vrot.lane.b32.xlu0 %v249, 112
    %v251 = vpop.permute.xlu0 %250
    %vm252 = vcmask 130048
    %s253 = scalar_lea.vmem [#allocation2], 513
    %254 = vst.msk [vmem:[%s253] ss:$8 sm:$0xf] %vm252, %v251
    %s255 = scalar_lea.vmem [#allocation2], 513
    %256 = vst.msk [vmem:[%s255] ss:$8 sm:$0xf0] %vm252, %v251
    %s257 = scalar_lea.vmem [#allocation0], 72
    %v258 = vld [vmem:[%s257] sm:$0xff]
    %259 = vrot.lane.b32.xlu0 %v258, 112
    %v260 = vpop.permute.xlu0 %259
    %vm261 = vcmask 130048
    %s262 = scalar_lea.vmem [#allocation2], 577
    %263 = vst.msk [vmem:[%s262] ss:$8 sm:$0xf] %vm261, %v260
    %s264 = scalar_lea.vmem [#allocation2], 577
    %265 = vst.msk [vmem:[%s264] ss:$8 sm:$0xf0] %vm261, %v260
    %s266 = scalar_lea.vmem [#allocation0], 80
    %v267 = vld [vmem:[%s266] sm:$0xff]
    %268 = vrot.lane.b32.xlu0 %v267, 112
    %v269 = vpop.permute.xlu0 %268
    %vm270 = vcmask 130048
    %s271 = scalar_lea.vmem [#allocation2], 641
    %272 = vst.msk [vmem:[%s271] ss:$8 sm:$0xf] %vm270, %v269
    %s273 = scalar_lea.vmem [#allocation2], 641
    %274 = vst.msk [vmem:[%s273] ss:$8 sm:$0xf0] %vm270, %v269
    %s275 = scalar_lea.vmem [#allocation0], 88
    %v276 = vld [vmem:[%s275] sm:$0xff]
    %277 = vrot.lane.b32.xlu0 %v276, 112
    %v278 = vpop.permute.xlu0 %277
    %vm279 = vcmask 130048
    %s280 = scalar_lea.vmem [#allocation2], 705
    %281 = vst.msk [vmem:[%s280] ss:$8 sm:$0xf] %vm279, %v278
    %s282 = scalar_lea.vmem [#allocation2], 705
    %283 = vst.msk [vmem:[%s282] ss:$8 sm:$0xf0] %vm279, %v278
    %s284 = scalar_lea.vmem [#allocation0], 96
    %v285 = vld [vmem:[%s284] sm:$0xff]
    %286 = vrot.lane.b32.xlu0 %v285, 112
    %v287 = vpop.permute.xlu0 %286
    %vm288 = vcmask 130048
    %s289 = scalar_lea.vmem [#allocation2], 769
    %290 = vst.msk [vmem:[%s289] ss:$8 sm:$0xf] %vm288, %v287
    %s291 = scalar_lea.vmem [#allocation2], 769
    %292 = vst.msk [vmem:[%s291] ss:$8 sm:$0xf0] %vm288, %v287
    %s293 = scalar_lea.vmem [#allocation0], 104
    %v294 = vld [vmem:[%s293] sm:$0xff]
    %295 = vrot.lane.b32.xlu0 %v294, 112
    %v296 = vpop.permute.xlu0 %295
    %vm297 = vcmask 130048
    %s298 = scalar_lea.vmem [#allocation2], 833
    %299 = vst.msk [vmem:[%s298] ss:$8 sm:$0xf] %vm297, %v296
    %s300 = scalar_lea.vmem [#allocation2], 833
    %301 = vst.msk [vmem:[%s300] ss:$8 sm:$0xf0] %vm297, %v296
    %s302 = scalar_lea.vmem [#allocation0], 112
    %v303 = vld [vmem:[%s302] sm:$0xff]
    %304 = vrot.lane.b32.xlu0 %v303, 112
    %v305 = vpop.permute.xlu0 %304
    %vm306 = vcmask 130048
    %s307 = scalar_lea.vmem [#allocation2], 897
    %308 = vst.msk [vmem:[%s307] ss:$8 sm:$0xf] %vm306, %v305
    %s309 = scalar_lea.vmem [#allocation2], 897
    %310 = vst.msk [vmem:[%s309] ss:$8 sm:$0xf0] %vm306, %v305
    %s311 = scalar_lea.vmem [#allocation0], 120
    %v312 = vld [vmem:[%s311] sm:$0xff]
    %313 = vrot.lane.b32.xlu0 %v312, 112
    %v314 = vpop.permute.xlu0 %313
    %vm315 = vcmask 130048
    %s316 = scalar_lea.vmem [#allocation2], 961
    %317 = vst.msk [vmem:[%s316] ss:$8 sm:$0xf] %vm315, %v314
    %s318 = scalar_lea.vmem [#allocation2], 961
    %319 = vst.msk [vmem:[%s318] ss:$8 sm:$0xf0] %vm315, %v314
    %s320 = scalar_lea.vmem [#allocation0], 128
    %v321 = vld [vmem:[%s320] sm:$0xff]
    %322 = vrot.lane.b32.xlu0 %v321, 112
    %v323 = vpop.permute.xlu0 %322
    %vm324 = vcmask 130048
    %s325 = scalar_lea.vmem [#allocation2], 1025
    %326 = vst.msk [vmem:[%s325] ss:$8 sm:$0xf] %vm324, %v323
    %s327 = scalar_lea.vmem [#allocation2], 1025
    %328 = vst.msk [vmem:[%s327] ss:$8 sm:$0xf0] %vm324, %v323
    %s329 = scalar_lea.vmem [#allocation0], 136
    %v330 = vld [vmem:[%s329] sm:$0xff]
    %331 = vrot.lane.b32.xlu0 %v330, 112
    %v332 = vpop.permute.xlu0 %331
    %vm333 = vcmask 130048
    %s334 = scalar_lea.vmem [#allocation2], 1089
    %335 = vst.msk [vmem:[%s334] ss:$8 sm:$0xf] %vm333, %v332
    %s336 = scalar_lea.vmem [#allocation2], 1089
    %337 = vst.msk [vmem:[%s336] ss:$8 sm:$0xf0] %vm333, %v332
    %s338 = scalar_lea.vmem [#allocation0], 144
    %v339 = vld [vmem:[%s338] sm:$0xff]
    %340 = vrot.lane.b32.xlu0 %v339, 112
    %v341 = vpop.permute.xlu0 %340
    %vm342 = vcmask 130048
    %s343 = scalar_lea.vmem [#allocation2], 1153
    %344 = vst.msk [vmem:[%s343] ss:$8 sm:$0xf] %vm342, %v341
    %s345 = scalar_lea.vmem [#allocation2], 1153
    %346 = vst.msk [vmem:[%s345] ss:$8 sm:$0xf0] %vm342, %v341
    %s347 = scalar_lea.vmem [#allocation0], 152
    %v348 = vld [vmem:[%s347] sm:$0xff]
    %349 = vrot.lane.b32.xlu0 %v348, 112
    %v350 = vpop.permute.xlu0 %349
    %vm351 = vcmask 130048
    %s352 = scalar_lea.vmem [#allocation2], 1217
    %353 = vst.msk [vmem:[%s352] ss:$8 sm:$0xf] %vm351, %v350
    %s354 = scalar_lea.vmem [#allocation2], 1217
    %355 = vst.msk [vmem:[%s354] ss:$8 sm:$0xf0] %vm351, %v350
    %s356 = scalar_lea.vmem [#allocation0], 160
    %v357 = vld [vmem:[%s356] sm:$0xff]
    %358 = vrot.lane.b32.xlu0 %v357, 112
    %v359 = vpop.permute.xlu0 %358
    %vm360 = vcmask 130048
    %s361 = scalar_lea.vmem [#allocation2], 1281
    %362 = vst.msk [vmem:[%s361] ss:$8 sm:$0xf] %vm360, %v359
    %s363 = scalar_lea.vmem [#allocation2], 1281
    %364 = vst.msk [vmem:[%s363] ss:$8 sm:$0xf0] %vm360, %v359
    %s365 = scalar_lea.vmem [#allocation0], 168
    %v366 = vld [vmem:[%s365] sm:$0xff]
    %367 = vrot.lane.b32.xlu0 %v366, 112
    %v368 = vpop.permute.xlu0 %367
    %vm369 = vcmask 130048
    %s370 = scalar_lea.vmem [#allocation2], 1345
    %371 = vst.msk [vmem:[%s370] ss:$8 sm:$0xf] %vm369, %v368
    %s372 = scalar_lea.vmem [#allocation2], 1345
    %373 = vst.msk [vmem:[%s372] ss:$8 sm:$0xf0] %vm369, %v368
    %s374 = scalar_lea.vmem [#allocation0], 176
    %v375 = vld [vmem:[%s374] sm:$0xff]
    %376 = vrot.lane.b32.xlu0 %v375, 112
    %v377 = vpop.permute.xlu0 %376
    %vm378 = vcmask 130048
    %s379 = scalar_lea.vmem [#allocation2], 1409
    %380 = vst.msk [vmem:[%s379] ss:$8 sm:$0xf] %vm378, %v377
    %s381 = scalar_lea.vmem [#allocation2], 1409
    %382 = vst.msk [vmem:[%s381] ss:$8 sm:$0xf0] %vm378, %v377
    %s383 = scalar_lea.vmem [#allocation0], 184
    %v384 = vld [vmem:[%s383] sm:$0xff]
    %385 = vrot.lane.b32.xlu0 %v384, 112
    %v386 = vpop.permute.xlu0 %385
    %vm387 = vcmask 130048
    %s388 = scalar_lea.vmem [#allocation2], 1473
    %389 = vst.msk [vmem:[%s388] ss:$8 sm:$0xf] %vm387, %v386
    %s390 = scalar_lea.vmem [#allocation2], 1473
    %391 = vst.msk [vmem:[%s390] ss:$8 sm:$0xf0] %vm387, %v386
    %s393 = sshllo.u32 0, 2
    %v395 = vld [vmem:[#allocation2] sm:%s393]
    %s396 = sshllo.u32 0, 2
    %397 = vst [vmem:[%s1] sm:%s396] %v395
    %s398 = scalar_lea.vmem [#allocation2], 8
    %v399 = vld [vmem:[%s398] sm:%s393]
    %s400 = sshllo.u32 0, 2
    %s401 = scalar_lea.vmem %s1, 2
    %402 = vst [vmem:[%s401] sm:%s400] %v399
    %s403 = scalar_lea.vmem [#allocation2], 16
    %v404 = vld [vmem:[%s403] sm:%s393]
    %s405 = sshllo.u32 0, 2
    %s406 = smul.addr 2, 2
    %s407 = scalar_lea.vmem %s1, %s406
    %408 = vst [vmem:[%s407] sm:%s405] %v404
    %s409 = scalar_lea.vmem [#allocation2], 24
    %v410 = vld [vmem:[%s409] sm:%s393]
    %s411 = sshllo.u32 0, 2
    %s412 = smul.addr 2, 3
    %s413 = scalar_lea.vmem %s1, %s412
    %414 = vst [vmem:[%s413] sm:%s411] %v410
    %s415 = scalar_lea.vmem [#allocation2], 32
    %v416 = vld [vmem:[%s415] sm:%s393]
    %s417 = sshllo.u32 0, 2
    %s418 = smul.addr 2, 4
    %s419 = scalar_lea.vmem %s1, %s418
    %420 = vst [vmem:[%s419] sm:%s417] %v416
    %s421 = scalar_lea.vmem [#allocation2], 40
    %v422 = vld [vmem:[%s421] sm:%s393]
    %s423 = sshllo.u32 0, 2
    %s424 = smul.addr 2, 5
    %s425 = scalar_lea.vmem %s1, %s424
    %426 = vst [vmem:[%s425] sm:%s423] %v422
    %s427 = scalar_lea.vmem [#allocation2], 48
    %v428 = vld [vmem:[%s427] sm:%s393]
    %s429 = sshllo.u32 0, 2
    %s430 = smul.addr 2, 6
    %s431 = scalar_lea.vmem %s1, %s430
    %432 = vst [vmem:[%s431] sm:%s429] %v428
    %s433 = scalar_lea.vmem [#allocation2], 56
    %v434 = vld [vmem:[%s433] sm:%s393]
    %s435 = sshllo.u32 0, 2
    %s436 = smul.addr 2, 7
    %s437 = scalar_lea.vmem %s1, %s436
    %438 = vst [vmem:[%s437] sm:%s435] %v434
    %s439 = scalar_lea.vmem [#allocation2], 64
    %v440 = vld [vmem:[%s439] sm:%s393]
    %s441 = sshllo.u32 0, 2
    %s442 = smul.addr 2, 8
    %s443 = scalar_lea.vmem %s1, %s442
    %444 = vst [vmem:[%s443] sm:%s441] %v440
    %s445 = scalar_lea.vmem [#allocation2], 72
    %v446 = vld [vmem:[%s445] sm:%s393]
    %s447 = sshllo.u32 0, 2
    %s448 = smul.addr 2, 9
    %s449 = scalar_lea.vmem %s1, %s448
    %450 = vst [vmem:[%s449] sm:%s447] %v446
    %s451 = scalar_lea.vmem [#allocation2], 80
    %v452 = vld [vmem:[%s451] sm:%s393]
    %s453 = sshllo.u32 0, 2
    %s454 = smul.addr 2, 10
    %s455 = scalar_lea.vmem %s1, %s454
    %456 = vst [vmem:[%s455] sm:%s453] %v452
    %s457 = scalar_lea.vmem [#allocation2], 88
    %v458 = vld [vmem:[%s457] sm:%s393]
    %s459 = sshllo.u32 0, 2
    %s460 = smul.addr 2, 11
    %s461 = scalar_lea.vmem %s1, %s460
    %462 = vst [vmem:[%s461] sm:%s459] %v458
    %s463 = scalar_lea.vmem [#allocation2], 96
    %v464 = vld [vmem:[%s463] sm:%s393]
    %s465 = sshllo.u32 0, 2
    %s466 = smul.addr 2, 12
    %s467 = scalar_lea.vmem %s1, %s466
    %468 = vst [vmem:[%s467] sm:%s465] %v464
    %s469 = scalar_lea.vmem [#allocation2], 104
    %v470 = vld [vmem:[%s469] sm:%s393]
    %s471 = sshllo.u32 0, 2
    %s472 = smul.addr 2, 13
    %s473 = scalar_lea.vmem %s1, %s472
    %474 = vst [vmem:[%s473] sm:%s471] %v470
    %s475 = scalar_lea.vmem [#allocation2], 112
    %v476 = vld [vmem:[%s475] sm:%s393]
    %s477 = sshllo.u32 0, 2
    %s478 = smul.addr 2, 14
    %s479 = scalar_lea.vmem %s1, %s478
    %480 = vst [vmem:[%s479] sm:%s477] %v476
    %s481 = scalar_lea.vmem [#allocation2], 120
    %v482 = vld [vmem:[%s481] sm:%s393]
    %s483 = sshllo.u32 0, 2
    %s484 = smul.addr 2, 15
    %s485 = scalar_lea.vmem %s1, %s484
    %486 = vst [vmem:[%s485] sm:%s483] %v482
    %s487 = scalar_lea.vmem [#allocation2], 128
    %v488 = vld [vmem:[%s487] sm:%s393]
    %s489 = sshllo.u32 0, 2
    %s490 = smul.addr 2, 16
    %s491 = scalar_lea.vmem %s1, %s490
    %492 = vst [vmem:[%s491] sm:%s489] %v488
    %s493 = scalar_lea.vmem [#allocation2], 136
    %v494 = vld [vmem:[%s493] sm:%s393]
    %s495 = sshllo.u32 0, 2
    %s496 = smul.addr 2, 17
    %s497 = scalar_lea.vmem %s1, %s496
    %498 = vst [vmem:[%s497] sm:%s495] %v494
    %s499 = scalar_lea.vmem [#allocation2], 144
    %v500 = vld [vmem:[%s499] sm:%s393]
    %s501 = sshllo.u32 0, 2
    %s502 = smul.addr 2, 18
    %s503 = scalar_lea.vmem %s1, %s502
    %504 = vst [vmem:[%s503] sm:%s501] %v500
    %s505 = scalar_lea.vmem [#allocation2], 152
    %v506 = vld [vmem:[%s505] sm:%s393]
    %s507 = sshllo.u32 0, 2
    %s508 = smul.addr 2, 19
    %s509 = scalar_lea.vmem %s1, %s508
    %510 = vst [vmem:[%s509] sm:%s507] %v506
    %s511 = scalar_lea.vmem [#allocation2], 160
    %v512 = vld [vmem:[%s511] sm:%s393]
    %s513 = sshllo.u32 0, 2
    %s514 = smul.addr 2, 20
    %s515 = scalar_lea.vmem %s1, %s514
    %516 = vst [vmem:[%s515] sm:%s513] %v512
    %s517 = scalar_lea.vmem [#allocation2], 168
    %v518 = vld [vmem:[%s517] sm:%s393]
    %s519 = sshllo.u32 0, 2
    %s520 = smul.addr 2, 21
    %s521 = scalar_lea.vmem %s1, %s520
    %522 = vst [vmem:[%s521] sm:%s519] %v518
    %s523 = scalar_lea.vmem [#allocation2], 176
    %v524 = vld [vmem:[%s523] sm:%s393]
    %s525 = sshllo.u32 0, 2
    %s526 = smul.addr 2, 22
    %s527 = scalar_lea.vmem %s1, %s526
    %528 = vst [vmem:[%s527] sm:%s525] %v524
    %s529 = scalar_lea.vmem [#allocation2], 184
    %v530 = vld [vmem:[%s529] sm:%s393]
    %s531 = sshllo.u32 0, 2
    %s532 = smul.addr 2, 23
    %s533 = scalar_lea.vmem %s1, %s532
    %534 = vst [vmem:[%s533] sm:%s531] %v530
    %s535 = scalar_lea.vmem [#allocation2], 192
    %v536 = vld [vmem:[%s535] sm:%s393]
    %s537 = sshllo.u32 0, 2
    %s538 = smul.addr 2, 24
    %s539 = scalar_lea.vmem %s1, %s538
    %540 = vst [vmem:[%s539] sm:%s537] %v536
    %s541 = scalar_lea.vmem [#allocation2], 200
    %v542 = vld [vmem:[%s541] sm:%s393]
    %s543 = sshllo.u32 0, 2
    %s544 = smul.addr 2, 25
    %s545 = scalar_lea.vmem %s1, %s544
    %546 = vst [vmem:[%s545] sm:%s543] %v542
    %s547 = scalar_lea.vmem [#allocation2], 208
    %v548 = vld [vmem:[%s547] sm:%s393]
    %s549 = sshllo.u32 0, 2
    %s550 = smul.addr 2, 26
    %s551 = scalar_lea.vmem %s1, %s550
    %552 = vst [vmem:[%s551] sm:%s549] %v548
    %s553 = scalar_lea.vmem [#allocation2], 216
    %v554 = vld [vmem:[%s553] sm:%s393]
    %s555 = sshllo.u32 0, 2
    %s556 = smul.addr 2, 27
    %s557 = scalar_lea.vmem %s1, %s556
    %558 = vst [vmem:[%s557] sm:%s555] %v554
    %s559 = scalar_lea.vmem [#allocation2], 224
    %v560 = vld [vmem:[%s559] sm:%s393]
    %s561 = sshllo.u32 0, 2
    %s562 = smul.addr 2, 28
    %s563 = scalar_lea.vmem %s1, %s562
    %564 = vst [vmem:[%s563] sm:%s561] %v560
    %s565 = scalar_lea.vmem [#allocation2], 232
    %v566 = vld [vmem:[%s565] sm:%s393]
    %s567 = sshllo.u32 0, 2
    %s568 = smul.addr 2, 29
    %s569 = scalar_lea.vmem %s1, %s568
    %570 = vst [vmem:[%s569] sm:%s567] %v566
    %s571 = scalar_lea.vmem [#allocation2], 240
    %v572 = vld [vmem:[%s571] sm:%s393]
    %s573 = sshllo.u32 0, 2
    %s574 = smul.addr 2, 30
    %s575 = scalar_lea.vmem %s1, %s574
    %576 = vst [vmem:[%s575] sm:%s573] %v572
    %s577 = scalar_lea.vmem [#allocation2], 248
    %v578 = vld [vmem:[%s577] sm:%s393]
    %s579 = sshllo.u32 0, 2
    %s580 = smul.addr 2, 31
    %s581 = scalar_lea.vmem %s1, %s580
    %582 = vst [vmem:[%s581] sm:%s579] %v578
    %s583 = scalar_lea.vmem [#allocation2], 256
    %v584 = vld [vmem:[%s583] sm:%s393]
    %s585 = sshllo.u32 0, 2
    %s586 = smul.addr 2, 32
    %s587 = scalar_lea.vmem %s1, %s586
    %588 = vst [vmem:[%s587] sm:%s585] %v584
    %s589 = scalar_lea.vmem [#allocation2], 264
    %v590 = vld [vmem:[%s589] sm:%s393]
    %s591 = sshllo.u32 0, 2
    %s592 = smul.addr 2, 33
    %s593 = scalar_lea.vmem %s1, %s592
    %594 = vst [vmem:[%s593] sm:%s591] %v590
    %s595 = scalar_lea.vmem [#allocation2], 272
    %v596 = vld [vmem:[%s595] sm:%s393]
    %s597 = sshllo.u32 0, 2
    %s598 = smul.addr 2, 34
    %s599 = scalar_lea.vmem %s1, %s598
    %600 = vst [vmem:[%s599] sm:%s597] %v596
    %s601 = scalar_lea.vmem [#allocation2], 280
    %v602 = vld [vmem:[%s601] sm:%s393]
    %s603 = sshllo.u32 0, 2
    %s604 = smul.addr 2, 35
    %s605 = scalar_lea.vmem %s1, %s604
    %606 = vst [vmem:[%s605] sm:%s603] %v602
    %s607 = scalar_lea.vmem [#allocation2], 288
    %v608 = vld [vmem:[%s607] sm:%s393]
    %s609 = sshllo.u32 0, 2
    %s610 = smul.addr 2, 36
    %s611 = scalar_lea.vmem %s1, %s610
    %612 = vst [vmem:[%s611] sm:%s609] %v608
    %s613 = scalar_lea.vmem [#allocation2], 296
    %v614 = vld [vmem:[%s613] sm:%s393]
    %s615 = sshllo.u32 0, 2
    %s616 = smul.addr 2, 37
    %s617 = scalar_lea.vmem %s1, %s616
    %618 = vst [vmem:[%s617] sm:%s615] %v614
    %s619 = scalar_lea.vmem [#allocation2], 304
    %v620 = vld [vmem:[%s619] sm:%s393]
    %s621 = sshllo.u32 0, 2
    %s622 = smul.addr 2, 38
    %s623 = scalar_lea.vmem %s1, %s622
    %624 = vst [vmem:[%s623] sm:%s621] %v620
    %s625 = scalar_lea.vmem [#allocation2], 312
    %v626 = vld [vmem:[%s625] sm:%s393]
    %s627 = sshllo.u32 0, 2
    %s628 = smul.addr 2, 39
    %s629 = scalar_lea.vmem %s1, %s628
    %630 = vst [vmem:[%s629] sm:%s627] %v626
    %s631 = scalar_lea.vmem [#allocation2], 320
    %v632 = vld [vmem:[%s631] sm:%s393]
    %s633 = sshllo.u32 0, 2
    %s634 = smul.addr 2, 40
    %s635 = scalar_lea.vmem %s1, %s634
    %636 = vst [vmem:[%s635] sm:%s633] %v632
    %s637 = scalar_lea.vmem [#allocation2], 328
    %v638 = vld [vmem:[%s637] sm:%s393]
    %s639 = sshllo.u32 0, 2
    %s640 = smul.addr 2, 41
    %s641 = scalar_lea.vmem %s1, %s640
    %642 = vst [vmem:[%s641] sm:%s639] %v638
    %s643 = scalar_lea.vmem [#allocation2], 336
    %v644 = vld [vmem:[%s643] sm:%s393]
    %s645 = sshllo.u32 0, 2
    %s646 = smul.addr 2, 42
    %s647 = scalar_lea.vmem %s1, %s646
    %648 = vst [vmem:[%s647] sm:%s645] %v644
    %s649 = scalar_lea.vmem [#allocation2], 344
    %v650 = vld [vmem:[%s649] sm:%s393]
    %s651 = sshllo.u32 0, 2
    %s652 = smul.addr 2, 43
    %s653 = scalar_lea.vmem %s1, %s652
    %654 = vst [vmem:[%s653] sm:%s651] %v650
    %s655 = scalar_lea.vmem [#allocation2], 352
    %v656 = vld [vmem:[%s655] sm:%s393]
    %s657 = sshllo.u32 0, 2
    %s658 = smul.addr 2, 44
    %s659 = scalar_lea.vmem %s1, %s658
    %660 = vst [vmem:[%s659] sm:%s657] %v656
    %s661 = scalar_lea.vmem [#allocation2], 360
    %v662 = vld [vmem:[%s661] sm:%s393]
    %s663 = sshllo.u32 0, 2
    %s664 = smul.addr 2, 45
    %s665 = scalar_lea.vmem %s1, %s664
    %666 = vst [vmem:[%s665] sm:%s663] %v662
    %s667 = scalar_lea.vmem [#allocation2], 368
    %v668 = vld [vmem:[%s667] sm:%s393]
    %s669 = sshllo.u32 0, 2
    %s670 = smul.addr 2, 46
    %s671 = scalar_lea.vmem %s1, %s670
    %672 = vst [vmem:[%s671] sm:%s669] %v668
    %s673 = scalar_lea.vmem [#allocation2], 376
    %v674 = vld [vmem:[%s673] sm:%s393]
    %s675 = sshllo.u32 0, 2
    %s676 = smul.addr 2, 47
    %s677 = scalar_lea.vmem %s1, %s676
    %678 = vst [vmem:[%s677] sm:%s675] %v674
    %s679 = scalar_lea.vmem [#allocation2], 384
    %v680 = vld [vmem:[%s679] sm:%s393]
    %s681 = sshllo.u32 0, 2
    %s682 = smul.addr 2, 48
    %s683 = scalar_lea.vmem %s1, %s682
    %684 = vst [vmem:[%s683] sm:%s681] %v680
    %s685 = scalar_lea.vmem [#allocation2], 392
    %v686 = vld [vmem:[%s685] sm:%s393]
    %s687 = sshllo.u32 0, 2
    %s688 = smul.addr 2, 49
    %s689 = scalar_lea.vmem %s1, %s688
    %690 = vst [vmem:[%s689] sm:%s687] %v686
    %s691 = scalar_lea.vmem [#allocation2], 400
    %v692 = vld [vmem:[%s691] sm:%s393]
    %s693 = sshllo.u32 0, 2
    %s694 = smul.addr 2, 50
    %s695 = scalar_lea.vmem %s1, %s694
    %696 = vst [vmem:[%s695] sm:%s693] %v692
    %s697 = scalar_lea.vmem [#allocation2], 408
    %v698 = vld [vmem:[%s697] sm:%s393]
    %s699 = sshllo.u32 0, 2
    %s700 = smul.addr 2, 51
    %s701 = scalar_lea.vmem %s1, %s700
    %702 = vst [vmem:[%s701] sm:%s699] %v698
    %s703 = scalar_lea.vmem [#allocation2], 416
    %v704 = vld [vmem:[%s703] sm:%s393]
    %s705 = sshllo.u32 0, 2
    %s706 = smul.addr 2, 52
    %s707 = scalar_lea.vmem %s1, %s706
    %708 = vst [vmem:[%s707] sm:%s705] %v704
    %s709 = scalar_lea.vmem [#allocation2], 424
    %v710 = vld [vmem:[%s709] sm:%s393]
    %s711 = sshllo.u32 0, 2
    %s712 = smul.addr 2, 53
    %s713 = scalar_lea.vmem %s1, %s712
    %714 = vst [vmem:[%s713] sm:%s711] %v710
    %s715 = scalar_lea.vmem [#allocation2], 432
    %v716 = vld [vmem:[%s715] sm:%s393]
    %s717 = sshllo.u32 0, 2
    %s718 = smul.addr 2, 54
    %s719 = scalar_lea.vmem %s1, %s718
    %720 = vst [vmem:[%s719] sm:%s717] %v716
    %s721 = scalar_lea.vmem [#allocation2], 440
    %v722 = vld [vmem:[%s721] sm:%s393]
    %s723 = sshllo.u32 0, 2
    %s724 = smul.addr 2, 55
    %s725 = scalar_lea.vmem %s1, %s724
    %726 = vst [vmem:[%s725] sm:%s723] %v722
    %s727 = scalar_lea.vmem [#allocation2], 448
    %v728 = vld [vmem:[%s727] sm:%s393]
    %s729 = sshllo.u32 0, 2
    %s730 = smul.addr 2, 56
    %s731 = scalar_lea.vmem %s1, %s730
    %732 = vst [vmem:[%s731] sm:%s729] %v728
    %s733 = scalar_lea.vmem [#allocation2], 456
    %v734 = vld [vmem:[%s733] sm:%s393]
    %s735 = sshllo.u32 0, 2
    %s736 = smul.addr 2, 57
    %s737 = scalar_lea.vmem %s1, %s736
    %738 = vst [vmem:[%s737] sm:%s735] %v734
    %s739 = scalar_lea.vmem [#allocation2], 464
    %v740 = vld [vmem:[%s739] sm:%s393]
    %s741 = sshllo.u32 0, 2
    %s742 = smul.addr 2, 58
    %s743 = scalar_lea.vmem %s1, %s742
    %744 = vst [vmem:[%s743] sm:%s741] %v740
    %s745 = scalar_lea.vmem [#allocation2], 472
    %v746 = vld [vmem:[%s745] sm:%s393]
    %s747 = sshllo.u32 0, 2
    %s748 = smul.addr 2, 59
    %s749 = scalar_lea.vmem %s1, %s748
    %750 = vst [vmem:[%s749] sm:%s747] %v746
    %s751 = scalar_lea.vmem [#allocation2], 480
    %v752 = vld [vmem:[%s751] sm:%s393]
    %s753 = sshllo.u32 0, 2
    %s754 = smul.addr 2, 60
    %s755 = scalar_lea.vmem %s1, %s754
    %756 = vst [vmem:[%s755] sm:%s753] %v752
    %s757 = scalar_lea.vmem [#allocation2], 488
    %v758 = vld [vmem:[%s757] sm:%s393]
    %s759 = sshllo.u32 0, 2
    %s760 = smul.addr 2, 61
    %s761 = scalar_lea.vmem %s1, %s760
    %762 = vst [vmem:[%s761] sm:%s759] %v758
    %s763 = scalar_lea.vmem [#allocation2], 496
    %v764 = vld [vmem:[%s763] sm:%s393]
    %s765 = sshllo.u32 0, 2
    %s766 = smul.addr 2, 62
    %s767 = scalar_lea.vmem %s1, %s766
    %768 = vst [vmem:[%s767] sm:%s765] %v764
    %s769 = scalar_lea.vmem [#allocation2], 504
    %v770 = vld [vmem:[%s769] sm:%s393]
    %s771 = sshllo.u32 0, 2
    %s772 = smul.addr 2, 63
    %s773 = scalar_lea.vmem %s1, %s772
    %774 = vst [vmem:[%s773] sm:%s771] %v770
    %s775 = scalar_lea.vmem [#allocation2], 512
    %v776 = vld [vmem:[%s775] sm:%s393]
    %s777 = sshllo.u32 0, 2
    %s778 = smul.addr 2, 64
    %s779 = scalar_lea.vmem %s1, %s778
    %780 = vst [vmem:[%s779] sm:%s777] %v776
    %s781 = scalar_lea.vmem [#allocation2], 520
    %v782 = vld [vmem:[%s781] sm:%s393]
    %s783 = sshllo.u32 0, 2
    %s784 = smul.addr 2, 65
    %s785 = scalar_lea.vmem %s1, %s784
    %786 = vst [vmem:[%s785] sm:%s783] %v782
    %s787 = scalar_lea.vmem [#allocation2], 528
    %v788 = vld [vmem:[%s787] sm:%s393]
    %s789 = sshllo.u32 0, 2
    %s790 = smul.addr 2, 66
    %s791 = scalar_lea.vmem %s1, %s790
    %792 = vst [vmem:[%s791] sm:%s789] %v788
    %s793 = scalar_lea.vmem [#allocation2], 536
    %v794 = vld [vmem:[%s793] sm:%s393]
    %s795 = sshllo.u32 0, 2
    %s796 = smul.addr 2, 67
    %s797 = scalar_lea.vmem %s1, %s796
    %798 = vst [vmem:[%s797] sm:%s795] %v794
    %s799 = scalar_lea.vmem [#allocation2], 544
    %v800 = vld [vmem:[%s799] sm:%s393]
    %s801 = sshllo.u32 0, 2
    %s802 = smul.addr 2, 68
    %s803 = scalar_lea.vmem %s1, %s802
    %804 = vst [vmem:[%s803] sm:%s801] %v800
    %s805 = scalar_lea.vmem [#allocation2], 552
    %v806 = vld [vmem:[%s805] sm:%s393]
    %s807 = sshllo.u32 0, 2
    %s808 = smul.addr 2, 69
    %s809 = scalar_lea.vmem %s1, %s808
    %810 = vst [vmem:[%s809] sm:%s807] %v806
    %s811 = scalar_lea.vmem [#allocation2], 560
    %v812 = vld [vmem:[%s811] sm:%s393]
    %s813 = sshllo.u32 0, 2
    %s814 = smul.addr 2, 70
    %s815 = scalar_lea.vmem %s1, %s814
    %816 = vst [vmem:[%s815] sm:%s813] %v812
    %s817 = scalar_lea.vmem [#allocation2], 568
    %v818 = vld [vmem:[%s817] sm:%s393]
    %s819 = sshllo.u32 0, 2
    %s820 = smul.addr 2, 71
    %s821 = scalar_lea.vmem %s1, %s820
    %822 = vst [vmem:[%s821] sm:%s819] %v818
    %s823 = scalar_lea.vmem [#allocation2], 576
    %v824 = vld [vmem:[%s823] sm:%s393]
    %s825 = sshllo.u32 0, 2
    %s826 = smul.addr 2, 72
    %s827 = scalar_lea.vmem %s1, %s826
    %828 = vst [vmem:[%s827] sm:%s825] %v824
    %s829 = scalar_lea.vmem [#allocation2], 584
    %v830 = vld [vmem:[%s829] sm:%s393]
    %s831 = sshllo.u32 0, 2
    %s832 = smul.addr 2, 73
    %s833 = scalar_lea.vmem %s1, %s832
    %834 = vst [vmem:[%s833] sm:%s831] %v830
    %s835 = scalar_lea.vmem [#allocation2], 592
    %v836 = vld [vmem:[%s835] sm:%s393]
    %s837 = sshllo.u32 0, 2
    %s838 = smul.addr 2, 74
    %s839 = scalar_lea.vmem %s1, %s838
    %840 = vst [vmem:[%s839] sm:%s837] %v836
    %s841 = scalar_lea.vmem [#allocation2], 600
    %v842 = vld [vmem:[%s841] sm:%s393]
    %s843 = sshllo.u32 0, 2
    %s844 = smul.addr 2, 75
    %s845 = scalar_lea.vmem %s1, %s844
    %846 = vst [vmem:[%s845] sm:%s843] %v842
    %s847 = scalar_lea.vmem [#allocation2], 608
    %v848 = vld [vmem:[%s847] sm:%s393]
    %s849 = sshllo.u32 0, 2
    %s850 = smul.addr 2, 76
    %s851 = scalar_lea.vmem %s1, %s850
    %852 = vst [vmem:[%s851] sm:%s849] %v848
    %s853 = scalar_lea.vmem [#allocation2], 616
    %v854 = vld [vmem:[%s853] sm:%s393]
    %s855 = sshllo.u32 0, 2
    %s856 = smul.addr 2, 77
    %s857 = scalar_lea.vmem %s1, %s856
    %858 = vst [vmem:[%s857] sm:%s855] %v854
    %s859 = scalar_lea.vmem [#allocation2], 624
    %v860 = vld [vmem:[%s859] sm:%s393]
    %s861 = sshllo.u32 0, 2
    %s862 = smul.addr 2, 78
    %s863 = scalar_lea.vmem %s1, %s862
    %864 = vst [vmem:[%s863] sm:%s861] %v860
    %s865 = scalar_lea.vmem [#allocation2], 632
    %v866 = vld [vmem:[%s865] sm:%s393]
    %s867 = sshllo.u32 0, 2
    %s868 = smul.addr 2, 79
    %s869 = scalar_lea.vmem %s1, %s868
    %870 = vst [vmem:[%s869] sm:%s867] %v866
    %s871 = scalar_lea.vmem [#allocation2], 640
    %v872 = vld [vmem:[%s871] sm:%s393]
    %s873 = sshllo.u32 0, 2
    %s874 = smul.addr 2, 80
    %s875 = scalar_lea.vmem %s1, %s874
    %876 = vst [vmem:[%s875] sm:%s873] %v872
    %s877 = scalar_lea.vmem [#allocation2], 648
    %v878 = vld [vmem:[%s877] sm:%s393]
    %s879 = sshllo.u32 0, 2
    %s880 = smul.addr 2, 81
    %s881 = scalar_lea.vmem %s1, %s880
    %882 = vst [vmem:[%s881] sm:%s879] %v878
    %s883 = scalar_lea.vmem [#allocation2], 656
    %v884 = vld [vmem:[%s883] sm:%s393]
    %s885 = sshllo.u32 0, 2
    %s886 = smul.addr 2, 82
    %s887 = scalar_lea.vmem %s1, %s886
    %888 = vst [vmem:[%s887] sm:%s885] %v884
    %s889 = scalar_lea.vmem [#allocation2], 664
    %v890 = vld [vmem:[%s889] sm:%s393]
    %s891 = sshllo.u32 0, 2
    %s892 = smul.addr 2, 83
    %s893 = scalar_lea.vmem %s1, %s892
    %894 = vst [vmem:[%s893] sm:%s891] %v890
    %s895 = scalar_lea.vmem [#allocation2], 672
    %v896 = vld [vmem:[%s895] sm:%s393]
    %s897 = sshllo.u32 0, 2
    %s898 = smul.addr 2, 84
    %s899 = scalar_lea.vmem %s1, %s898
    %900 = vst [vmem:[%s899] sm:%s897] %v896
    %s901 = scalar_lea.vmem [#allocation2], 680
    %v902 = vld [vmem:[%s901] sm:%s393]
    %s903 = sshllo.u32 0, 2
    %s904 = smul.addr 2, 85
    %s905 = scalar_lea.vmem %s1, %s904
    %906 = vst [vmem:[%s905] sm:%s903] %v902
    %s907 = scalar_lea.vmem [#allocation2], 688
    %v908 = vld [vmem:[%s907] sm:%s393]
    %s909 = sshllo.u32 0, 2
    %s910 = smul.addr 2, 86
    %s911 = scalar_lea.vmem %s1, %s910
    %912 = vst [vmem:[%s911] sm:%s909] %v908
    %s913 = scalar_lea.vmem [#allocation2], 696
    %v914 = vld [vmem:[%s913] sm:%s393]
    %s915 = sshllo.u32 0, 2
    %s916 = smul.addr 2, 87
    %s917 = scalar_lea.vmem %s1, %s916
    %918 = vst [vmem:[%s917] sm:%s915] %v914
    %s919 = scalar_lea.vmem [#allocation2], 704
    %v920 = vld [vmem:[%s919] sm:%s393]
    %s921 = sshllo.u32 0, 2
    %s922 = smul.addr 2, 88
    %s923 = scalar_lea.vmem %s1, %s922
    %924 = vst [vmem:[%s923] sm:%s921] %v920
    %s925 = scalar_lea.vmem [#allocation2], 712
    %v926 = vld [vmem:[%s925] sm:%s393]
    %s927 = sshllo.u32 0, 2
    %s928 = smul.addr 2, 89
    %s929 = scalar_lea.vmem %s1, %s928
    %930 = vst [vmem:[%s929] sm:%s927] %v926
    %s931 = scalar_lea.vmem [#allocation2], 720
    %v932 = vld [vmem:[%s931] sm:%s393]
    %s933 = sshllo.u32 0, 2
    %s934 = smul.addr 2, 90
    %s935 = scalar_lea.vmem %s1, %s934
    %936 = vst [vmem:[%s935] sm:%s933] %v932
    %s937 = scalar_lea.vmem [#allocation2], 728
    %v938 = vld [vmem:[%s937] sm:%s393]
    %s939 = sshllo.u32 0, 2
    %s940 = smul.addr 2, 91
    %s941 = scalar_lea.vmem %s1, %s940
    %942 = vst [vmem:[%s941] sm:%s939] %v938
    %s943 = scalar_lea.vmem [#allocation2], 736
    %v944 = vld [vmem:[%s943] sm:%s393]
    %s945 = sshllo.u32 0, 2
    %s946 = smul.addr 2, 92
    %s947 = scalar_lea.vmem %s1, %s946
    %948 = vst [vmem:[%s947] sm:%s945] %v944
    %s949 = scalar_lea.vmem [#allocation2], 744
    %v950 = vld [vmem:[%s949] sm:%s393]
    %s951 = sshllo.u32 0, 2
    %s952 = smul.addr 2, 93
    %s953 = scalar_lea.vmem %s1, %s952
    %954 = vst [vmem:[%s953] sm:%s951] %v950
    %s955 = scalar_lea.vmem [#allocation2], 752
    %v956 = vld [vmem:[%s955] sm:%s393]
    %s957 = sshllo.u32 0, 2
    %s958 = smul.addr 2, 94
    %s959 = scalar_lea.vmem %s1, %s958
    %960 = vst [vmem:[%s959] sm:%s957] %v956
    %s961 = scalar_lea.vmem [#allocation2], 760
    %v962 = vld [vmem:[%s961] sm:%s393]
    %s963 = sshllo.u32 0, 2
    %s964 = smul.addr 2, 95
    %s965 = scalar_lea.vmem %s1, %s964
    %966 = vst [vmem:[%s965] sm:%s963] %v962
    %s967 = scalar_lea.vmem [#allocation2], 768
    %v968 = vld [vmem:[%s967] sm:%s393]
    %s969 = sshllo.u32 0, 2
    %s970 = smul.addr 2, 96
    %s971 = scalar_lea.vmem %s1, %s970
    %972 = vst [vmem:[%s971] sm:%s969] %v968
    %s973 = scalar_lea.vmem [#allocation2], 776
    %v974 = vld [vmem:[%s973] sm:%s393]
    %s975 = sshllo.u32 0, 2
    %s976 = smul.addr 2, 97
    %s977 = scalar_lea.vmem %s1, %s976
    %978 = vst [vmem:[%s977] sm:%s975] %v974
    %s979 = scalar_lea.vmem [#allocation2], 784
    %v980 = vld [vmem:[%s979] sm:%s393]
    %s981 = sshllo.u32 0, 2
    %s982 = smul.addr 2, 98
    %s983 = scalar_lea.vmem %s1, %s982
    %984 = vst [vmem:[%s983] sm:%s981] %v980
    %s985 = scalar_lea.vmem [#allocation2], 792
    %v986 = vld [vmem:[%s985] sm:%s393]
    %s987 = sshllo.u32 0, 2
    %s988 = smul.addr 2, 99
    %s989 = scalar_lea.vmem %s1, %s988
    %990 = vst [vmem:[%s989] sm:%s987] %v986
    %s991 = scalar_lea.vmem [#allocation2], 800
    %v992 = vld [vmem:[%s991] sm:%s393]
    %s993 = sshllo.u32 0, 2
    %s994 = smul.addr 2, 100
    %s995 = scalar_lea.vmem %s1, %s994
    %996 = vst [vmem:[%s995] sm:%s993] %v992
    %s997 = scalar_lea.vmem [#allocation2], 808
    %v998 = vld [vmem:[%s997] sm:%s393]
    %s999 = sshllo.u32 0, 2
    %s1000 = smul.addr 2, 101
    %s1001 = scalar_lea.vmem %s1, %s1000
    %1002 = vst [vmem:[%s1001] sm:%s999] %v998
    %s1003 = scalar_lea.vmem [#allocation2], 816
    %v1004 = vld [vmem:[%s1003] sm:%s393]
    %s1005 = sshllo.u32 0, 2
    %s1006 = smul.addr 2, 102
    %s1007 = scalar_lea.vmem %s1, %s1006
    %1008 = vst [vmem:[%s1007] sm:%s1005] %v1004
    %s1009 = scalar_lea.vmem [#allocation2], 824
    %v1010 = vld [vmem:[%s1009] sm:%s393]
    %s1011 = sshllo.u32 0, 2
    %s1012 = smul.addr 2, 103
    %s1013 = scalar_lea.vmem %s1, %s1012
    %1014 = vst [vmem:[%s1013] sm:%s1011] %v1010
    %s1015 = scalar_lea.vmem [#allocation2], 832
    %v1016 = vld [vmem:[%s1015] sm:%s393]
    %s1017 = sshllo.u32 0, 2
    %s1018 = smul.addr 2, 104
    %s1019 = scalar_lea.vmem %s1, %s1018
    %1020 = vst [vmem:[%s1019] sm:%s1017] %v1016
    %s1021 = scalar_lea.vmem [#allocation2], 840
    %v1022 = vld [vmem:[%s1021] sm:%s393]
    %s1023 = sshllo.u32 0, 2
    %s1024 = smul.addr 2, 105
    %s1025 = scalar_lea.vmem %s1, %s1024
    %1026 = vst [vmem:[%s1025] sm:%s1023] %v1022
    %s1027 = scalar_lea.vmem [#allocation2], 848
    %v1028 = vld [vmem:[%s1027] sm:%s393]
    %s1029 = sshllo.u32 0, 2
    %s1030 = smul.addr 2, 106
    %s1031 = scalar_lea.vmem %s1, %s1030
    %1032 = vst [vmem:[%s1031] sm:%s1029] %v1028
    %s1033 = scalar_lea.vmem [#allocation2], 856
    %v1034 = vld [vmem:[%s1033] sm:%s393]
    %s1035 = sshllo.u32 0, 2
    %s1036 = smul.addr 2, 107
    %s1037 = scalar_lea.vmem %s1, %s1036
    %1038 = vst [vmem:[%s1037] sm:%s1035] %v1034
    %s1039 = scalar_lea.vmem [#allocation2], 864
    %v1040 = vld [vmem:[%s1039] sm:%s393]
    %s1041 = sshllo.u32 0, 2
    %s1042 = smul.addr 2, 108
    %s1043 = scalar_lea.vmem %s1, %s1042
    %1044 = vst [vmem:[%s1043] sm:%s1041] %v1040
    %s1045 = scalar_lea.vmem [#allocation2], 872
    %v1046 = vld [vmem:[%s1045] sm:%s393]
    %s1047 = sshllo.u32 0, 2
    %s1048 = smul.addr 2, 109
    %s1049 = scalar_lea.vmem %s1, %s1048
    %1050 = vst [vmem:[%s1049] sm:%s1047] %v1046
    %s1051 = scalar_lea.vmem [#allocation2], 880
    %v1052 = vld [vmem:[%s1051] sm:%s393]
    %s1053 = sshllo.u32 0, 2
    %s1054 = smul.addr 2, 110
    %s1055 = scalar_lea.vmem %s1, %s1054
    %1056 = vst [vmem:[%s1055] sm:%s1053] %v1052
    %s1057 = scalar_lea.vmem [#allocation2], 888
    %v1058 = vld [vmem:[%s1057] sm:%s393]
    %s1059 = sshllo.u32 0, 2
    %s1060 = smul.addr 2, 111
    %s1061 = scalar_lea.vmem %s1, %s1060
    %1062 = vst [vmem:[%s1061] sm:%s1059] %v1058
    %s1063 = scalar_lea.vmem [#allocation2], 896
    %v1064 = vld [vmem:[%s1063] sm:%s393]
    %s1065 = sshllo.u32 0, 2
    %s1066 = smul.addr 2, 112
    %s1067 = scalar_lea.vmem %s1, %s1066
    %1068 = vst [vmem:[%s1067] sm:%s1065] %v1064
    %s1069 = scalar_lea.vmem [#allocation2], 904
    %v1070 = vld [vmem:[%s1069] sm:%s393]
    %s1071 = sshllo.u32 0, 2
    %s1072 = smul.addr 2, 113
    %s1073 = scalar_lea.vmem %s1, %s1072
    %1074 = vst [vmem:[%s1073] sm:%s1071] %v1070
    %s1075 = scalar_lea.vmem [#allocation2], 912
    %v1076 = vld [vmem:[%s1075] sm:%s393]
    %s1077 = sshllo.u32 0, 2
    %s1078 = smul.addr 2, 114
    %s1079 = scalar_lea.vmem %s1, %s1078
    %1080 = vst [vmem:[%s1079] sm:%s1077] %v1076
    %s1081 = scalar_lea.vmem [#allocation2], 920
    %v1082 = vld [vmem:[%s1081] sm:%s393]
    %s1083 = sshllo.u32 0, 2
    %s1084 = smul.addr 2, 115
    %s1085 = scalar_lea.vmem %s1, %s1084
    %1086 = vst [vmem:[%s1085] sm:%s1083] %v1082
    %s1087 = scalar_lea.vmem [#allocation2], 928
    %v1088 = vld [vmem:[%s1087] sm:%s393]
    %s1089 = sshllo.u32 0, 2
    %s1090 = smul.addr 2, 116
    %s1091 = scalar_lea.vmem %s1, %s1090
    %1092 = vst [vmem:[%s1091] sm:%s1089] %v1088
    %s1093 = scalar_lea.vmem [#allocation2], 936
    %v1094 = vld [vmem:[%s1093] sm:%s393]
    %s1095 = sshllo.u32 0, 2
    %s1096 = smul.addr 2, 117
    %s1097 = scalar_lea.vmem %s1, %s1096
    %1098 = vst [vmem:[%s1097] sm:%s1095] %v1094
    %s1099 = scalar_lea.vmem [#allocation2], 944
    %v1100 = vld [vmem:[%s1099] sm:%s393]
    %s1101 = sshllo.u32 0, 2
    %s1102 = smul.addr 2, 118
    %s1103 = scalar_lea.vmem %s1, %s1102
    %1104 = vst [vmem:[%s1103] sm:%s1101] %v1100
    %s1105 = scalar_lea.vmem [#allocation2], 952
    %v1106 = vld [vmem:[%s1105] sm:%s393]
    %s1107 = sshllo.u32 0, 2
    %s1108 = smul.addr 2, 119
    %s1109 = scalar_lea.vmem %s1, %s1108
    %1110 = vst [vmem:[%s1109] sm:%s1107] %v1106
    %s1111 = scalar_lea.vmem [#allocation2], 960
    %v1112 = vld [vmem:[%s1111] sm:%s393]
    %s1113 = sshllo.u32 0, 2
    %s1114 = smul.addr 2, 120
    %s1115 = scalar_lea.vmem %s1, %s1114
    %1116 = vst [vmem:[%s1115] sm:%s1113] %v1112
    %s1117 = scalar_lea.vmem [#allocation2], 968
    %v1118 = vld [vmem:[%s1117] sm:%s393]
    %s1119 = sshllo.u32 0, 2
    %s1120 = smul.addr 2, 121
    %s1121 = scalar_lea.vmem %s1, %s1120
    %1122 = vst [vmem:[%s1121] sm:%s1119] %v1118
    %s1123 = scalar_lea.vmem [#allocation2], 976
    %v1124 = vld [vmem:[%s1123] sm:%s393]
    %s1125 = sshllo.u32 0, 2
    %s1126 = smul.addr 2, 122
    %s1127 = scalar_lea.vmem %s1, %s1126
    %1128 = vst [vmem:[%s1127] sm:%s1125] %v1124
    %s1129 = scalar_lea.vmem [#allocation2], 984
    %v1130 = vld [vmem:[%s1129] sm:%s393]
    %s1131 = sshllo.u32 0, 2
    %s1132 = smul.addr 2, 123
    %s1133 = scalar_lea.vmem %s1, %s1132
    %1134 = vst [vmem:[%s1133] sm:%s1131] %v1130
    %s1135 = scalar_lea.vmem [#allocation2], 992
    %v1136 = vld [vmem:[%s1135] sm:%s393]
    %s1137 = sshllo.u32 0, 2
    %s1138 = smul.addr 2, 124
    %s1139 = scalar_lea.vmem %s1, %s1138
    %1140 = vst [vmem:[%s1139] sm:%s1137] %v1136
    %s1141 = scalar_lea.vmem [#allocation2], 1000
    %v1142 = vld [vmem:[%s1141] sm:%s393]
    %s1143 = sshllo.u32 0, 2
    %s1144 = smul.addr 2, 125
    %s1145 = scalar_lea.vmem %s1, %s1144
    %1146 = vst [vmem:[%s1145] sm:%s1143] %v1142
    %s1147 = scalar_lea.vmem [#allocation2], 1008
    %v1148 = vld [vmem:[%s1147] sm:%s393]
    %s1149 = sshllo.u32 0, 2
    %s1150 = smul.addr 2, 126
    %s1151 = scalar_lea.vmem %s1, %s1150
    %1152 = vst [vmem:[%s1151] sm:%s1149] %v1148
    %s1153 = scalar_lea.vmem [#allocation2], 1016
    %v1154 = vld [vmem:[%s1153] sm:%s393]
    %s1155 = sshllo.u32 0, 2
    %s1156 = smul.addr 2, 127
    %s1157 = scalar_lea.vmem %s1, %s1156
    %1158 = vst [vmem:[%s1157] sm:%s1155] %v1154
    %s1159 = scalar_lea.vmem [#allocation2], 1024
    %v1160 = vld [vmem:[%s1159] sm:%s393]
    %s1161 = sshllo.u32 0, 2
    %s1162 = smul.addr 2, 128
    %s1163 = scalar_lea.vmem %s1, %s1162
    %1164 = vst [vmem:[%s1163] sm:%s1161] %v1160
    %s1165 = scalar_lea.vmem [#allocation2], 1032
    %v1166 = vld [vmem:[%s1165] sm:%s393]
    %s1167 = sshllo.u32 0, 2
    %s1168 = smul.addr 2, 129
    %s1169 = scalar_lea.vmem %s1, %s1168
    %1170 = vst [vmem:[%s1169] sm:%s1167] %v1166
    %s1171 = scalar_lea.vmem [#allocation2], 1040
    %v1172 = vld [vmem:[%s1171] sm:%s393]
    %s1173 = sshllo.u32 0, 2
    %s1174 = smul.addr 2, 130
    %s1175 = scalar_lea.vmem %s1, %s1174
    %1176 = vst [vmem:[%s1175] sm:%s1173] %v1172
    %s1177 = scalar_lea.vmem [#allocation2], 1048
    %v1178 = vld [vmem:[%s1177] sm:%s393]
    %s1179 = sshllo.u32 0, 2
    %s1180 = smul.addr 2, 131
    %s1181 = scalar_lea.vmem %s1, %s1180
    %1182 = vst [vmem:[%s1181] sm:%s1179] %v1178
    %s1183 = scalar_lea.vmem [#allocation2], 1056
    %v1184 = vld [vmem:[%s1183] sm:%s393]
    %s1185 = sshllo.u32 0, 2
    %s1186 = smul.addr 2, 132
    %s1187 = scalar_lea.vmem %s1, %s1186
    %1188 = vst [vmem:[%s1187] sm:%s1185] %v1184
    %s1189 = scalar_lea.vmem [#allocation2], 1064
    %v1190 = vld [vmem:[%s1189] sm:%s393]
    %s1191 = sshllo.u32 0, 2
    %s1192 = smul.addr 2, 133
    %s1193 = scalar_lea.vmem %s1, %s1192
    %1194 = vst [vmem:[%s1193] sm:%s1191] %v1190
    %s1195 = scalar_lea.vmem [#allocation2], 1072
    %v1196 = vld [vmem:[%s1195] sm:%s393]
    %s1197 = sshllo.u32 0, 2
    %s1198 = smul.addr 2, 134
    %s1199 = scalar_lea.vmem %s1, %s1198
    %1200 = vst [vmem:[%s1199] sm:%s1197] %v1196
    %s1201 = scalar_lea.vmem [#allocation2], 1080
    %v1202 = vld [vmem:[%s1201] sm:%s393]
    %s1203 = sshllo.u32 0, 2
    %s1204 = smul.addr 2, 135
    %s1205 = scalar_lea.vmem %s1, %s1204
    %1206 = vst [vmem:[%s1205] sm:%s1203] %v1202
    %s1207 = scalar_lea.vmem [#allocation2], 1088
    %v1208 = vld [vmem:[%s1207] sm:%s393]
    %s1209 = sshllo.u32 0, 2
    %s1210 = smul.addr 2, 136
    %s1211 = scalar_lea.vmem %s1, %s1210
    %1212 = vst [vmem:[%s1211] sm:%s1209] %v1208
    %s1213 = scalar_lea.vmem [#allocation2], 1096
    %v1214 = vld [vmem:[%s1213] sm:%s393]
    %s1215 = sshllo.u32 0, 2
    %s1216 = smul.addr 2, 137
    %s1217 = scalar_lea.vmem %s1, %s1216
    %1218 = vst [vmem:[%s1217] sm:%s1215] %v1214
    %s1219 = scalar_lea.vmem [#allocation2], 1104
    %v1220 = vld [vmem:[%s1219] sm:%s393]
    %s1221 = sshllo.u32 0, 2
    %s1222 = smul.addr 2, 138
    %s1223 = scalar_lea.vmem %s1, %s1222
    %1224 = vst [vmem:[%s1223] sm:%s1221] %v1220
    %s1225 = scalar_lea.vmem [#allocation2], 1112
    %v1226 = vld [vmem:[%s1225] sm:%s393]
    %s1227 = sshllo.u32 0, 2
    %s1228 = smul.addr 2, 139
    %s1229 = scalar_lea.vmem %s1, %s1228
    %1230 = vst [vmem:[%s1229] sm:%s1227] %v1226
    %s1231 = scalar_lea.vmem [#allocation2], 1120
    %v1232 = vld [vmem:[%s1231] sm:%s393]
    %s1233 = sshllo.u32 0, 2
    %s1234 = smul.addr 2, 140
    %s1235 = scalar_lea.vmem %s1, %s1234
    %1236 = vst [vmem:[%s1235] sm:%s1233] %v1232
    %s1237 = scalar_lea.vmem [#allocation2], 1128
    %v1238 = vld [vmem:[%s1237] sm:%s393]
    %s1239 = sshllo.u32 0, 2
    %s1240 = smul.addr 2, 141
    %s1241 = scalar_lea.vmem %s1, %s1240
    %1242 = vst [vmem:[%s1241] sm:%s1239] %v1238
    %s1243 = scalar_lea.vmem [#allocation2], 1136
    %v1244 = vld [vmem:[%s1243] sm:%s393]
    %s1245 = sshllo.u32 0, 2
    %s1246 = smul.addr 2, 142
    %s1247 = scalar_lea.vmem %s1, %s1246
    %1248 = vst [vmem:[%s1247] sm:%s1245] %v1244
    %s1249 = scalar_lea.vmem [#allocation2], 1144
    %v1250 = vld [vmem:[%s1249] sm:%s393]
    %s1251 = sshllo.u32 0, 2
    %s1252 = smul.addr 2, 143
    %s1253 = scalar_lea.vmem %s1, %s1252
    %1254 = vst [vmem:[%s1253] sm:%s1251] %v1250
    %s1255 = scalar_lea.vmem [#allocation2], 1152
    %v1256 = vld [vmem:[%s1255] sm:%s393]
    %s1257 = sshllo.u32 0, 2
    %s1258 = smul.addr 2, 144
    %s1259 = scalar_lea.vmem %s1, %s1258
    %1260 = vst [vmem:[%s1259] sm:%s1257] %v1256
    %s1261 = scalar_lea.vmem [#allocation2], 1160
    %v1262 = vld [vmem:[%s1261] sm:%s393]
    %s1263 = sshllo.u32 0, 2
    %s1264 = smul.addr 2, 145
    %s1265 = scalar_lea.vmem %s1, %s1264
    %1266 = vst [vmem:[%s1265] sm:%s1263] %v1262
    %s1267 = scalar_lea.vmem [#allocation2], 1168
    %v1268 = vld [vmem:[%s1267] sm:%s393]
    %s1269 = sshllo.u32 0, 2
    %s1270 = smul.addr 2, 146
    %s1271 = scalar_lea.vmem %s1, %s1270
    %1272 = vst [vmem:[%s1271] sm:%s1269] %v1268
    %s1273 = scalar_lea.vmem [#allocation2], 1176
    %v1274 = vld [vmem:[%s1273] sm:%s393]
    %s1275 = sshllo.u32 0, 2
    %s1276 = smul.addr 2, 147
    %s1277 = scalar_lea.vmem %s1, %s1276
    %1278 = vst [vmem:[%s1277] sm:%s1275] %v1274
    %s1279 = scalar_lea.vmem [#allocation2], 1184
    %v1280 = vld [vmem:[%s1279] sm:%s393]
    %s1281 = sshllo.u32 0, 2
    %s1282 = smul.addr 2, 148
    %s1283 = scalar_lea.vmem %s1, %s1282
    %1284 = vst [vmem:[%s1283] sm:%s1281] %v1280
    %s1285 = scalar_lea.vmem [#allocation2], 1192
    %v1286 = vld [vmem:[%s1285] sm:%s393]
    %s1287 = sshllo.u32 0, 2
    %s1288 = smul.addr 2, 149
    %s1289 = scalar_lea.vmem %s1, %s1288
    %1290 = vst [vmem:[%s1289] sm:%s1287] %v1286
    %s1291 = scalar_lea.vmem [#allocation2], 1200
    %v1292 = vld [vmem:[%s1291] sm:%s393]
    %s1293 = sshllo.u32 0, 2
    %s1294 = smul.addr 2, 150
    %s1295 = scalar_lea.vmem %s1, %s1294
    %1296 = vst [vmem:[%s1295] sm:%s1293] %v1292
    %s1297 = scalar_lea.vmem [#allocation2], 1208
    %v1298 = vld [vmem:[%s1297] sm:%s393]
    %s1299 = sshllo.u32 0, 2
    %s1300 = smul.addr 2, 151
    %s1301 = scalar_lea.vmem %s1, %s1300
    %1302 = vst [vmem:[%s1301] sm:%s1299] %v1298
    %s1303 = scalar_lea.vmem [#allocation2], 1216
    %v1304 = vld [vmem:[%s1303] sm:%s393]
    %s1305 = sshllo.u32 0, 2
    %s1306 = smul.addr 2, 152
    %s1307 = scalar_lea.vmem %s1, %s1306
    %1308 = vst [vmem:[%s1307] sm:%s1305] %v1304
    %s1309 = scalar_lea.vmem [#allocation2], 1224
    %v1310 = vld [vmem:[%s1309] sm:%s393]
    %s1311 = sshllo.u32 0, 2
    %s1312 = smul.addr 2, 153
    %s1313 = scalar_lea.vmem %s1, %s1312
    %1314 = vst [vmem:[%s1313] sm:%s1311] %v1310
    %s1315 = scalar_lea.vmem [#allocation2], 1232
    %v1316 = vld [vmem:[%s1315] sm:%s393]
    %s1317 = sshllo.u32 0, 2
    %s1318 = smul.addr 2, 154
    %s1319 = scalar_lea.vmem %s1, %s1318
    %1320 = vst [vmem:[%s1319] sm:%s1317] %v1316
    %s1321 = scalar_lea.vmem [#allocation2], 1240
    %v1322 = vld [vmem:[%s1321] sm:%s393]
    %s1323 = sshllo.u32 0, 2
    %s1324 = smul.addr 2, 155
    %s1325 = scalar_lea.vmem %s1, %s1324
    %1326 = vst [vmem:[%s1325] sm:%s1323] %v1322
    %s1327 = scalar_lea.vmem [#allocation2], 1248
    %v1328 = vld [vmem:[%s1327] sm:%s393]
    %s1329 = sshllo.u32 0, 2
    %s1330 = smul.addr 2, 156
    %s1331 = scalar_lea.vmem %s1, %s1330
    %1332 = vst [vmem:[%s1331] sm:%s1329] %v1328
    %s1333 = scalar_lea.vmem [#allocation2], 1256
    %v1334 = vld [vmem:[%s1333] sm:%s393]
    %s1335 = sshllo.u32 0, 2
    %s1336 = smul.addr 2, 157
    %s1337 = scalar_lea.vmem %s1, %s1336
    %1338 = vst [vmem:[%s1337] sm:%s1335] %v1334
    %s1339 = scalar_lea.vmem [#allocation2], 1264
    %v1340 = vld [vmem:[%s1339] sm:%s393]
    %s1341 = sshllo.u32 0, 2
    %s1342 = smul.addr 2, 158
    %s1343 = scalar_lea.vmem %s1, %s1342
    %1344 = vst [vmem:[%s1343] sm:%s1341] %v1340
    %s1345 = scalar_lea.vmem [#allocation2], 1272
    %v1346 = vld [vmem:[%s1345] sm:%s393]
    %s1347 = sshllo.u32 0, 2
    %s1348 = smul.addr 2, 159
    %s1349 = scalar_lea.vmem %s1, %s1348
    %1350 = vst [vmem:[%s1349] sm:%s1347] %v1346
    %s1351 = scalar_lea.vmem [#allocation2], 1280
    %v1352 = vld [vmem:[%s1351] sm:%s393]
    %s1353 = sshllo.u32 0, 2
    %s1354 = smul.addr 2, 160
    %s1355 = scalar_lea.vmem %s1, %s1354
    %1356 = vst [vmem:[%s1355] sm:%s1353] %v1352
    %s1357 = scalar_lea.vmem [#allocation2], 1288
    %v1358 = vld [vmem:[%s1357] sm:%s393]
    %s1359 = sshllo.u32 0, 2
    %s1360 = smul.addr 2, 161
    %s1361 = scalar_lea.vmem %s1, %s1360
    %1362 = vst [vmem:[%s1361] sm:%s1359] %v1358
    %s1363 = scalar_lea.vmem [#allocation2], 1296
    %v1364 = vld [vmem:[%s1363] sm:%s393]
    %s1365 = sshllo.u32 0, 2
    %s1366 = smul.addr 2, 162
    %s1367 = scalar_lea.vmem %s1, %s1366
    %1368 = vst [vmem:[%s1367] sm:%s1365] %v1364
    %s1369 = scalar_lea.vmem [#allocation2], 1304
    %v1370 = vld [vmem:[%s1369] sm:%s393]
    %s1371 = sshllo.u32 0, 2
    %s1372 = smul.addr 2, 163
    %s1373 = scalar_lea.vmem %s1, %s1372
    %1374 = vst [vmem:[%s1373] sm:%s1371] %v1370
    %s1375 = scalar_lea.vmem [#allocation2], 1312
    %v1376 = vld [vmem:[%s1375] sm:%s393]
    %s1377 = sshllo.u32 0, 2
    %s1378 = smul.addr 2, 164
    %s1379 = scalar_lea.vmem %s1, %s1378
    %1380 = vst [vmem:[%s1379] sm:%s1377] %v1376
    %s1381 = scalar_lea.vmem [#allocation2], 1320
    %v1382 = vld [vmem:[%s1381] sm:%s393]
    %s1383 = sshllo.u32 0, 2
    %s1384 = smul.addr 2, 165
    %s1385 = scalar_lea.vmem %s1, %s1384
    %1386 = vst [vmem:[%s1385] sm:%s1383] %v1382
    %s1387 = scalar_lea.vmem [#allocation2], 1328
    %v1388 = vld [vmem:[%s1387] sm:%s393]
    %s1389 = sshllo.u32 0, 2
    %s1390 = smul.addr 2, 166
    %s1391 = scalar_lea.vmem %s1, %s1390
    %1392 = vst [vmem:[%s1391] sm:%s1389] %v1388
    %s1393 = scalar_lea.vmem [#allocation2], 1336
    %v1394 = vld [vmem:[%s1393] sm:%s393]
    %s1395 = sshllo.u32 0, 2
    %s1396 = smul.addr 2, 167
    %s1397 = scalar_lea.vmem %s1, %s1396
    %1398 = vst [vmem:[%s1397] sm:%s1395] %v1394
    %s1399 = scalar_lea.vmem [#allocation2], 1344
    %v1400 = vld [vmem:[%s1399] sm:%s393]
    %s1401 = sshllo.u32 0, 2
    %s1402 = smul.addr 2, 168
    %s1403 = scalar_lea.vmem %s1, %s1402
    %1404 = vst [vmem:[%s1403] sm:%s1401] %v1400
    %s1405 = scalar_lea.vmem [#allocation2], 1352
    %v1406 = vld [vmem:[%s1405] sm:%s393]
    %s1407 = sshllo.u32 0, 2
    %s1408 = smul.addr 2, 169
    %s1409 = scalar_lea.vmem %s1, %s1408
    %1410 = vst [vmem:[%s1409] sm:%s1407] %v1406
    %s1411 = scalar_lea.vmem [#allocation2], 1360
    %v1412 = vld [vmem:[%s1411] sm:%s393]
    %s1413 = sshllo.u32 0, 2
    %s1414 = smul.addr 2, 170
    %s1415 = scalar_lea.vmem %s1, %s1414
    %1416 = vst [vmem:[%s1415] sm:%s1413] %v1412
    %s1417 = scalar_lea.vmem [#allocation2], 1368
    %v1418 = vld [vmem:[%s1417] sm:%s393]
    %s1419 = sshllo.u32 0, 2
    %s1420 = smul.addr 2, 171
    %s1421 = scalar_lea.vmem %s1, %s1420
    %1422 = vst [vmem:[%s1421] sm:%s1419] %v1418
    %s1423 = scalar_lea.vmem [#allocation2], 1376
    %v1424 = vld [vmem:[%s1423] sm:%s393]
    %s1425 = sshllo.u32 0, 2
    %s1426 = smul.addr 2, 172
    %s1427 = scalar_lea.vmem %s1, %s1426
    %1428 = vst [vmem:[%s1427] sm:%s1425] %v1424
    %s1429 = scalar_lea.vmem [#allocation2], 1384
    %v1430 = vld [vmem:[%s1429] sm:%s393]
    %s1431 = sshllo.u32 0, 2
    %s1432 = smul.addr 2, 173
    %s1433 = scalar_lea.vmem %s1, %s1432
    %1434 = vst [vmem:[%s1433] sm:%s1431] %v1430
    %s1435 = scalar_lea.vmem [#allocation2], 1392
    %v1436 = vld [vmem:[%s1435] sm:%s393]
    %s1437 = sshllo.u32 0, 2
    %s1438 = smul.addr 2, 174
    %s1439 = scalar_lea.vmem %s1, %s1438
    %1440 = vst [vmem:[%s1439] sm:%s1437] %v1436
    %s1441 = scalar_lea.vmem [#allocation2], 1400
    %v1442 = vld [vmem:[%s1441] sm:%s393]
    %s1443 = sshllo.u32 0, 2
    %s1444 = smul.addr 2, 175
    %s1445 = scalar_lea.vmem %s1, %s1444
    %1446 = vst [vmem:[%s1445] sm:%s1443] %v1442
    %s1447 = scalar_lea.vmem [#allocation2], 1408
    %v1448 = vld [vmem:[%s1447] sm:%s393]
    %s1449 = sshllo.u32 0, 2
    %s1450 = smul.addr 2, 176
    %s1451 = scalar_lea.vmem %s1, %s1450
    %1452 = vst [vmem:[%s1451] sm:%s1449] %v1448
    %s1453 = scalar_lea.vmem [#allocation2], 1416
    %v1454 = vld [vmem:[%s1453] sm:%s393]
    %s1455 = sshllo.u32 0, 2
    %s1456 = smul.addr 2, 177
    %s1457 = scalar_lea.vmem %s1, %s1456
    %1458 = vst [vmem:[%s1457] sm:%s1455] %v1454
    %s1459 = scalar_lea.vmem [#allocation2], 1424
    %v1460 = vld [vmem:[%s1459] sm:%s393]
    %s1461 = sshllo.u32 0, 2
    %s1462 = smul.addr 2, 178
    %s1463 = scalar_lea.vmem %s1, %s1462
    %1464 = vst [vmem:[%s1463] sm:%s1461] %v1460
    %s1465 = scalar_lea.vmem [#allocation2], 1432
    %v1466 = vld [vmem:[%s1465] sm:%s393]
    %s1467 = sshllo.u32 0, 2
    %s1468 = smul.addr 2, 179
    %s1469 = scalar_lea.vmem %s1, %s1468
    %1470 = vst [vmem:[%s1469] sm:%s1467] %v1466
    %s1471 = scalar_lea.vmem [#allocation2], 1440
    %v1472 = vld [vmem:[%s1471] sm:%s393]
    %s1473 = sshllo.u32 0, 2
    %s1474 = smul.addr 2, 180
    %s1475 = scalar_lea.vmem %s1, %s1474
    %1476 = vst [vmem:[%s1475] sm:%s1473] %v1472
    %s1477 = scalar_lea.vmem [#allocation2], 1448
    %v1478 = vld [vmem:[%s1477] sm:%s393]
    %s1479 = sshllo.u32 0, 2
    %s1480 = smul.addr 2, 181
    %s1481 = scalar_lea.vmem %s1, %s1480
    %1482 = vst [vmem:[%s1481] sm:%s1479] %v1478
    %s1483 = scalar_lea.vmem [#allocation2], 1456
    %v1484 = vld [vmem:[%s1483] sm:%s393]
    %s1485 = sshllo.u32 0, 2
    %s1486 = smul.addr 2, 182
    %s1487 = scalar_lea.vmem %s1, %s1486
    %1488 = vst [vmem:[%s1487] sm:%s1485] %v1484
    %s1489 = scalar_lea.vmem [#allocation2], 1464
    %v1490 = vld [vmem:[%s1489] sm:%s393]
    %s1491 = sshllo.u32 0, 2
    %s1492 = smul.addr 2, 183
    %s1493 = scalar_lea.vmem %s1, %s1492
    %1494 = vst [vmem:[%s1493] sm:%s1491] %v1490
    %s1495 = scalar_lea.vmem [#allocation2], 1472
    %v1496 = vld [vmem:[%s1495] sm:%s393]
    %s1497 = sshllo.u32 0, 2
    %s1498 = smul.addr 2, 184
    %s1499 = scalar_lea.vmem %s1, %s1498
    %1500 = vst [vmem:[%s1499] sm:%s1497] %v1496
    %s1501 = scalar_lea.vmem [#allocation2], 1480
    %v1502 = vld [vmem:[%s1501] sm:%s393]
    %s1503 = sshllo.u32 0, 2
    %s1504 = smul.addr 2, 185
    %s1505 = scalar_lea.vmem %s1, %s1504
    %1506 = vst [vmem:[%s1505] sm:%s1503] %v1502
    %s1507 = scalar_lea.vmem [#allocation2], 1488
    %v1508 = vld [vmem:[%s1507] sm:%s393]
    %s1509 = sshllo.u32 0, 2
    %s1510 = smul.addr 2, 186
    %s1511 = scalar_lea.vmem %s1, %s1510
    %1512 = vst [vmem:[%s1511] sm:%s1509] %v1508
    %s1513 = scalar_lea.vmem [#allocation2], 1496
    %v1514 = vld [vmem:[%s1513] sm:%s393]
    %s1515 = sshllo.u32 0, 2
    %s1516 = smul.addr 2, 187
    %s1517 = scalar_lea.vmem %s1, %s1516
    %1518 = vst [vmem:[%s1517] sm:%s1515] %v1514
    %s1519 = scalar_lea.vmem [#allocation2], 1504
    %v1520 = vld [vmem:[%s1519] sm:%s393]
    %s1521 = sshllo.u32 0, 2
    %s1522 = smul.addr 2, 188
    %s1523 = scalar_lea.vmem %s1, %s1522
    %1524 = vst [vmem:[%s1523] sm:%s1521] %v1520
    %s1525 = scalar_lea.vmem [#allocation2], 1512
    %v1526 = vld [vmem:[%s1525] sm:%s393]
    %s1527 = sshllo.u32 0, 2
    %s1528 = smul.addr 2, 189
    %s1529 = scalar_lea.vmem %s1, %s1528
    %1530 = vst [vmem:[%s1529] sm:%s1527] %v1526
    %s1531 = scalar_lea.vmem [#allocation2], 1520
    %v1532 = vld [vmem:[%s1531] sm:%s393]
    %s1533 = sshllo.u32 0, 2
    %s1534 = smul.addr 2, 190
    %s1535 = scalar_lea.vmem %s1, %s1534
    %1536 = vst [vmem:[%s1535] sm:%s1533] %v1532
    %s1537 = scalar_lea.vmem [#allocation2], 1528
    %v1538 = vld [vmem:[%s1537] sm:%s393]
    %s1539 = sshllo.u32 0, 2
    %s1540 = smul.addr 2, 191
    %s1541 = scalar_lea.vmem %s1, %s1540
    %1542 = vst [vmem:[%s1541] sm:%s1539] %v1538
    %1543 = vsyncpa [#allocation1], 1

// kernel: _lambda_.1
$region0: #{_lambda_.1}
  #allocation0 [shape = 'u32[]', space=smem, size = 0x4, offset = 0x4, fixed_abs, tag = 'smem constant byte address 0x4 - core index']
  #allocation1 [shape = 'u32[144,128]{1,0:T(1,128)}', space=vmem, size = 0x12000, scoped, tag = 'internal scratch']
  %s0 = inlined_call_operand.vmem [shape: f32[16,768], index: 0, kind: input, shape index: {}]
  %s1 = inlined_call_operand.vmem [shape: f32[16,32], index: 1, kind: input, shape index: {}]
  %s2 = inlined_call_operand.vmem [shape: f32[16,16], index: 2, kind: input, shape index: {}]
  %s3 = inlined_call_operand.vmem [shape: f32[2,16], index: 3, kind: input, shape index: {}]
  %s4 = inlined_call_operand.vmem [shape: bf16[768,32], index: 4, kind: input, shape index: {}]
  %s5 = inlined_call_operand.vmem [shape: f32[2,1,32], index: 5, kind: input, shape index: {}]
  %s6 = inlined_call_operand.vmem [shape: f32[2,1,32], index: 6, kind: input, shape index: {}]
  %s7 = inlined_call_operand.vmem [shape: bf16[2,32,96], index: 7, kind: input, shape index: {}]
  %s8 = inlined_call_operand.vmem [shape: f32[2,1,96], index: 8, kind: input, shape index: {}]
  %s9 = inlined_call_operand.vmem [shape: bf16[2,2,16,32], index: 9, kind: input, shape index: {}]
  %s10 = inlined_call_operand.vmem [shape: f32[2,1,32], index: 10, kind: input, shape index: {}]
  %s11 = inlined_call_operand.vmem [shape: f32[2,1,32], index: 11, kind: input, shape index: {}]
  %s12 = inlined_call_operand.vmem [shape: f32[2,1,32], index: 12, kind: input, shape index: {}]
  %s13 = inlined_call_operand.vmem [shape: bf16[2,32,128], index: 13, kind: input, shape index: {}]
  %s14 = inlined_call_operand.vmem [shape: f32[2,1,128], index: 14, kind: input, shape index: {}]
  %s15 = inlined_call_operand.vmem [shape: bf16[2,128,32], index: 15, kind: input, shape index: {}]
  %s16 = inlined_call_operand.vmem [shape: f32[2,1,32], index: 16, kind: input, shape index: {}]
  %s17 = inlined_call_operand.vmem [shape: f32[1,32], index: 17, kind: input, shape index: {}]
  %s18 = inlined_call_operand.vmem [shape: f32[1,32], index: 18, kind: input, shape index: {}]
  %s19 = inlined_call_operand.vmem [shape: f32[32,2], index: 19, kind: input, shape index: {}]
  %s20 = inlined_call_operand.vmem [shape: f32[1,2], index: 20, kind: input, shape index: {}]
  %s21 = inlined_call_operand.hbm [shape: f32[1,2], index: 21, kind: output, shape index: {}]
  %s22 = sld [smem:[#allocation0]]
  $region94: #{_lambda_.1} parent=0
    _
  %s24 = ssub.s32 1, %s22
  %s25 = scalar_select 0, %s24, %s22
  $region1: #{_lambda_.1} parent=0
    #allocation2 [shape = 'u8[512]{0}', space=vmem, size = 0x400, scoped, tag = 'output window, operand 0, single buffered']
    #allocation3 [shape = 's32[1]{0}', space=sflag, size = 0x4, scoped, tag = 'scoped memory for _lambda_.1']
    %26 = vsyncpa [#allocation3], 0
    // Predicated region
    $region2: #{_lambda_.1} parent=1 // pred_check
      _
    $region3: #{_lambda_.1} parent=1 // pred_check_branch
      %28 = sbr.rel (0) target = $region5
    $region4: #{_lambda_.1} parent=1 // pred_region
      _
    $region5: #{_lambda_.1} parent=1 // pred_fallthru
      _
    // Predicated region
    $region6: #{_lambda_.1} parent=1 // pred_check
      _
    $region7: #{_lambda_.1} parent=1 // pred_check_branch
      %30 = sbr.rel (0) target = $region9
    $region8: #{_lambda_.1} parent=1 // pred_region
      _
    $region9: #{_lambda_.1} parent=1 // pred_fallthru
      _
    // Predicated region
    $region10: #{_lambda_.1} parent=1 // pred_check
      _
    $region11: #{_lambda_.1} parent=1 // pred_check_branch
      %32 = sbr.rel (0) target = $region13
    $region12: #{_lambda_.1} parent=1 // pred_region
      _
    $region13: #{_lambda_.1} parent=1 // pred_fallthru
      _
    // Predicated region
    $region14: #{_lambda_.1} parent=1 // pred_check
      _
    $region15: #{_lambda_.1} parent=1 // pred_check_branch
      %34 = sbr.rel (0) target = $region17
    $region16: #{_lambda_.1} parent=1 // pred_region
      _
    $region17: #{_lambda_.1} parent=1 // pred_fallthru
      _
    // Predicated region
    $region18: #{_lambda_.1} parent=1 // pred_check
      _
    $region19: #{_lambda_.1} parent=1 // pred_check_branch
      %36 = sbr.rel (0) target = $region21
    $region20: #{_lambda_.1} parent=1 // pred_region
      _
    $region21: #{_lambda_.1} parent=1 // pred_fallthru
      _
    // Predicated region
    $region22: #{_lambda_.1} parent=1 // pred_check
      _
    $region23: #{_lambda_.1} parent=1 // pred_check_branch
      %38 = sbr.rel (0) target = $region25
    $region24: #{_lambda_.1} parent=1 // pred_region
      _
    $region25: #{_lambda_.1} parent=1 // pred_fallthru
      _
    // Predicated region
    $region26: #{_lambda_.1} parent=1 // pred_check
      _
    $region27: #{_lambda_.1} parent=1 // pred_check_branch
      %40 = sbr.rel (0) target = $region29
    $region28: #{_lambda_.1} parent=1 // pred_region
      _
    $region29: #{_lambda_.1} parent=1 // pred_fallthru
      _
    // Predicated region
    $region30: #{_lambda_.1} parent=1 // pred_check
      _
    $region31: #{_lambda_.1} parent=1 // pred_check_branch
      %42 = sbr.rel (0) target = $region33
    $region32: #{_lambda_.1} parent=1 // pred_region
      _
    $region33: #{_lambda_.1} parent=1 // pred_fallthru
      _
    // Predicated region
    $region34: #{_lambda_.1} parent=1 // pred_check
      _
    $region35: #{_lambda_.1} parent=1 // pred_check_branch
      %44 = sbr.rel (0) target = $region37
    $region36: #{_lambda_.1} parent=1 // pred_region
      _
    $region37: #{_lambda_.1} parent=1 // pred_fallthru
      _
    // Predicated region
    $region38: #{_lambda_.1} parent=1 // pred_check
      _
    $region39: #{_lambda_.1} parent=1 // pred_check_branch
      %46 = sbr.rel (0) target = $region41
    $region40: #{_lambda_.1} parent=1 // pred_region
      _
    $region41: #{_lambda_.1} parent=1 // pred_fallthru
      _
    // Predicated region
    $region42: #{_lambda_.1} parent=1 // pred_check
      _
    $region43: #{_lambda_.1} parent=1 // pred_check_branch
      %48 = sbr.rel (0) target = $region45
    $region44: #{_lambda_.1} parent=1 // pred_region
      _
    $region45: #{_lambda_.1} parent=1 // pred_fallthru
      _
    // Predicated region
    $region46: #{_lambda_.1} parent=1 // pred_check
      _
    $region47: #{_lambda_.1} parent=1 // pred_check_branch
      %50 = sbr.rel (0) target = $region49
    $region48: #{_lambda_.1} parent=1 // pred_region
      _
    $region49: #{_lambda_.1} parent=1 // pred_fallthru
      _
    // Predicated region
    $region50: #{_lambda_.1} parent=1 // pred_check
      _
    $region51: #{_lambda_.1} parent=1 // pred_check_branch
      %52 = sbr.rel (0) target = $region53
    $region52: #{_lambda_.1} parent=1 // pred_region
      _
    $region53: #{_lambda_.1} parent=1 // pred_fallthru
      _
    // Predicated region
    $region54: #{_lambda_.1} parent=1 // pred_check
      _
    $region55: #{_lambda_.1} parent=1 // pred_check_branch
      %54 = sbr.rel (0) target = $region57
    $region56: #{_lambda_.1} parent=1 // pred_region
      _
    $region57: #{_lambda_.1} parent=1 // pred_fallthru
      _
    // Predicated region
    $region58: #{_lambda_.1} parent=1 // pred_check
      _
    $region59: #{_lambda_.1} parent=1 // pred_check_branch
      %56 = sbr.rel (0) target = $region61
    $region60: #{_lambda_.1} parent=1 // pred_region
      _
    $region61: #{_lambda_.1} parent=1 // pred_fallthru
      _
    // Predicated region
    $region62: #{_lambda_.1} parent=1 // pred_check
      _
    $region63: #{_lambda_.1} parent=1 // pred_check_branch
      %58 = sbr.rel (0) target = $region65
    $region64: #{_lambda_.1} parent=1 // pred_region
      _
    $region65: #{_lambda_.1} parent=1 // pred_fallthru
      _
    // Predicated region
    $region66: #{_lambda_.1} parent=1 // pred_check
      _
    $region67: #{_lambda_.1} parent=1 // pred_check_branch
      %60 = sbr.rel (0) target = $region69
    $region68: #{_lambda_.1} parent=1 // pred_region
      _
    $region69: #{_lambda_.1} parent=1 // pred_fallthru
      _
    // Predicated region
    $region70: #{_lambda_.1} parent=1 // pred_check
      _
    $region71: #{_lambda_.1} parent=1 // pred_check_branch
      %62 = sbr.rel (0) target = $region73
    $region72: #{_lambda_.1} parent=1 // pred_region
      _
    $region73: #{_lambda_.1} parent=1 // pred_fallthru
      _
    // Predicated region
    $region74: #{_lambda_.1} parent=1 // pred_check
      _
    $region75: #{_lambda_.1} parent=1 // pred_check_branch
      %64 = sbr.rel (0) target = $region77
    $region76: #{_lambda_.1} parent=1 // pred_region
      _
    $region77: #{_lambda_.1} parent=1 // pred_fallthru
      _
    // Predicated region
    $region78: #{_lambda_.1} parent=1 // pred_check
      _
    $region79: #{_lambda_.1} parent=1 // pred_check_branch
      %66 = sbr.rel (0) target = $region81
    $region80: #{_lambda_.1} parent=1 // pred_region
      _
    $region81: #{_lambda_.1} parent=1 // pred_fallthru
      _
    // Predicated region
    $region82: #{_lambda_.1} parent=1 // pred_check
      _
    $region83: #{_lambda_.1} parent=1 // pred_check_branch
      %68 = sbr.rel (0) target = $region85
    $region84: #{_lambda_.1} parent=1 // pred_region
      _
    $region85: #{_lambda_.1} parent=1 // pred_fallthru
      _
    %v70 = vld [vmem:[%s0] sm:$0xff]
    %v71 = vld [vmem:[%s0 + $0x8] sm:$0xff]
    %v72 = vld [vmem:[%s0 + $0x10] sm:$0xff]
    %v73 = vld [vmem:[%s0 + $0x18] sm:$0xff]
    %v74 = vld [vmem:[%s0 + $0x20] sm:$0xff]
    %v75 = vld [vmem:[%s0 + $0x28] sm:$0xff]
    %v76 = vld [vmem:[%s0 + $0x30] sm:$0xff]
    %v77 = vld [vmem:[%s0 + $0x38] sm:$0xff]
    %v78 = vld [vmem:[%s0 + $0x40] sm:$0xff]
    %v79 = vld [vmem:[%s0 + $0x48] sm:$0xff]
    %v80 = vld [vmem:[%s0 + $0x50] sm:$0xff]
    %v81 = vld [vmem:[%s0 + $0x58] sm:$0xff]
    %v82 = vpack.c.bf16 %v76, %v70
    %v83 = vpack.c.bf16 %v77, %v71
    %v84 = vpack.c.bf16 %v78, %v72
    %v85 = vpack.c.bf16 %v79, %v73
    %v86 = vpack.c.bf16 %v80, %v74
    %v87 = vpack.c.bf16 %v81, %v75
    %v88 = vld [vmem:[%s4] sm:$0xf]
    %v89 = vld [vmem:[%s4 + $0x4] sm:$0xf]
    %v90 = vld [vmem:[%s4 + $0x8] sm:$0xf]
    %v91 = vld [vmem:[%s4 + $0xc] sm:$0xf]
    %v92 = vld [vmem:[%s4 + $0x10] sm:$0xf]
    %v93 = vld [vmem:[%s4 + $0x14] sm:$0xf]
    %v94 = vld [vmem:[%s4 + $0x18] sm:$0xf]
    %v95 = vld [vmem:[%s4 + $0x1c] sm:$0xf]
    %v96 = vld [vmem:[%s4 + $0x20] sm:$0xf]
    %v97 = vld [vmem:[%s4 + $0x24] sm:$0xf]
    %v98 = vld [vmem:[%s4 + $0x28] sm:$0xf]
    %v99 = vld [vmem:[%s4 + $0x2c] sm:$0xf]
    %v100 = vld [vmem:[%s4 + $0x30] sm:$0xf]
    %v101 = vld [vmem:[%s4 + $0x34] sm:$0xf]
    %v102 = vld [vmem:[%s4 + $0x38] sm:$0xf]
    %v103 = vld [vmem:[%s4 + $0x3c] sm:$0xf]
    %v104 = vld [vmem:[%s4 + $0x40] sm:$0xf]
    %v105 = vld [vmem:[%s4 + $0x44] sm:$0xf]
    %v106 = vld [vmem:[%s4 + $0x48] sm:$0xf]
    %v107 = vld [vmem:[%s4 + $0x4c] sm:$0xf]
    %v108 = vld [vmem:[%s4 + $0x50] sm:$0xf]
    %v109 = vld [vmem:[%s4 + $0x54] sm:$0xf]
    %v110 = vld [vmem:[%s4 + $0x58] sm:$0xf]
    %v111 = vld [vmem:[%s4 + $0x5c] sm:$0xf]
    %v112 = vld [vmem:[%s4 + $0x60] sm:$0xf]
    %v113 = vld [vmem:[%s4 + $0x64] sm:$0xf]
    %v114 = vld [vmem:[%s4 + $0x68] sm:$0xf]
    %v115 = vld [vmem:[%s4 + $0x6c] sm:$0xf]
    %v116 = vld [vmem:[%s4 + $0x70] sm:$0xf]
    %v117 = vld [vmem:[%s4 + $0x74] sm:$0xf]
    %v118 = vld [vmem:[%s4 + $0x78] sm:$0xf]
    %v119 = vld [vmem:[%s4 + $0x7c] sm:$0xf]
    %v120 = vld [vmem:[%s4 + $0x80] sm:$0xf]
    %v121 = vld [vmem:[%s4 + $0x84] sm:$0xf]
    %v122 = vld [vmem:[%s4 + $0x88] sm:$0xf]
    %v123 = vld [vmem:[%s4 + $0x8c] sm:$0xf]
    %v124 = vld [vmem:[%s4 + $0x90] sm:$0xf]
    %v125 = vld [vmem:[%s4 + $0x94] sm:$0xf]
    %v126 = vld [vmem:[%s4 + $0x98] sm:$0xf]
    %v127 = vld [vmem:[%s4 + $0x9c] sm:$0xf]
    %v128 = vld [vmem:[%s4 + $0xa0] sm:$0xf]
    %v129 = vld [vmem:[%s4 + $0xa4] sm:$0xf]
    %v130 = vld [vmem:[%s4 + $0xa8] sm:$0xf]
    %v131 = vld [vmem:[%s4 + $0xac] sm:$0xf]
    %v132 = vld [vmem:[%s4 + $0xb0] sm:$0xf]
    %v133 = vld [vmem:[%s4 + $0xb4] sm:$0xf]
    %v134 = vld [vmem:[%s4 + $0xb8] sm:$0xf]
    %v135 = vld [vmem:[%s4 + $0xbc] sm:$0xf]
    %v136 = vld [vmem:[%s4 + $0xc0] sm:$0xf]
    %v137 = vld [vmem:[%s4 + $0xc4] sm:$0xf]
    %v138 = vld [vmem:[%s4 + $0xc8] sm:$0xf]
    %v139 = vld [vmem:[%s4 + $0xcc] sm:$0xf]
    %v140 = vld [vmem:[%s4 + $0xd0] sm:$0xf]
    %v141 = vld [vmem:[%s4 + $0xd4] sm:$0xf]
    %v142 = vld [vmem:[%s4 + $0xd8] sm:$0xf]
    %v143 = vld [vmem:[%s4 + $0xdc] sm:$0xf]
    %v144 = vld [vmem:[%s4 + $0xe0] sm:$0xf]
    %v145 = vld [vmem:[%s4 + $0xe4] sm:$0xf]
    %v146 = vld [vmem:[%s4 + $0xe8] sm:$0xf]
    %v147 = vld [vmem:[%s4 + $0xec] sm:$0xf]
    %v148 = vld [vmem:[%s4 + $0xf0] sm:$0xf]
    %v149 = vld [vmem:[%s4 + $0xf4] sm:$0xf]
    %v150 = vld [vmem:[%s4 + $0xf8] sm:$0xf]
    %v151 = vld [vmem:[%s4 + $0xfc] sm:$0xf]
    %v152 = vld [vmem:[%s4 + $0x100] sm:$0xf]
    %v153 = vld [vmem:[%s4 + $0x104] sm:$0xf]
    %v154 = vld [vmem:[%s4 + $0x108] sm:$0xf]
    %v155 = vld [vmem:[%s4 + $0x10c] sm:$0xf]
    %v156 = vld [vmem:[%s4 + $0x110] sm:$0xf]
    %v157 = vld [vmem:[%s4 + $0x114] sm:$0xf]
    %v158 = vld [vmem:[%s4 + $0x118] sm:$0xf]
    %v159 = vld [vmem:[%s4 + $0x11c] sm:$0xf]
    %v160 = vld [vmem:[%s4 + $0x120] sm:$0xf]
    %v161 = vld [vmem:[%s4 + $0x124] sm:$0xf]
    %v162 = vld [vmem:[%s4 + $0x128] sm:$0xf]
    %v163 = vld [vmem:[%s4 + $0x12c] sm:$0xf]
    %v164 = vld [vmem:[%s4 + $0x130] sm:$0xf]
    %v165 = vld [vmem:[%s4 + $0x134] sm:$0xf]
    %v166 = vld [vmem:[%s4 + $0x138] sm:$0xf]
    %v167 = vld [vmem:[%s4 + $0x13c] sm:$0xf]
    %v168 = vld [vmem:[%s4 + $0x140] sm:$0xf]
    %v169 = vld [vmem:[%s4 + $0x144] sm:$0xf]
    %v170 = vld [vmem:[%s4 + $0x148] sm:$0xf]
    %v171 = vld [vmem:[%s4 + $0x14c] sm:$0xf]
    %v172 = vld [vmem:[%s4 + $0x150] sm:$0xf]
    %v173 = vld [vmem:[%s4 + $0x154] sm:$0xf]
    %v174 = vld [vmem:[%s4 + $0x158] sm:$0xf]
    %v175 = vld [vmem:[%s4 + $0x15c] sm:$0xf]
    %v176 = vld [vmem:[%s4 + $0x160] sm:$0xf]
    %v177 = vld [vmem:[%s4 + $0x164] sm:$0xf]
    %v178 = vld [vmem:[%s4 + $0x168] sm:$0xf]
    %v179 = vld [vmem:[%s4 + $0x16c] sm:$0xf]
    %v180 = vld [vmem:[%s4 + $0x170] sm:$0xf]
    %v181 = vld [vmem:[%s4 + $0x174] sm:$0xf]
    %v182 = vld [vmem:[%s4 + $0x178] sm:$0xf]
    %v183 = vld [vmem:[%s4 + $0x17c] sm:$0xf]
    %v184 = vld [vmem:[%s1] sm:$0xff]
    %v185 = vld [vmem:[%s1 + $0x8] sm:$0xff]
    %v282 = vunpack.c.l.b16 %v88
    %v283 = vunpack.c.l.b16 %v89
    %v284 = vunpack.c.l.b16 %v90
    %v285 = vunpack.c.l.b16 %v91
    %v286 = vunpack.c.l.b16 %v92
    %v287 = vunpack.c.l.b16 %v93
    %v288 = vunpack.c.l.b16 %v94
    %v289 = vunpack.c.l.b16 %v95
    %v290 = vunpack.c.l.b16 %v96
    %v291 = vunpack.c.l.b16 %v97
    %v292 = vunpack.c.l.b16 %v98
    %v293 = vunpack.c.l.b16 %v99
    %v294 = vunpack.c.l.b16 %v100
    %v295 = vunpack.c.l.b16 %v101
    %v296 = vunpack.c.l.b16 %v102
    %v297 = vunpack.c.l.b16 %v103
    %v298 = vunpack.c.l.b16 %v104
    %v299 = vunpack.c.l.b16 %v105
    %v300 = vunpack.c.l.b16 %v106
    %v301 = vunpack.c.l.b16 %v107
    %v302 = vunpack.c.l.b16 %v108
    %v303 = vunpack.c.l.b16 %v109
    %v304 = vunpack.c.l.b16 %v110
    %v305 = vunpack.c.l.b16 %v111
    %v306 = vunpack.c.l.b16 %v112
    %v307 = vunpack.c.l.b16 %v113
    %v308 = vunpack.c.l.b16 %v114
    %v309 = vunpack.c.l.b16 %v115
    %v310 = vunpack.c.l.b16 %v116
    %v311 = vunpack.c.l.b16 %v117
    %v312 = vunpack.c.l.b16 %v118
    %v313 = vunpack.c.l.b16 %v119
    %v314 = vunpack.c.l.b16 %v120
    %v315 = vunpack.c.l.b16 %v121
    %v316 = vunpack.c.l.b16 %v122
    %v317 = vunpack.c.l.b16 %v123
    %v318 = vunpack.c.l.b16 %v124
    %v319 = vunpack.c.l.b16 %v125
    %v320 = vunpack.c.l.b16 %v126
    %v321 = vunpack.c.l.b16 %v127
    %v322 = vunpack.c.l.b16 %v128
    %v323 = vunpack.c.l.b16 %v129
    %v324 = vunpack.c.l.b16 %v130
    %v325 = vunpack.c.l.b16 %v131
    %v326 = vunpack.c.l.b16 %v132
    %v327 = vunpack.c.l.b16 %v133
    %v328 = vunpack.c.l.b16 %v134
    %v329 = vunpack.c.l.b16 %v135
    %v330 = vunpack.c.l.b16 %v136
    %v331 = vunpack.c.l.b16 %v137
    %v332 = vunpack.c.l.b16 %v138
    %v333 = vunpack.c.l.b16 %v139
    %v334 = vunpack.c.l.b16 %v140
    %v335 = vunpack.c.l.b16 %v141
    %v336 = vunpack.c.l.b16 %v142
    %v337 = vunpack.c.l.b16 %v143
    %v338 = vunpack.c.l.b16 %v144
    %v339 = vunpack.c.l.b16 %v145
    %v340 = vunpack.c.l.b16 %v146
    %v341 = vunpack.c.l.b16 %v147
    %v342 = vunpack.c.l.b16 %v148
    %v343 = vunpack.c.l.b16 %v149
    %v344 = vunpack.c.l.b16 %v150
    %v345 = vunpack.c.l.b16 %v151
    %v346 = vunpack.c.l.b16 %v152
    %v347 = vunpack.c.l.b16 %v153
    %v348 = vunpack.c.l.b16 %v154
    %v349 = vunpack.c.l.b16 %v155
    %v350 = vunpack.c.l.b16 %v156
    %v351 = vunpack.c.l.b16 %v157
    %v352 = vunpack.c.l.b16 %v158
    %v353 = vunpack.c.l.b16 %v159
    %v354 = vunpack.c.l.b16 %v160
    %v355 = vunpack.c.l.b16 %v161
    %v356 = vunpack.c.l.b16 %v162
    %v357 = vunpack.c.l.b16 %v163
    %v358 = vunpack.c.l.b16 %v164
    %v359 = vunpack.c.l.b16 %v165
    %v360 = vunpack.c.l.b16 %v166
    %v361 = vunpack.c.l.b16 %v167
    %v362 = vunpack.c.l.b16 %v168
    %v363 = vunpack.c.l.b16 %v169
    %v364 = vunpack.c.l.b16 %v170
    %v365 = vunpack.c.l.b16 %v171
    %v366 = vunpack.c.l.b16 %v172
    %v367 = vunpack.c.l.b16 %v173
    %v368 = vunpack.c.l.b16 %v174
    %v369 = vunpack.c.l.b16 %v175
    %v370 = vunpack.c.l.b16 %v176
    %v371 = vunpack.c.l.b16 %v177
    %v372 = vunpack.c.l.b16 %v178
    %v373 = vunpack.c.l.b16 %v179
    %v374 = vunpack.c.l.b16 %v180
    %v375 = vunpack.c.l.b16 %v181
    %v376 = vunpack.c.l.b16 %v182
    %v377 = vunpack.c.l.b16 %v183
    %v378 = vpack.c.b16 %v283, %v282
    %v379 = vpack.c.b16 %v285, %v284
    %v380 = vpack.c.b16 %v287, %v286
    %v381 = vpack.c.b16 %v289, %v288
    %v382 = vpack.c.b16 %v291, %v290
    %v383 = vpack.c.b16 %v293, %v292
    %v384 = vpack.c.b16 %v295, %v294
    %v385 = vpack.c.b16 %v297, %v296
    %v386 = vpack.c.b16 %v299, %v298
    %v387 = vpack.c.b16 %v301, %v300
    %v388 = vpack.c.b16 %v303, %v302
    %v389 = vpack.c.b16 %v305, %v304
    %v390 = vpack.c.b16 %v307, %v306
    %v391 = vpack.c.b16 %v309, %v308
    %v392 = vpack.c.b16 %v311, %v310
    %v393 = vpack.c.b16 %v313, %v312
    %v394 = vpack.c.b16 %v315, %v314
    %v395 = vpack.c.b16 %v317, %v316
    %v396 = vpack.c.b16 %v319, %v318
    %v397 = vpack.c.b16 %v321, %v320
    %v398 = vpack.c.b16 %v323, %v322
    %v399 = vpack.c.b16 %v325, %v324
    %v400 = vpack.c.b16 %v327, %v326
    %v401 = vpack.c.b16 %v329, %v328
    %v402 = vpack.c.b16 %v331, %v330
    %v403 = vpack.c.b16 %v333, %v332
    %v404 = vpack.c.b16 %v335, %v334
    %v405 = vpack.c.b16 %v337, %v336
    %v406 = vpack.c.b16 %v339, %v338
    %v407 = vpack.c.b16 %v341, %v340
    %v408 = vpack.c.b16 %v343, %v342
    %v409 = vpack.c.b16 %v345, %v344
    %v410 = vpack.c.b16 %v347, %v346
    %v411 = vpack.c.b16 %v349, %v348
    %v412 = vpack.c.b16 %v351, %v350
    %v413 = vpack.c.b16 %v353, %v352
    %v414 = vpack.c.b16 %v355, %v354
    %v415 = vpack.c.b16 %v357, %v356
    %v416 = vpack.c.b16 %v359, %v358
    %v417 = vpack.c.b16 %v361, %v360
    %v418 = vpack.c.b16 %v363, %v362
    %v419 = vpack.c.b16 %v365, %v364
    %v420 = vpack.c.b16 %v367, %v366
    %v421 = vpack.c.b16 %v369, %v368
    %v422 = vpack.c.b16 %v371, %v370
    %v423 = vpack.c.b16 %v373, %v372
    %v424 = vpack.c.b16 %v375, %v374
    %v425 = vpack.c.b16 %v377, %v376
    %474 = vmatprep.subr.bf16.mxu0 0
    %475 = vmatpush1.bf16.msra.mxu0 %v378
    %476 = vmatprep.subr.bf16.mxu0 0
    %477 = vmatpush1.bf16.msra.mxu0 %v379
    %478 = vmatprep.subr.bf16.mxu0 0
    %479 = vmatpush1.bf16.msra.mxu0 %v380
    %480 = vmatprep.subr.bf16.mxu0 0
    %481 = vmatpush1.bf16.msra.mxu0 %v381
    %482 = vmatprep.subr.bf16.mxu0 0
    %483 = vmatpush1.bf16.msra.mxu0 %v382
    %484 = vmatprep.subr.bf16.mxu0 0
    %485 = vmatpush1.bf16.msra.mxu0 %v383
    %486 = vmatprep.subr.bf16.mxu0 0
    %487 = vmatpush1.bf16.msra.mxu0 %v384
    %488 = vmatprep.subr.bf16.mxu0 0
    %489 = vmatpush1.bf16.msra.mxu0 %v385
    %490 = vmatprep.subr.bf16.mxu0 0
    %491 = vmatpush1.bf16.msra.mxu0 %v386
    %492 = vmatprep.subr.bf16.mxu0 0
    %493 = vmatpush1.bf16.msra.mxu0 %v387
    %494 = vmatprep.subr.bf16.mxu0 0
    %495 = vmatpush1.bf16.msra.mxu0 %v388
    %496 = vmatprep.subr.bf16.mxu0 0
    %497 = vmatpush1.bf16.msra.mxu0 %v389
    %498 = vmatprep.subr.bf16.mxu0 0
    %499 = vmatpush1.bf16.msra.mxu0 %v390
    %500 = vmatprep.subr.bf16.mxu0 0
    %501 = vmatpush1.bf16.msra.mxu0 %v391
    %502 = vmatprep.subr.bf16.mxu0 0
    %503 = vmatpush1.bf16.msra.mxu0 %v392
    %504 = vmatprep.subr.bf16.mxu0 0
    %505 = vmatpush1.bf16.msra.mxu0 %v393
    %506 = vmatprep.mubr.bf16.mxu0 %v83
    %507 = vmatmul.mubr.bf16.gmra.mrb[0].mxu0 %v82
    %v508 = vpop.f32.mrb[0].mxu0
    %v509 = vadd.f32 %v184, %v508
    %v510 = vpop.f32.mrb[0].mxu0
    %v511 = vpop.f32.mrb[0].mxu0
    %v512 = vadd.f32 %v185, %v511
    %v513 = vpop.f32.mrb[0].mxu0
    %514 = vdwg.mxu0
    %515 = vmatprep.subr.bf16.mxu0 0
    %516 = vmatpush1.bf16.msra.mxu0 %v394
    %517 = vmatprep.subr.bf16.mxu0 0
    %518 = vmatpush1.bf16.msra.mxu0 %v395
    %519 = vmatprep.subr.bf16.mxu0 0
    %520 = vmatpush1.bf16.msra.mxu0 %v396
    %521 = vmatprep.subr.bf16.mxu0 0
    %522 = vmatpush1.bf16.msra.mxu0 %v397
    %523 = vmatprep.subr.bf16.mxu0 0
    %524 = vmatpush1.bf16.msra.mxu0 %v398
    %525 = vmatprep.subr.bf16.mxu0 0
    %526 = vmatpush1.bf16.msra.mxu0 %v399
    %527 = vmatprep.subr.bf16.mxu0 0
    %528 = vmatpush1.bf16.msra.mxu0 %v400
    %529 = vmatprep.subr.bf16.mxu0 0
    %530 = vmatpush1.bf16.msra.mxu0 %v401
    %531 = vmatprep.subr.bf16.mxu0 0
    %532 = vmatpush1.bf16.msra.mxu0 %v402
    %533 = vmatprep.subr.bf16.mxu0 0
    %534 = vmatpush1.bf16.msra.mxu0 %v403
    %535 = vmatprep.subr.bf16.mxu0 0
    %536 = vmatpush1.bf16.msra.mxu0 %v404
    %537 = vmatprep.subr.bf16.mxu0 0
    %538 = vmatpush1.bf16.msra.mxu0 %v405
    %539 = vmatprep.subr.bf16.mxu0 0
    %540 = vmatpush1.bf16.msra.mxu0 %v406
    %541 = vmatprep.subr.bf16.mxu0 0
    %542 = vmatpush1.bf16.msra.mxu0 %v407
    %543 = vmatprep.subr.bf16.mxu0 0
    %544 = vmatpush1.bf16.msra.mxu0 %v408
    %545 = vmatprep.subr.bf16.mxu0 0
    %546 = vmatpush1.bf16.msra.mxu0 %v409
    %547 = vmatprep.mubr.bf16.mxu0 %v85
    %548 = vmatmul.mubr.bf16.gmra.mrb[0].mxu0 %v84
    %v549 = vpop.f32.mrb[0].mxu0
    %v550 = vadd.f32 %v509, %v549
    %v551 = vpop.f32.mrb[0].mxu0
    %v552 = vpop.f32.mrb[0].mxu0
    %v553 = vadd.f32 %v512, %v552
    %v554 = vpop.f32.mrb[0].mxu0
    %555 = vdwg.mxu0
    %556 = vmatprep.subr.bf16.mxu0 0
    %557 = vmatpush1.bf16.msra.mxu0 %v410
    %558 = vmatprep.subr.bf16.mxu0 0
    %559 = vmatpush1.bf16.msra.mxu0 %v411
    %560 = vmatprep.subr.bf16.mxu0 0
    %561 = vmatpush1.bf16.msra.mxu0 %v412
    %562 = vmatprep.subr.bf16.mxu0 0
    %563 = vmatpush1.bf16.msra.mxu0 %v413
    %564 = vmatprep.subr.bf16.mxu0 0
    %565 = vmatpush1.bf16.msra.mxu0 %v414
    %566 = vmatprep.subr.bf16.mxu0 0
    %567 = vmatpush1.bf16.msra.mxu0 %v415
    %568 = vmatprep.subr.bf16.mxu0 0
    %569 = vmatpush1.bf16.msra.mxu0 %v416
    %570 = vmatprep.subr.bf16.mxu0 0
    %571 = vmatpush1.bf16.msra.mxu0 %v417
    %572 = vmatprep.subr.bf16.mxu0 0
    %573 = vmatpush1.bf16.msra.mxu0 %v418
    %574 = vmatprep.subr.bf16.mxu0 0
    %575 = vmatpush1.bf16.msra.mxu0 %v419
    %576 = vmatprep.subr.bf16.mxu0 0
    %577 = vmatpush1.bf16.msra.mxu0 %v420
    %578 = vmatprep.subr.bf16.mxu0 0
    %579 = vmatpush1.bf16.msra.mxu0 %v421
    %580 = vmatprep.subr.bf16.mxu0 0
    %581 = vmatpush1.bf16.msra.mxu0 %v422
    %582 = vmatprep.subr.bf16.mxu0 0
    %583 = vmatpush1.bf16.msra.mxu0 %v423
    %584 = vmatprep.subr.bf16.mxu0 0
    %585 = vmatpush1.bf16.msra.mxu0 %v424
    %586 = vmatprep.subr.bf16.mxu0 0
    %587 = vmatpush1.bf16.msra.mxu0 %v425
    %588 = vmatprep.mubr.bf16.mxu0 %v87
    %589 = vmatmul.mubr.bf16.gmra.mrb[0].mxu0 %v86
    %v590 = vpop.f32.mrb[0].mxu0
    %v591 = vadd.f32 %v550, %v590
    %v592 = vpop.f32.mrb[0].mxu0
    %v593 = vpop.f32.mrb[0].mxu0
    %v594 = vadd.f32 %v553, %v593
    %v595 = vpop.f32.mrb[0].mxu0
    %596 = vdwg.mxu0
    %v597 = vld [vmem:[%s2] sm:$0xff]
    %v598 = vld [vmem:[%s2 + $0x8] sm:$0xff]
    %v599 = vld [vmem:[%s5] sm:$0x1]
    %v600 = vld [vmem:[%s6] sm:$0x1]
    %vm601 = vcmask 261120
    %v602 = vsel %vm601, %v591, 0.0
    %603 = vadd.xlane.f32.xlu0 %v602
    %v604 = vpop.xlane.xlu0 %603
    %v605 = vsel %vm601, %v594, 0.0
    %606 = vadd.xlane.f32.xlu0 %v605
    %v607 = vpop.xlane.xlu0 %606
    %v608 = vrcp.pop 32.0
    %v609 = vmul.f32 %v604, %v608
    %v610 = vmul.f32 %v607, %v608
    %v611 = vmul.f32 %v591, %v591
    %v612 = vmul.f32 %v594, %v594
    %v613 = vsel %vm601, %v611, 0.0
    %614 = vadd.xlane.f32.xlu0 %v613
    %v615 = vpop.xlane.xlu0 %614
    %v616 = vsel %vm601, %v612, 0.0
    %617 = vadd.xlane.f32.xlu0 %v616
    %v618 = vpop.xlane.xlu0 %617
    %v619 = vmul.f32 %v615, %v608
    %v620 = vmul.f32 %v618, %v608
    %v621 = vmul.f32 %v609, %v609
    %v622 = vmul.f32 %v610, %v610
    %v623 = vsub.f32 %v619, %v621
    %v624 = vsub.f32 %v620, %v622
    %v625 = vsub.f32 %v591, %v609
    %v626 = vsub.f32 %v594, %v610
    %v627 = vadd.f32 %v623, 1e-06
    %v628 = vadd.f32 %v624, 1e-06
    %v629 = vrsqrt.pop %v627
    %v630 = vrsqrt.pop %v628
    %v631 = vmul.f32 %v625, %v629
    %v632 = vmul.f32 %v626, %v630
    %v634 = vlaneseq
    %v635 = vshrl.u32 %v634, 7
    %v636 = vsub.s32 0, %v635
    %v637 = vrot.slane %v599, %v636
    %v639 = vmul.f32 %v631, %v637
    %v640 = vmul.f32 %v632, %v637
    %v642 = vlaneseq
    %v643 = vshrl.u32 %v642, 7
    %v644 = vsub.s32 0, %v643
    %v645 = vrot.slane %v600, %v644
    %v647 = vadd.f32 %v639, %v645
    %v648 = vadd.f32 %v640, %v645
    %v649 = vpack.c.bf16 %v648, %v647
    %v650 = vld [vmem:[%s7] sm:$0xf]
    %v651 = vld [vmem:[%s7 + $0x4] sm:$0xf]
    %v652 = vld [vmem:[%s7 + $0x8] sm:$0xf]
    %v653 = vld [vmem:[%s7 + $0xc] sm:$0xf]
    %v654 = vld [vmem:[%s8] sm:$0x1]
    %v656 = vlaneseq
    %v657 = vshrl.u32 %v656, 7
    %v658 = vsub.s32 0, %v657
    %v659 = vrot.slane %v654, %v658
    %v665 = vunpack.c.l.b16 %v650
    %v666 = vunpack.c.l.b16 %v651
    %v667 = vunpack.c.l.b16 %v652
    %v668 = vunpack.c.l.b16 %v653
    %v669 = vpack.c.b16 %v666, %v665
    %v670 = vpack.c.b16 %v668, %v667
    %v674 = vsel %vm601, %v649, 0
    %676 = vmatprep.subr.bf16.mxu0 0
    %677 = vmatpush1.bf16.msra.mxu0 %v669
    %678 = vmatprep.subr.bf16.mxu0 0
    %679 = vmatpush1.bf16.msra.mxu0 %v670
    %680 = vmatprep.subr.bf16.mxu0 0
    %681 = vmatpush1.bf16.msra.mxu0 0
    %682 = vmatprep.subr.bf16.mxu0 0
    %683 = vmatpush1.bf16.msra.mxu0 0
    %684 = vmatprep.subr.bf16.mxu0 0
    %685 = vmatpush1.bf16.msra.mxu0 0
    %686 = vmatprep.subr.bf16.mxu0 0
    %687 = vmatpush1.bf16.msra.mxu0 0
    %688 = vmatprep.subr.bf16.mxu0 0
    %689 = vmatpush1.bf16.msra.mxu0 0
    %690 = vmatprep.subr.bf16.mxu0 0
    %691 = vmatpush1.bf16.msra.mxu0 0
    %692 = vmatprep.subr.bf16.mxu0 0
    %693 = vmatpush1.bf16.msra.mxu0 0
    %694 = vmatprep.subr.bf16.mxu0 0
    %695 = vmatpush1.bf16.msra.mxu0 0
    %696 = vmatprep.subr.bf16.mxu0 0
    %697 = vmatpush1.bf16.msra.mxu0 0
    %698 = vmatprep.subr.bf16.mxu0 0
    %699 = vmatpush1.bf16.msra.mxu0 0
    %700 = vmatprep.subr.bf16.mxu0 0
    %701 = vmatpush1.bf16.msra.mxu0 0
    %702 = vmatprep.subr.bf16.mxu0 0
    %703 = vmatpush1.bf16.msra.mxu0 0
    %704 = vmatprep.subr.bf16.mxu0 0
    %705 = vmatpush1.bf16.msra.mxu0 0
    %706 = vmatprep.subr.bf16.mxu0 0
    %707 = vmatpush1.bf16.msra.mxu0 0
    %708 = vmatprep.mubr.bf16.mxu0 0
    %709 = vmatmul.mubr.bf16.gmra.mrb[0].mxu0 %v674
    %v710 = vpop.f32.mrb[0].mxu0
    %v711 = vadd.f32 %v659, %v710
    %v712 = vpop.f32.mrb[0].mxu0
    %v713 = vpop.f32.mrb[0].mxu0
    %v714 = vadd.f32 %v659, %v713
    %v715 = vpop.f32.mrb[0].mxu0
    %716 = vdwg.mxu0
    %v717 = vld [vmem:[%s10] sm:$0x1]
    %v719 = vlaneseq
    %v720 = vshrl.u32 %v719, 7
    %v721 = vsub.s32 0, %v720
    %v722 = vrot.slane %v717, %v721
    %v724 = vadd.f32 %v591, %v722
    %v725 = vadd.f32 %v594, %v722
    %728 = vrot.lane.b32.xlu0 %v711, 96
    %v729 = vpop.permute.xlu0 %728
    %730 = vrot.lane.b32.xlu0 %v714, 96
    %v731 = vpop.permute.xlu0 %730
    %vm732 = vcmask 130048
    %v733 = vsel %vm732, %v711, 0
    %v735 = vsel %vm732, %v714, 0
    %v737 = vsel %vm732, %v729, 0
    %v739 = vsel %vm732, %v731, 0
    %741 = vmatprep.subr.mxu0 0.0
    %742 = vmatpush1.xpose.msra.mxu0 %v737
    %743 = vmatprep.subr.mxu0 0.0
    %744 = vmatpush1.xpose.msra.mxu0 %v739
    %745 = vmatprep.subr.mxu0 0.0
    %746 = vmatpush1.xpose.msra.mxu0 0.0
    %747 = vmatprep.subr.mxu0 0.0
    %748 = vmatpush1.xpose.msra.mxu0 0.0
    %749 = vmatprep.subr.mxu0 0.0
    %750 = vmatpush1.xpose.msra.mxu0 0.0
    %751 = vmatprep.subr.mxu0 0.0
    %752 = vmatpush1.xpose.msra.mxu0 0.0
    %753 = vmatprep.subr.mxu0 0.0
    %754 = vmatpush1.xpose.msra.mxu0 0.0
    %755 = vmatprep.subr.mxu0 0.0
    %756 = vmatpush1.xpose.msra.mxu0 0.0
    %757 = vmatprep.subr.mxu0 0.0
    %758 = vmatpush1.xpose.msra.mxu0 0.0
    %759 = vmatprep.subr.mxu0 0.0
    %760 = vmatpush1.xpose.msra.mxu0 0.0
    %761 = vmatprep.subr.mxu0 0.0
    %762 = vmatpush1.xpose.msra.mxu0 0.0
    %763 = vmatprep.subr.mxu0 0.0
    %764 = vmatpush1.xpose.msra.mxu0 0.0
    %765 = vmatprep.subr.mxu0 0.0
    %766 = vmatpush1.xpose.msra.mxu0 0.0
    %767 = vmatprep.subr.mxu0 0.0
    %768 = vmatpush1.xpose.msra.mxu0 0.0
    %769 = vmatprep.subr.mxu0 0.0
    %770 = vmatpush1.xpose.msra.mxu0 0.0
    %771 = vmatprep.subr.mxu0 0.0
    %772 = vmatpush1.xpose.msra.mxu0 0.0
    %773 = vmatprep.subr.mxu0 0.0
    %774 = vmatpush1.xpose.msra.mxu0 0.0
    %775 = vmatprep.subr.mxu0 0.0
    %776 = vmatpush1.xpose.msra.mxu0 0.0
    %777 = vmatprep.subr.mxu0 0.0
    %778 = vmatpush1.xpose.msra.mxu0 0.0
    %779 = vmatprep.subr.mxu0 0.0
    %780 = vmatpush1.xpose.msra.mxu0 0.0
    %781 = vmatprep.subr.mxu0 0.0
    %782 = vmatpush1.xpose.msra.mxu0 0.0
    %783 = vmatprep.subr.mxu0 0.0
    %784 = vmatpush1.xpose.msra.mxu0 0.0
    %785 = vmatprep.subr.mxu0 0.0
    %786 = vmatpush1.xpose.msra.mxu0 0.0
    %787 = vmatprep.subr.mxu0 0.0
    %788 = vmatpush1.xpose.msra.mxu0 0.0
    %789 = vmatprep.subr.mxu0 0.0
    %790 = vmatpush1.xpose.msra.mxu0 0.0
    %791 = vmatprep.subr.mxu0 0.0
    %792 = vmatpush1.xpose.msra.mxu0 0.0
    %793 = vmatprep.subr.mxu0 0.0
    %794 = vmatpush1.xpose.msra.mxu0 0.0
    %795 = vmatprep.subr.mxu0 0.0
    %796 = vmatpush1.xpose.msra.mxu0 0.0
    %797 = vmatprep.subr.mxu0 0.0
    %798 = vmatpush1.xpose.msra.mxu0 0.0
    %799 = vmatprep.subr.mxu0 0.0
    %800 = vmatpush1.xpose.msra.mxu0 0.0
    %801 = vmatprep.subr.mxu0 0.0
    %802 = vmatpush1.xpose.msra.mxu0 0.0
    %803 = vmatprep.subr.mxu0 0.0
    %804 = vmatpush1.xpose.msra.mxu0 0.0
    %805 = vmatprep.mubr.f32.mxu0 0.0
    %806 = vmatmul.mubr.f32.gmra.mrb[0].mxu0 %v733
    %v807 = vpop.f32.mrb[0].mxu0
    %v808 = vadd.f32 0.0, %v807
    %v809 = vpop.f32.mrb[0].mxu0
    %810 = vmatprep.mubr.f32.mxu0 0.0
    %811 = vmatmul.mubr.f32.gmra.mrb[0].mxu0 %v735
    %v812 = vpop.f32.mrb[0].mxu0
    %v813 = vadd.f32 0.0, %v812
    %v814 = vpop.f32.mrb[0].mxu0
    %815 = vdwg.mxu0
    %v816 = vmul.f32 %v808, 0.25
    %v817 = vmul.f32 %v813, 0.25
    %v818 = vadd.f32 %v816, %v597
    %v819 = vadd.f32 %v817, %v598
    %v820 = vsel %vm732, %v818, -inf
    %821 = vmax.xlane.f32.xlu0 %v820
    %v822 = vpop.xlane.xlu0 %821
    %v823 = vsel %vm732, %v819, -inf
    %824 = vmax.xlane.f32.xlu0 %v823
    %v825 = vpop.xlane.xlu0 %824
    %v826 = vsub.f32 %v818, %v822
    %v827 = vsub.f32 %v819, %v825
    %v828 = vmul.f32 %v826, 1.442695
    %v829 = vpow.pop %v828
    %v830 = vmul.f32 %v827, 1.442695
    %v831 = vpow.pop %v830
    %v832 = vsel %vm732, %v829, 0.0
    %833 = vadd.xlane.f32.xlu0 %v832
    %v834 = vpop.xlane.xlu0 %833
    %v835 = vsel %vm732, %v831, 0.0
    %836 = vadd.xlane.f32.xlu0 %v835
    %v837 = vpop.xlane.xlu0 %836
    %v838 = vrcp.pop %v834
    %v839 = vrcp.pop %v837
    %v840 = vmul.f32 %v829, %v838
    %v841 = vmul.f32 %v831, %v839
    %842 = vrot.lane.b32.xlu0 %v711, 64
    %v843 = vpop.permute.xlu0 %842
    %844 = vrot.lane.b32.xlu0 %v714, 64
    %v845 = vpop.permute.xlu0 %844
    %v849 = vsel %vm732, %v840, 0
    %v852 = vsel %vm732, %v841, 0
    %854 = vmatprep.subr.mxu0 0.0
    %855 = vmatpush1.msra.mxu0 %v843
    %856 = vmatprep.subr.mxu0 0.0
    %857 = vmatpush1.msra.mxu0 %v845
    %858 = vmatprep.subr.mxu0 0.0
    %859 = vmatpush1.msra.mxu0 0.0
    %860 = vmatprep.subr.mxu0 0.0
    %861 = vmatpush1.msra.mxu0 0.0
    %862 = vmatprep.subr.mxu0 0.0
    %863 = vmatpush1.msra.mxu0 0.0
    %864 = vmatprep.subr.mxu0 0.0
    %865 = vmatpush1.msra.mxu0 0.0
    %866 = vmatprep.subr.mxu0 0.0
    %867 = vmatpush1.msra.mxu0 0.0
    %868 = vmatprep.subr.mxu0 0.0
    %869 = vmatpush1.msra.mxu0 0.0
    %870 = vmatprep.subr.mxu0 0.0
    %871 = vmatpush1.msra.mxu0 0.0
    %872 = vmatprep.subr.mxu0 0.0
    %873 = vmatpush1.msra.mxu0 0.0
    %874 = vmatprep.subr.mxu0 0.0
    %875 = vmatpush1.msra.mxu0 0.0
    %876 = vmatprep.subr.mxu0 0.0
    %877 = vmatpush1.msra.mxu0 0.0
    %878 = vmatprep.subr.mxu0 0.0
    %879 = vmatpush1.msra.mxu0 0.0
    %880 = vmatprep.subr.mxu0 0.0
    %881 = vmatpush1.msra.mxu0 0.0
    %882 = vmatprep.subr.mxu0 0.0
    %883 = vmatpush1.msra.mxu0 0.0
    %884 = vmatprep.subr.mxu0 0.0
    %885 = vmatpush1.msra.mxu0 0.0
    %886 = vmatprep.subr.mxu0 0.0
    %887 = vmatpush1.msra.mxu0 0.0
    %888 = vmatprep.subr.mxu0 0.0
    %889 = vmatpush1.msra.mxu0 0.0
    %890 = vmatprep.subr.mxu0 0.0
    %891 = vmatpush1.msra.mxu0 0.0
    %892 = vmatprep.subr.mxu0 0.0
    %893 = vmatpush1.msra.mxu0 0.0
    %894 = vmatprep.subr.mxu0 0.0
    %895 = vmatpush1.msra.mxu0 0.0
    %896 = vmatprep.subr.mxu0 0.0
    %897 = vmatpush1.msra.mxu0 0.0
    %898 = vmatprep.subr.mxu0 0.0
    %899 = vmatpush1.msra.mxu0 0.0
    %900 = vmatprep.subr.mxu0 0.0
    %901 = vmatpush1.msra.mxu0 0.0
    %902 = vmatprep.subr.mxu0 0.0
    %903 = vmatpush1.msra.mxu0 0.0
    %904 = vmatprep.subr.mxu0 0.0
    %905 = vmatpush1.msra.mxu0 0.0
    %906 = vmatprep.subr.mxu0 0.0
    %907 = vmatpush1.msra.mxu0 0.0
    %908 = vmatprep.subr.mxu0 0.0
    %909 = vmatpush1.msra.mxu0 0.0
    %910 = vmatprep.subr.mxu0 0.0
    %911 = vmatpush1.msra.mxu0 0.0
    %912 = vmatprep.subr.mxu0 0.0
    %913 = vmatpush1.msra.mxu0 0.0
    %914 = vmatprep.subr.mxu0 0.0
    %915 = vmatpush1.msra.mxu0 0.0
    %916 = vmatprep.subr.mxu0 0.0
    %917 = vmatpush1.msra.mxu0 0.0
    %918 = vmatprep.mubr.f32.mxu0 0.0
    %919 = vmatmul.mubr.f32.gmra.mrb[0].mxu0 %v849
    %v920 = vpop.f32.mrb[0].mxu0
    %v921 = vadd.f32 0.0, %v920
    %v922 = vpop.f32.mrb[0].mxu0
    %923 = vmatprep.mubr.f32.mxu0 0.0
    %924 = vmatmul.mubr.f32.gmra.mrb[0].mxu0 %v852
    %v925 = vpop.f32.mrb[0].mxu0
    %v926 = vadd.f32 0.0, %v925
    %v927 = vpop.f32.mrb[0].mxu0
    %928 = vdwg.mxu0
    %v929 = vpack.c.bf16 %v926, %v921
    %v930 = vld [vmem:[%s9] sm:$0xf]
    %v931 = vld [vmem:[%s9 + $0x4] sm:$0xf]
    %v934 = vunpack.c.l.b16 %v930
    %v935 = vunpack.c.l.b16 %v931
    %v936 = vpack.c.b16 %v935, %v934
    %v939 = vsel %vm732, %v929, 0
    %941 = vmatprep.subr.bf16.mxu0 0
    %942 = vmatpush1.bf16.msra.mxu0 %v936
    %943 = vmatprep.subr.bf16.mxu0 0
    %944 = vmatpush1.bf16.msra.mxu0 0
    %945 = vmatprep.subr.bf16.mxu0 0
    %946 = vmatpush1.bf16.msra.mxu0 0
    %947 = vmatprep.subr.bf16.mxu0 0
    %948 = vmatpush1.bf16.msra.mxu0 0
    %949 = vmatprep.subr.bf16.mxu0 0
    %950 = vmatpush1.bf16.msra.mxu0 0
    %951 = vmatprep.subr.bf16.mxu0 0
    %952 = vmatpush1.bf16.msra.mxu0 0
    %953 = vmatprep.subr.bf16.mxu0 0
    %954 = vmatpush1.bf16.msra.mxu0 0
    %955 = vmatprep.subr.bf16.mxu0 0
    %956 = vmatpush1.bf16.msra.mxu0 0
    %957 = vmatprep.subr.bf16.mxu0 0
    %958 = vmatpush1.bf16.msra.mxu0 0
    %959 = vmatprep.subr.bf16.mxu0 0
    %960 = vmatpush1.bf16.msra.mxu0 0
    %961 = vmatprep.subr.bf16.mxu0 0
    %962 = vmatpush1.bf16.msra.mxu0 0
    %963 = vmatprep.subr.bf16.mxu0 0
    %964 = vmatpush1.bf16.msra.mxu0 0
    %965 = vmatprep.subr.bf16.mxu0 0
    %966 = vmatpush1.bf16.msra.mxu0 0
    %967 = vmatprep.subr.bf16.mxu0 0
    %968 = vmatpush1.bf16.msra.mxu0 0
    %969 = vmatprep.subr.bf16.mxu0 0
    %970 = vmatpush1.bf16.msra.mxu0 0
    %971 = vmatprep.subr.bf16.mxu0 0
    %972 = vmatpush1.bf16.msra.mxu0 0
    %973 = vmatprep.mubr.bf16.mxu0 0
    %974 = vmatmul.mubr.bf16.gmra.mrb[0].mxu0 %v939
    %v975 = vpop.f32.mrb[0].mxu0
    %v976 = vadd.f32 0.0, %v975
    %v977 = vpop.f32.mrb[0].mxu0
    %v978 = vpop.f32.mrb[0].mxu0
    %v979 = vadd.f32 0.0, %v978
    %v980 = vpop.f32.mrb[0].mxu0
    %981 = vdwg.mxu0
    %v982 = vadd.f32 %v724, %v976
    %v983 = vadd.f32 %v725, %v979
    %984 = vrot.lane.b32.xlu0 %v711, 112
    %v985 = vpop.permute.xlu0 %984
    %986 = vrot.lane.b32.xlu0 %v714, 112
    %v987 = vpop.permute.xlu0 %986
    %988 = vrot.lane.b32.xlu0 %v711, 80
    %v989 = vpop.permute.xlu0 %988
    %990 = vrot.lane.b32.xlu0 %v714, 80
    %v991 = vpop.permute.xlu0 %990
    %v992 = vsel %vm732, %v985, 0
    %v994 = vsel %vm732, %v987, 0
    %v996 = vsel %vm732, %v989, 0
    %v998 = vsel %vm732, %v991, 0
    %1000 = vmatprep.subr.mxu0 0.0
    %1001 = vmatpush1.xpose.msra.mxu0 %v996
    %1002 = vmatprep.subr.mxu0 0.0
    %1003 = vmatpush1.xpose.msra.mxu0 %v998
    %1004 = vmatprep.subr.mxu0 0.0
    %1005 = vmatpush1.xpose.msra.mxu0 0.0
    %1006 = vmatprep.subr.mxu0 0.0
    %1007 = vmatpush1.xpose.msra.mxu0 0.0
    %1008 = vmatprep.subr.mxu0 0.0
    %1009 = vmatpush1.xpose.msra.mxu0 0.0
    %1010 = vmatprep.subr.mxu0 0.0
    %1011 = vmatpush1.xpose.msra.mxu0 0.0
    %1012 = vmatprep.subr.mxu0 0.0
    %1013 = vmatpush1.xpose.msra.mxu0 0.0
    %1014 = vmatprep.subr.mxu0 0.0
    %1015 = vmatpush1.xpose.msra.mxu0 0.0
    %1016 = vmatprep.subr.mxu0 0.0
    %1017 = vmatpush1.xpose.msra.mxu0 0.0
    %1018 = vmatprep.subr.mxu0 0.0
    %1019 = vmatpush1.xpose.msra.mxu0 0.0
    %1020 = vmatprep.subr.mxu0 0.0
    %1021 = vmatpush1.xpose.msra.mxu0 0.0
    %1022 = vmatprep.subr.mxu0 0.0
    %1023 = vmatpush1.xpose.msra.mxu0 0.0
    %1024 = vmatprep.subr.mxu0 0.0
    %1025 = vmatpush1.xpose.msra.mxu0 0.0
    %1026 = vmatprep.subr.mxu0 0.0
    %1027 = vmatpush1.xpose.msra.mxu0 0.0
    %1028 = vmatprep.subr.mxu0 0.0
    %1029 = vmatpush1.xpose.msra.mxu0 0.0
    %1030 = vmatprep.subr.mxu0 0.0
    %1031 = vmatpush1.xpose.msra.mxu0 0.0
    %1032 = vmatprep.subr.mxu0 0.0
    %1033 = vmatpush1.xpose.msra.mxu0 0.0
    %1034 = vmatprep.subr.mxu0 0.0
    %1035 = vmatpush1.xpose.msra.mxu0 0.0
    %1036 = vmatprep.subr.mxu0 0.0
    %1037 = vmatpush1.xpose.msra.mxu0 0.0
    %1038 = vmatprep.subr.mxu0 0.0
    %1039 = vmatpush1.xpose.msra.mxu0 0.0
    %1040 = vmatprep.subr.mxu0 0.0
    %1041 = vmatpush1.xpose.msra.mxu0 0.0
    %1042 = vmatprep.subr.mxu0 0.0
    %1043 = vmatpush1.xpose.msra.mxu0 0.0
    %1044 = vmatprep.subr.mxu0 0.0
    %1045 = vmatpush1.xpose.msra.mxu0 0.0
    %1046 = vmatprep.subr.mxu0 0.0
    %1047 = vmatpush1.xpose.msra.mxu0 0.0
    %1048 = vmatprep.subr.mxu0 0.0
    %1049 = vmatpush1.xpose.msra.mxu0 0.0
    %1050 = vmatprep.subr.mxu0 0.0
    %1051 = vmatpush1.xpose.msra.mxu0 0.0
    %1052 = vmatprep.subr.mxu0 0.0
    %1053 = vmatpush1.xpose.msra.mxu0 0.0
    %1054 = vmatprep.subr.mxu0 0.0
    %1055 = vmatpush1.xpose.msra.mxu0 0.0
    %1056 = vmatprep.subr.mxu0 0.0
    %1057 = vmatpush1.xpose.msra.mxu0 0.0
    %1058 = vmatprep.subr.mxu0 0.0
    %1059 = vmatpush1.xpose.msra.mxu0 0.0
    %1060 = vmatprep.subr.mxu0 0.0
    %1061 = vmatpush1.xpose.msra.mxu0 0.0
    %1062 = vmatprep.subr.mxu0 0.0
    %1063 = vmatpush1.xpose.msra.mxu0 0.0
    %1064 = vmatprep.mubr.f32.mxu0 0.0
    %1065 = vmatmul.mubr.f32.gmra.mrb[0].mxu0 %v992
    %v1066 = vpop.f32.mrb[0].mxu0
    %v1067 = vadd.f32 0.0, %v1066
    %v1068 = vpop.f32.mrb[0].mxu0
    %1069 = vmatprep.mubr.f32.mxu0 0.0
    %1070 = vmatmul.mubr.f32.gmra.mrb[0].mxu0 %v994
    %v1071 = vpop.f32.mrb[0].mxu0
    %v1072 = vadd.f32 0.0, %v1071
    %v1073 = vpop.f32.mrb[0].mxu0
    %1074 = vdwg.mxu0
    %v1075 = vmul.f32 %v1067, 0.25
    %v1076 = vmul.f32 %v1072, 0.25
    %v1077 = vadd.f32 %v1075, %v597
    %v1078 = vadd.f32 %v1076, %v598
    %v1079 = vsel %vm732, %v1077, -inf
    %1080 = vmax.xlane.f32.xlu0 %v1079
    %v1081 = vpop.xlane.xlu0 %1080
    %v1082 = vsel %vm732, %v1078, -inf
    %1083 = vmax.xlane.f32.xlu0 %v1082
    %v1084 = vpop.xlane.xlu0 %1083
    %v1085 = vsub.f32 %v1077, %v1081
    %v1086 = vsub.f32 %v1078, %v1084
    %v1087 = vmul.f32 %v1085, 1.442695
    %v1088 = vpow.pop %v1087
    %v1089 = vmul.f32 %v1086, 1.442695
    %v1090 = vpow.pop %v1089
    %v1091 = vsel %vm732, %v1088, 0.0
    %1092 = vadd.xlane.f32.xlu0 %v1091
    %v1093 = vpop.xlane.xlu0 %1092
    %v1094 = vsel %vm732, %v1090, 0.0
    %1095 = vadd.xlane.f32.xlu0 %v1094
    %v1096 = vpop.xlane.xlu0 %1095
    %v1097 = vrcp.pop %v1093
    %v1098 = vrcp.pop %v1096
    %v1099 = vmul.f32 %v1088, %v1097
    %v1100 = vmul.f32 %v1090, %v1098
    %1101 = vrot.lane.b32.xlu0 %v711, 48
    %v1102 = vpop.permute.xlu0 %1101
    %1103 = vrot.lane.b32.xlu0 %v714, 48
    %v1104 = vpop.permute.xlu0 %1103
    %v1108 = vsel %vm732, %v1099, 0
    %v1111 = vsel %vm732, %v1100, 0
    %1113 = vmatprep.subr.mxu0 0.0
    %1114 = vmatpush1.msra.mxu0 %v1102
    %1115 = vmatprep.subr.mxu0 0.0
    %1116 = vmatpush1.msra.mxu0 %v1104
    %1117 = vmatprep.subr.mxu0 0.0
    %1118 = vmatpush1.msra.mxu0 0.0
    %1119 = vmatprep.subr.mxu0 0.0
    %1120 = vmatpush1.msra.mxu0 0.0
    %1121 = vmatprep.subr.mxu0 0.0
    %1122 = vmatpush1.msra.mxu0 0.0
    %1123 = vmatprep.subr.mxu0 0.0
    %1124 = vmatpush1.msra.mxu0 0.0
    %1125 = vmatprep.subr.mxu0 0.0
    %1126 = vmatpush1.msra.mxu0 0.0
    %1127 = vmatprep.subr.mxu0 0.0
    %1128 = vmatpush1.msra.mxu0 0.0
    %1129 = vmatprep.subr.mxu0 0.0
    %1130 = vmatpush1.msra.mxu0 0.0
    %1131 = vmatprep.subr.mxu0 0.0
    %1132 = vmatpush1.msra.mxu0 0.0
    %1133 = vmatprep.subr.mxu0 0.0
    %1134 = vmatpush1.msra.mxu0 0.0
    %1135 = vmatprep.subr.mxu0 0.0
    %1136 = vmatpush1.msra.mxu0 0.0
    %1137 = vmatprep.subr.mxu0 0.0
    %1138 = vmatpush1.msra.mxu0 0.0
    %1139 = vmatprep.subr.mxu0 0.0
    %1140 = vmatpush1.msra.mxu0 0.0
    %1141 = vmatprep.subr.mxu0 0.0
    %1142 = vmatpush1.msra.mxu0 0.0
    %1143 = vmatprep.subr.mxu0 0.0
    %1144 = vmatpush1.msra.mxu0 0.0
    %1145 = vmatprep.subr.mxu0 0.0
    %1146 = vmatpush1.msra.mxu0 0.0
    %1147 = vmatprep.subr.mxu0 0.0
    %1148 = vmatpush1.msra.mxu0 0.0
    %1149 = vmatprep.subr.mxu0 0.0
    %1150 = vmatpush1.msra.mxu0 0.0
    %1151 = vmatprep.subr.mxu0 0.0
    %1152 = vmatpush1.msra.mxu0 0.0
    %1153 = vmatprep.subr.mxu0 0.0
    %1154 = vmatpush1.msra.mxu0 0.0
    %1155 = vmatprep.subr.mxu0 0.0
    %1156 = vmatpush1.msra.mxu0 0.0
    %1157 = vmatprep.subr.mxu0 0.0
    %1158 = vmatpush1.msra.mxu0 0.0
    %1159 = vmatprep.subr.mxu0 0.0
    %1160 = vmatpush1.msra.mxu0 0.0
    %1161 = vmatprep.subr.mxu0 0.0
    %1162 = vmatpush1.msra.mxu0 0.0
    %1163 = vmatprep.subr.mxu0 0.0
    %1164 = vmatpush1.msra.mxu0 0.0
    %1165 = vmatprep.subr.mxu0 0.0
    %1166 = vmatpush1.msra.mxu0 0.0
    %1167 = vmatprep.subr.mxu0 0.0
    %1168 = vmatpush1.msra.mxu0 0.0
    %1169 = vmatprep.subr.mxu0 0.0
    %1170 = vmatpush1.msra.mxu0 0.0
    %1171 = vmatprep.subr.mxu0 0.0
    %1172 = vmatpush1.msra.mxu0 0.0
    %1173 = vmatprep.subr.mxu0 0.0
    %1174 = vmatpush1.msra.mxu0 0.0
    %1175 = vmatprep.subr.mxu0 0.0
    %1176 = vmatpush1.msra.mxu0 0.0
    %1177 = vmatprep.mubr.f32.mxu0 0.0
    %1178 = vmatmul.mubr.f32.gmra.mrb[0].mxu0 %v1108
    %v1179 = vpop.f32.mrb[0].mxu0
    %v1180 = vadd.f32 0.0, %v1179
    %v1181 = vpop.f32.mrb[0].mxu0
    %1182 = vmatprep.mubr.f32.mxu0 0.0
    %1183 = vmatmul.mubr.f32.gmra.mrb[0].mxu0 %v1111
    %v1184 = vpop.f32.mrb[0].mxu0
    %v1185 = vadd.f32 0.0, %v1184
    %v1186 = vpop.f32.mrb[0].mxu0
    %1187 = vdwg.mxu0
    %v1188 = vpack.c.bf16 %v1185, %v1180
    %s1189 = scalar_lea.vmem %s9, 8
    %v1190 = vld [vmem:[%s1189] sm:$0xf]
    %v1191 = vld [vmem:[%s1189 + $0x4] sm:$0xf]
    %v1194 = vunpack.c.l.b16 %v1190
    %v1195 = vunpack.c.l.b16 %v1191
    %v1196 = vpack.c.b16 %v1195, %v1194
    %v1199 = vsel %vm732, %v1188, 0
    %1201 = vmatprep.subr.bf16.mxu0 0
    %1202 = vmatpush1.bf16.msra.mxu0 %v1196
    %1203 = vmatprep.subr.bf16.mxu0 0
    %1204 = vmatpush1.bf16.msra.mxu0 0
    %1205 = vmatprep.subr.bf16.mxu0 0
    %1206 = vmatpush1.bf16.msra.mxu0 0
    %1207 = vmatprep.subr.bf16.mxu0 0
    %1208 = vmatpush1.bf16.msra.mxu0 0
    %1209 = vmatprep.subr.bf16.mxu0 0
    %1210 = vmatpush1.bf16.msra.mxu0 0
    %1211 = vmatprep.subr.bf16.mxu0 0
    %1212 = vmatpush1.bf16.msra.mxu0 0
    %1213 = vmatprep.subr.bf16.mxu0 0
    %1214 = vmatpush1.bf16.msra.mxu0 0
    %1215 = vmatprep.subr.bf16.mxu0 0
    %1216 = vmatpush1.bf16.msra.mxu0 0
    %1217 = vmatprep.subr.bf16.mxu0 0
    %1218 = vmatpush1.bf16.msra.mxu0 0
    %1219 = vmatprep.subr.bf16.mxu0 0
    %1220 = vmatpush1.bf16.msra.mxu0 0
    %1221 = vmatprep.subr.bf16.mxu0 0
    %1222 = vmatpush1.bf16.msra.mxu0 0
    %1223 = vmatprep.subr.bf16.mxu0 0
    %1224 = vmatpush1.bf16.msra.mxu0 0
    %1225 = vmatprep.subr.bf16.mxu0 0
    %1226 = vmatpush1.bf16.msra.mxu0 0
    %1227 = vmatprep.subr.bf16.mxu0 0
    %1228 = vmatpush1.bf16.msra.mxu0 0
    %1229 = vmatprep.subr.bf16.mxu0 0
    %1230 = vmatpush1.bf16.msra.mxu0 0
    %1231 = vmatprep.subr.bf16.mxu0 0
    %1232 = vmatpush1.bf16.msra.mxu0 0
    %1233 = vmatprep.mubr.bf16.mxu0 0
    %1234 = vmatmul.mubr.bf16.gmra.mrb[0].mxu0 %v1199
    %v1235 = vpop.f32.mrb[0].mxu0
    %v1236 = vadd.f32 0.0, %v1235
    %v1237 = vpop.f32.mrb[0].mxu0
    %v1238 = vpop.f32.mrb[0].mxu0
    %v1239 = vadd.f32 0.0, %v1238
    %v1240 = vpop.f32.mrb[0].mxu0
    %1241 = vdwg.mxu0
    %v1242 = vadd.f32 %v982, %v1236
    %v1243 = vadd.f32 %v983, %v1239
    %v1244 = vld [vmem:[%s11] sm:$0x1]
    %v1245 = vld [vmem:[%s12] sm:$0x1]
    %v1246 = vsel %vm601, %v1242, 0.0
    %1247 = vadd.xlane.f32.xlu0 %v1246
    %v1248 = vpop.xlane.xlu0 %1247
    %v1249 = vsel %vm601, %v1243, 0.0
    %1250 = vadd.xlane.f32.xlu0 %v1249
    %v1251 = vpop.xlane.xlu0 %1250
    %v1252 = vmul.f32 %v1248, %v608
    %v1253 = vmul.f32 %v1251, %v608
    %v1254 = vmul.f32 %v1242, %v1242
    %v1255 = vmul.f32 %v1243, %v1243
    %v1256 = vsel %vm601, %v1254, 0.0
    %1257 = vadd.xlane.f32.xlu0 %v1256
    %v1258 = vpop.xlane.xlu0 %1257
    %v1259 = vsel %vm601, %v1255, 0.0
    %1260 = vadd.xlane.f32.xlu0 %v1259
    %v1261 = vpop.xlane.xlu0 %1260
    %v1262 = vmul.f32 %v1258, %v608
    %v1263 = vmul.f32 %v1261, %v608
    %v1264 = vmul.f32 %v1252, %v1252
    %v1265 = vmul.f32 %v1253, %v1253
    %v1266 = vsub.f32 %v1262, %v1264
    %v1267 = vsub.f32 %v1263, %v1265
    %v1268 = vsub.f32 %v1242, %v1252
    %v1269 = vsub.f32 %v1243, %v1253
    %v1270 = vadd.f32 %v1266, 1e-06
    %v1271 = vadd.f32 %v1267, 1e-06
    %v1272 = vrsqrt.pop %v1270
    %v1273 = vrsqrt.pop %v1271
    %v1274 = vmul.f32 %v1268, %v1272
    %v1275 = vmul.f32 %v1269, %v1273
    %v1277 = vlaneseq
    %v1278 = vshrl.u32 %v1277, 7
    %v1279 = vsub.s32 0, %v1278
    %v1280 = vrot.slane %v1244, %v1279
    %v1282 = vmul.f32 %v1274, %v1280
    %v1283 = vmul.f32 %v1275, %v1280
    %v1285 = vlaneseq
    %v1286 = vshrl.u32 %v1285, 7
    %v1287 = vsub.s32 0, %v1286
    %v1288 = vrot.slane %v1245, %v1287
    %v1290 = vadd.f32 %v1282, %v1288
    %v1291 = vadd.f32 %v1283, %v1288
    %v1292 = vpack.c.bf16 %v1291, %v1290
    %v1293 = vld [vmem:[%s13] sm:$0xf]
    %v1294 = vld [vmem:[%s13 + $0x4] sm:$0xf]
    %v1295 = vld [vmem:[%s13 + $0x8] sm:$0xf]
    %v1296 = vld [vmem:[%s13 + $0xc] sm:$0xf]
    %v1297 = vld [vmem:[%s14] sm:$0x1]
    %v1299 = vlaneseq
    %v1300 = vshrl.u32 %v1299, 7
    %v1301 = vsub.s32 0, %v1300
    %v1302 = vrot.slane %v1297, %v1301
    %v1308 = vunpack.c.l.b16 %v1293
    %v1309 = vunpack.c.l.b16 %v1294
    %v1310 = vunpack.c.l.b16 %v1295
    %v1311 = vunpack.c.l.b16 %v1296
    %v1312 = vpack.c.b16 %v1309, %v1308
    %v1313 = vpack.c.b16 %v1311, %v1310
    %v1317 = vsel %vm601, %v1292, 0
    %1319 = vmatprep.subr.bf16.mxu0 0
    %1320 = vmatpush1.bf16.msra.mxu0 %v1312
    %1321 = vmatprep.subr.bf16.mxu0 0
    %1322 = vmatpush1.bf16.msra.mxu0 %v1313
    %1323 = vmatprep.subr.bf16.mxu0 0
    %1324 = vmatpush1.bf16.msra.mxu0 0
    %1325 = vmatprep.subr.bf16.mxu0 0
    %1326 = vmatpush1.bf16.msra.mxu0 0
    %1327 = vmatprep.subr.bf16.mxu0 0
    %1328 = vmatpush1.bf16.msra.mxu0 0
    %1329 = vmatprep.subr.bf16.mxu0 0
    %1330 = vmatpush1.bf16.msra.mxu0 0
    %1331 = vmatprep.subr.bf16.mxu0 0
    %1332 = vmatpush1.bf16.msra.mxu0 0
    %1333 = vmatprep.subr.bf16.mxu0 0
    %1334 = vmatpush1.bf16.msra.mxu0 0
    %1335 = vmatprep.subr.bf16.mxu0 0
    %1336 = vmatpush1.bf16.msra.mxu0 0
    %1337 = vmatprep.subr.bf16.mxu0 0
    %1338 = vmatpush1.bf16.msra.mxu0 0
    %1339 = vmatprep.subr.bf16.mxu0 0
    %1340 = vmatpush1.bf16.msra.mxu0 0
    %1341 = vmatprep.subr.bf16.mxu0 0
    %1342 = vmatpush1.bf16.msra.mxu0 0
    %1343 = vmatprep.subr.bf16.mxu0 0
    %1344 = vmatpush1.bf16.msra.mxu0 0
    %1345 = vmatprep.subr.bf16.mxu0 0
    %1346 = vmatpush1.bf16.msra.mxu0 0
    %1347 = vmatprep.subr.bf16.mxu0 0
    %1348 = vmatpush1.bf16.msra.mxu0 0
    %1349 = vmatprep.subr.bf16.mxu0 0
    %1350 = vmatpush1.bf16.msra.mxu0 0
    %1351 = vmatprep.mubr.bf16.mxu0 0
    %1352 = vmatmul.mubr.bf16.gmra.mrb[0].mxu0 %v1317
    %v1353 = vpop.f32.mrb[0].mxu0
    %v1354 = vadd.f32 %v1302, %v1353
    %v1355 = vpop.f32.mrb[0].mxu0
    %v1356 = vpop.f32.mrb[0].mxu0
    %v1357 = vadd.f32 %v1302, %v1356
    %v1358 = vpop.f32.mrb[0].mxu0
    %1359 = vdwg.mxu0
    %v1360 = vmul.f32 %v1354, 0.5
    %v1361 = vmul.f32 %v1357, 0.5
    %v1362 = vmul.f32 %v1354, 0.70710677
    %v1363 = vmul.f32 %v1357, 0.70710677
    %v1364 = verf.f32.pop %v1362
    %v1365 = verf.f32.pop %v1363
    %v1366 = vadd.f32 %v1364, 1.0
    %v1367 = vadd.f32 %v1365, 1.0
    %v1368 = vmul.f32 %v1360, %v1366
    %v1369 = vmul.f32 %v1361, %v1367
    %v1370 = vpack.c.bf16 %v1369, %v1368
    %v1371 = vld [vmem:[%s15] sm:$0xf]
    %v1372 = vld [vmem:[%s15 + $0x4] sm:$0xf]
    %v1373 = vld [vmem:[%s15 + $0x8] sm:$0xf]
    %v1374 = vld [vmem:[%s15 + $0xc] sm:$0xf]
    %v1375 = vld [vmem:[%s15 + $0x10] sm:$0xf]
    %v1376 = vld [vmem:[%s15 + $0x14] sm:$0xf]
    %v1377 = vld [vmem:[%s15 + $0x18] sm:$0xf]
    %v1378 = vld [vmem:[%s15 + $0x1c] sm:$0xf]
    %v1379 = vld [vmem:[%s15 + $0x20] sm:$0xf]
    %v1380 = vld [vmem:[%s15 + $0x24] sm:$0xf]
    %v1381 = vld [vmem:[%s15 + $0x28] sm:$0xf]
    %v1382 = vld [vmem:[%s15 + $0x2c] sm:$0xf]
    %v1383 = vld [vmem:[%s15 + $0x30] sm:$0xf]
    %v1384 = vld [vmem:[%s15 + $0x34] sm:$0xf]
    %v1385 = vld [vmem:[%s15 + $0x38] sm:$0xf]
    %v1386 = vld [vmem:[%s15 + $0x3c] sm:$0xf]
    %v1387 = vld [vmem:[%s16] sm:$0x1]
    %v1389 = vlaneseq
    %v1390 = vshrl.u32 %v1389, 7
    %v1391 = vsub.s32 0, %v1390
    %v1392 = vrot.slane %v1387, %v1391
    %v1410 = vunpack.c.l.b16 %v1371
    %v1411 = vunpack.c.l.b16 %v1372
    %v1412 = vunpack.c.l.b16 %v1373
    %v1413 = vunpack.c.l.b16 %v1374
    %v1414 = vunpack.c.l.b16 %v1375
    %v1415 = vunpack.c.l.b16 %v1376
    %v1416 = vunpack.c.l.b16 %v1377
    %v1417 = vunpack.c.l.b16 %v1378
    %v1418 = vunpack.c.l.b16 %v1379
    %v1419 = vunpack.c.l.b16 %v1380
    %v1420 = vunpack.c.l.b16 %v1381
    %v1421 = vunpack.c.l.b16 %v1382
    %v1422 = vunpack.c.l.b16 %v1383
    %v1423 = vunpack.c.l.b16 %v1384
    %v1424 = vunpack.c.l.b16 %v1385
    %v1425 = vunpack.c.l.b16 %v1386
    %v1426 = vpack.c.b16 %v1411, %v1410
    %v1427 = vpack.c.b16 %v1413, %v1412
    %v1428 = vpack.c.b16 %v1415, %v1414
    %v1429 = vpack.c.b16 %v1417, %v1416
    %v1430 = vpack.c.b16 %v1419, %v1418
    %v1431 = vpack.c.b16 %v1421, %v1420
    %v1432 = vpack.c.b16 %v1423, %v1422
    %v1433 = vpack.c.b16 %v1425, %v1424
    %1442 = vmatprep.subr.bf16.mxu0 0
    %1443 = vmatpush1.bf16.msra.mxu0 %v1426
    %1444 = vmatprep.subr.bf16.mxu0 0
    %1445 = vmatpush1.bf16.msra.mxu0 %v1427
    %1446 = vmatprep.subr.bf16.mxu0 0
    %1447 = vmatpush1.bf16.msra.mxu0 %v1428
    %1448 = vmatprep.subr.bf16.mxu0 0
    %1449 = vmatpush1.bf16.msra.mxu0 %v1429
    %1450 = vmatprep.subr.bf16.mxu0 0
    %1451 = vmatpush1.bf16.msra.mxu0 %v1430
    %1452 = vmatprep.subr.bf16.mxu0 0
    %1453 = vmatpush1.bf16.msra.mxu0 %v1431
    %1454 = vmatprep.subr.bf16.mxu0 0
    %1455 = vmatpush1.bf16.msra.mxu0 %v1432
    %1456 = vmatprep.subr.bf16.mxu0 0
    %1457 = vmatpush1.bf16.msra.mxu0 %v1433
    %1458 = vmatprep.subr.bf16.mxu0 0
    %1459 = vmatpush1.bf16.msra.mxu0 0
    %1460 = vmatprep.subr.bf16.mxu0 0
    %1461 = vmatpush1.bf16.msra.mxu0 0
    %1462 = vmatprep.subr.bf16.mxu0 0
    %1463 = vmatpush1.bf16.msra.mxu0 0
    %1464 = vmatprep.subr.bf16.mxu0 0
    %1465 = vmatpush1.bf16.msra.mxu0 0
    %1466 = vmatprep.subr.bf16.mxu0 0
    %1467 = vmatpush1.bf16.msra.mxu0 0
    %1468 = vmatprep.subr.bf16.mxu0 0
    %1469 = vmatpush1.bf16.msra.mxu0 0
    %1470 = vmatprep.subr.bf16.mxu0 0
    %1471 = vmatpush1.bf16.msra.mxu0 0
    %1472 = vmatprep.subr.bf16.mxu0 0
    %1473 = vmatpush1.bf16.msra.mxu0 0
    %1474 = vmatprep.mubr.bf16.mxu0 0
    %1475 = vmatmul.mubr.bf16.gmra.mrb[0].mxu0 %v1370
    %v1476 = vpop.f32.mrb[0].mxu0
    %v1477 = vadd.f32 %v1392, %v1476
    %v1478 = vpop.f32.mrb[0].mxu0
    %v1479 = vpop.f32.mrb[0].mxu0
    %v1480 = vadd.f32 %v1392, %v1479
    %v1481 = vpop.f32.mrb[0].mxu0
    %1482 = vdwg.mxu0
    %v1483 = vadd.f32 %v1477, %v1242
    %v1484 = vadd.f32 %v1480, %v1243
    %s1485 = scalar_lea.vmem %s5, 1
    %v1486 = vld [vmem:[%s1485] sm:$0x1]
    %s1487 = scalar_lea.vmem %s6, 1
    %v1488 = vld [vmem:[%s1487] sm:$0x1]
    %v1489 = vsel %vm601, %v1483, 0.0
    %1490 = vadd.xlane.f32.xlu0 %v1489
    %v1491 = vpop.xlane.xlu0 %1490
    %v1492 = vsel %vm601, %v1484, 0.0
    %1493 = vadd.xlane.f32.xlu0 %v1492
    %v1494 = vpop.xlane.xlu0 %1493
    %v1495 = vmul.f32 %v1491, %v608
    %v1496 = vmul.f32 %v1494, %v608
    %v1497 = vmul.f32 %v1483, %v1483
    %v1498 = vmul.f32 %v1484, %v1484
    %v1499 = vsel %vm601, %v1497, 0.0
    %1500 = vadd.xlane.f32.xlu0 %v1499
    %v1501 = vpop.xlane.xlu0 %1500
    %v1502 = vsel %vm601, %v1498, 0.0
    %1503 = vadd.xlane.f32.xlu0 %v1502
    %v1504 = vpop.xlane.xlu0 %1503
    %v1505 = vmul.f32 %v1501, %v608
    %v1506 = vmul.f32 %v1504, %v608
    %v1507 = vmul.f32 %v1495, %v1495
    %v1508 = vmul.f32 %v1496, %v1496
    %v1509 = vsub.f32 %v1505, %v1507
    %v1510 = vsub.f32 %v1506, %v1508
    %v1511 = vsub.f32 %v1483, %v1495
    %v1512 = vsub.f32 %v1484, %v1496
    %v1513 = vadd.f32 %v1509, 1e-06
    %v1514 = vadd.f32 %v1510, 1e-06
    %v1515 = vrsqrt.pop %v1513
    %v1516 = vrsqrt.pop %v1514
    %v1517 = vmul.f32 %v1511, %v1515
    %v1518 = vmul.f32 %v1512, %v1516
    %v1520 = vlaneseq
    %v1521 = vshrl.u32 %v1520, 7
    %v1522 = vsub.s32 0, %v1521
    %v1523 = vrot.slane %v1486, %v1522
    %v1525 = vmul.f32 %v1517, %v1523
    %v1526 = vmul.f32 %v1518, %v1523
    %v1528 = vlaneseq
    %v1529 = vshrl.u32 %v1528, 7
    %v1530 = vsub.s32 0, %v1529
    %v1531 = vrot.slane %v1488, %v1530
    %v1533 = vadd.f32 %v1525, %v1531
    %v1534 = vadd.f32 %v1526, %v1531
    %v1535 = vpack.c.bf16 %v1534, %v1533
    %s1536 = scalar_lea.vmem %s7, 16
    %v1537 = vld [vmem:[%s1536] sm:$0xf]
    %v1538 = vld [vmem:[%s1536 + $0x4] sm:$0xf]
    %v1539 = vld [vmem:[%s1536 + $0x8] sm:$0xf]
    %v1540 = vld [vmem:[%s1536 + $0xc] sm:$0xf]
    %s1541 = scalar_lea.vmem %s8, 1
    %v1542 = vld [vmem:[%s1541] sm:$0x1]
    %v1544 = vlaneseq
    %v1545 = vshrl.u32 %v1544, 7
    %v1546 = vsub.s32 0, %v1545
    %v1547 = vrot.slane %v1542, %v1546
    %v1553 = vunpack.c.l.b16 %v1537
    %v1554 = vunpack.c.l.b16 %v1538
    %v1555 = vunpack.c.l.b16 %v1539
    %v1556 = vunpack.c.l.b16 %v1540
    %v1557 = vpack.c.b16 %v1554, %v1553
    %v1558 = vpack.c.b16 %v1556, %v1555
    %v1562 = vsel %vm601, %v1535, 0
    %1564 = vmatprep.subr.bf16.mxu0 0
    %1565 = vmatpush1.bf16.msra.mxu0 %v1557
    %1566 = vmatprep.subr.bf16.mxu0 0
    %1567 = vmatpush1.bf16.msra.mxu0 %v1558
    %1568 = vmatprep.subr.bf16.mxu0 0
    %1569 = vmatpush1.bf16.msra.mxu0 0
    %1570 = vmatprep.subr.bf16.mxu0 0
    %1571 = vmatpush1.bf16.msra.mxu0 0
    %1572 = vmatprep.subr.bf16.mxu0 0
    %1573 = vmatpush1.bf16.msra.mxu0 0
    %1574 = vmatprep.subr.bf16.mxu0 0
    %1575 = vmatpush1.bf16.msra.mxu0 0
    %1576 = vmatprep.subr.bf16.mxu0 0
    %1577 = vmatpush1.bf16.msra.mxu0 0
    %1578 = vmatprep.subr.bf16.mxu0 0
    %1579 = vmatpush1.bf16.msra.mxu0 0
    %1580 = vmatprep.subr.bf16.mxu0 0
    %1581 = vmatpush1.bf16.msra.mxu0 0
    %1582 = vmatprep.subr.bf16.mxu0 0
    %1583 = vmatpush1.bf16.msra.mxu0 0
    %1584 = vmatprep.subr.bf16.mxu0 0
    %1585 = vmatpush1.bf16.msra.mxu0 0
    %1586 = vmatprep.subr.bf16.mxu0 0
    %1587 = vmatpush1.bf16.msra.mxu0 0
    %1588 = vmatprep.subr.bf16.mxu0 0
    %1589 = vmatpush1.bf16.msra.mxu0 0
    %1590 = vmatprep.subr.bf16.mxu0 0
    %1591 = vmatpush1.bf16.msra.mxu0 0
    %1592 = vmatprep.subr.bf16.mxu0 0
    %1593 = vmatpush1.bf16.msra.mxu0 0
    %1594 = vmatprep.subr.bf16.mxu0 0
    %1595 = vmatpush1.bf16.msra.mxu0 0
    %1596 = vmatprep.mubr.bf16.mxu0 0
    %1597 = vmatmul.mubr.bf16.gmra.mrb[0].mxu0 %v1562
    %v1598 = vpop.f32.mrb[0].mxu0
    %v1599 = vadd.f32 %v1547, %v1598
    %v1600 = vpop.f32.mrb[0].mxu0
    %v1601 = vpop.f32.mrb[0].mxu0
    %v1602 = vadd.f32 %v1547, %v1601
    %v1603 = vpop.f32.mrb[0].mxu0
    %1604 = vdwg.mxu0
    %s1605 = scalar_lea.vmem %s10, 1
    %v1606 = vld [vmem:[%s1605] sm:$0x1]
    %v1608 = vlaneseq
    %v1609 = vshrl.u32 %v1608, 7
    %v1610 = vsub.s32 0, %v1609
    %v1611 = vrot.slane %v1606, %v1610
    %v1613 = vadd.f32 %v1483, %v1611
    %v1614 = vadd.f32 %v1484, %v1611
    %1617 = vrot.lane.b32.xlu0 %v1599, 96
    %v1618 = vpop.permute.xlu0 %1617
    %1619 = vrot.lane.b32.xlu0 %v1602, 96
    %v1620 = vpop.permute.xlu0 %1619
    %v1621 = vsel %vm732, %v1599, 0
    %v1623 = vsel %vm732, %v1602, 0
    %v1625 = vsel %vm732, %v1618, 0
    %v1627 = vsel %vm732, %v1620, 0
    %1629 = vmatprep.subr.mxu0 0.0
    %1630 = vmatpush1.xpose.msra.mxu0 %v1625
    %1631 = vmatprep.subr.mxu0 0.0
    %1632 = vmatpush1.xpose.msra.mxu0 %v1627
    %1633 = vmatprep.subr.mxu0 0.0
    %1634 = vmatpush1.xpose.msra.mxu0 0.0
    %1635 = vmatprep.subr.mxu0 0.0
    %1636 = vmatpush1.xpose.msra.mxu0 0.0
    %1637 = vmatprep.subr.mxu0 0.0
    %1638 = vmatpush1.xpose.msra.mxu0 0.0
    %1639 = vmatprep.subr.mxu0 0.0
    %1640 = vmatpush1.xpose.msra.mxu0 0.0
    %1641 = vmatprep.subr.mxu0 0.0
    %1642 = vmatpush1.xpose.msra.mxu0 0.0
    %1643 = vmatprep.subr.mxu0 0.0
    %1644 = vmatpush1.xpose.msra.mxu0 0.0
    %1645 = vmatprep.subr.mxu0 0.0
    %1646 = vmatpush1.xpose.msra.mxu0 0.0
    %1647 = vmatprep.subr.mxu0 0.0
    %1648 = vmatpush1.xpose.msra.mxu0 0.0
    %1649 = vmatprep.subr.mxu0 0.0
    %1650 = vmatpush1.xpose.msra.mxu0 0.0
    %1651 = vmatprep.subr.mxu0 0.0
    %1652 = vmatpush1.xpose.msra.mxu0 0.0
    %1653 = vmatprep.subr.mxu0 0.0
    %1654 = vmatpush1.xpose.msra.mxu0 0.0
    %1655 = vmatprep.subr.mxu0 0.0
    %1656 = vmatpush1.xpose.msra.mxu0 0.0
    %1657 = vmatprep.subr.mxu0 0.0
    %1658 = vmatpush1.xpose.msra.mxu0 0.0
    %1659 = vmatprep.subr.mxu0 0.0
    %1660 = vmatpush1.xpose.msra.mxu0 0.0
    %1661 = vmatprep.subr.mxu0 0.0
    %1662 = vmatpush1.xpose.msra.mxu0 0.0
    %1663 = vmatprep.subr.mxu0 0.0
    %1664 = vmatpush1.xpose.msra.mxu0 0.0
    %1665 = vmatprep.subr.mxu0 0.0
    %1666 = vmatpush1.xpose.msra.mxu0 0.0
    %1667 = vmatprep.subr.mxu0 0.0
    %1668 = vmatpush1.xpose.msra.mxu0 0.0
    %1669 = vmatprep.subr.mxu0 0.0
    %1670 = vmatpush1.xpose.msra.mxu0 0.0
    %1671 = vmatprep.subr.mxu0 0.0
    %1672 = vmatpush1.xpose.msra.mxu0 0.0
    %1673 = vmatprep.subr.mxu0 0.0
    %1674 = vmatpush1.xpose.msra.mxu0 0.0
    %1675 = vmatprep.subr.mxu0 0.0
    %1676 = vmatpush1.xpose.msra.mxu0 0.0
    %1677 = vmatprep.subr.mxu0 0.0
    %1678 = vmatpush1.xpose.msra.mxu0 0.0
    %1679 = vmatprep.subr.mxu0 0.0
    %1680 = vmatpush1.xpose.msra.mxu0 0.0
    %1681 = vmatprep.subr.mxu0 0.0
    %1682 = vmatpush1.xpose.msra.mxu0 0.0
    %1683 = vmatprep.subr.mxu0 0.0
    %1684 = vmatpush1.xpose.msra.mxu0 0.0
    %1685 = vmatprep.subr.mxu0 0.0
    %1686 = vmatpush1.xpose.msra.mxu0 0.0
    %1687 = vmatprep.subr.mxu0 0.0
    %1688 = vmatpush1.xpose.msra.mxu0 0.0
    %1689 = vmatprep.subr.mxu0 0.0
    %1690 = vmatpush1.xpose.msra.mxu0 0.0
    %1691 = vmatprep.subr.mxu0 0.0
    %1692 = vmatpush1.xpose.msra.mxu0 0.0
    %1693 = vmatprep.mubr.f32.mxu0 0.0
    %1694 = vmatmul.mubr.f32.gmra.mrb[0].mxu0 %v1621
    %v1695 = vpop.f32.mrb[0].mxu0
    %v1696 = vadd.f32 0.0, %v1695
    %v1697 = vpop.f32.mrb[0].mxu0
    %1698 = vmatprep.mubr.f32.mxu0 0.0
    %1699 = vmatmul.mubr.f32.gmra.mrb[0].mxu0 %v1623
    %v1700 = vpop.f32.mrb[0].mxu0
    %v1701 = vadd.f32 0.0, %v1700
    %v1702 = vpop.f32.mrb[0].mxu0
    %1703 = vdwg.mxu0
    %v1704 = vmul.f32 %v1696, 0.25
    %v1705 = vmul.f32 %v1701, 0.25
    %v1706 = vadd.f32 %v1704, %v597
    %v1707 = vadd.f32 %v1705, %v598
    %v1708 = vsel %vm732, %v1706, -inf
    %1709 = vmax.xlane.f32.xlu0 %v1708
    %v1710 = vpop.xlane.xlu0 %1709
    %v1711 = vsel %vm732, %v1707, -inf
    %1712 = vmax.xlane.f32.xlu0 %v1711
    %v1713 = vpop.xlane.xlu0 %1712
    %v1714 = vsub.f32 %v1706, %v1710
    %v1715 = vsub.f32 %v1707, %v1713
    %v1716 = vmul.f32 %v1714, 1.442695
    %v1717 = vpow.pop %v1716
    %v1718 = vmul.f32 %v1715, 1.442695
    %v1719 = vpow.pop %v1718
    %v1720 = vsel %vm732, %v1717, 0.0
    %1721 = vadd.xlane.f32.xlu0 %v1720
    %v1722 = vpop.xlane.xlu0 %1721
    %v1723 = vsel %vm732, %v1719, 0.0
    %1724 = vadd.xlane.f32.xlu0 %v1723
    %v1725 = vpop.xlane.xlu0 %1724
    %v1726 = vrcp.pop %v1722
    %v1727 = vrcp.pop %v1725
    %v1728 = vmul.f32 %v1717, %v1726
    %v1729 = vmul.f32 %v1719, %v1727
    %1730 = vrot.lane.b32.xlu0 %v1599, 64
    %v1731 = vpop.permute.xlu0 %1730
    %1732 = vrot.lane.b32.xlu0 %v1602, 64
    %v1733 = vpop.permute.xlu0 %1732
    %v1737 = vsel %vm732, %v1728, 0
    %v1740 = vsel %vm732, %v1729, 0
    %1742 = vmatprep.subr.mxu0 0.0
    %1743 = vmatpush1.msra.mxu0 %v1731
    %1744 = vmatprep.subr.mxu0 0.0
    %1745 = vmatpush1.msra.mxu0 %v1733
    %1746 = vmatprep.subr.mxu0 0.0
    %1747 = vmatpush1.msra.mxu0 0.0
    %1748 = vmatprep.subr.mxu0 0.0
    %1749 = vmatpush1.msra.mxu0 0.0
    %1750 = vmatprep.subr.mxu0 0.0
    %1751 = vmatpush1.msra.mxu0 0.0
    %1752 = vmatprep.subr.mxu0 0.0
    %1753 = vmatpush1.msra.mxu0 0.0
    %1754 = vmatprep.subr.mxu0 0.0
    %1755 = vmatpush1.msra.mxu0 0.0
    %1756 = vmatprep.subr.mxu0 0.0
    %1757 = vmatpush1.msra.mxu0 0.0
    %1758 = vmatprep.subr.mxu0 0.0
    %1759 = vmatpush1.msra.mxu0 0.0
    %1760 = vmatprep.subr.mxu0 0.0
    %1761 = vmatpush1.msra.mxu0 0.0
    %1762 = vmatprep.subr.mxu0 0.0
    %1763 = vmatpush1.msra.mxu0 0.0
    %1764 = vmatprep.subr.mxu0 0.0
    %1765 = vmatpush1.msra.mxu0 0.0
    %1766 = vmatprep.subr.mxu0 0.0
    %1767 = vmatpush1.msra.mxu0 0.0
    %1768 = vmatprep.subr.mxu0 0.0
    %1769 = vmatpush1.msra.mxu0 0.0
    %1770 = vmatprep.subr.mxu0 0.0
    %1771 = vmatpush1.msra.mxu0 0.0
    %1772 = vmatprep.subr.mxu0 0.0
    %1773 = vmatpush1.msra.mxu0 0.0
    %1774 = vmatprep.subr.mxu0 0.0
    %1775 = vmatpush1.msra.mxu0 0.0
    %1776 = vmatprep.subr.mxu0 0.0
    %1777 = vmatpush1.msra.mxu0 0.0
    %1778 = vmatprep.subr.mxu0 0.0
    %1779 = vmatpush1.msra.mxu0 0.0
    %1780 = vmatprep.subr.mxu0 0.0
    %1781 = vmatpush1.msra.mxu0 0.0
    %1782 = vmatprep.subr.mxu0 0.0
    %1783 = vmatpush1.msra.mxu0 0.0
    %1784 = vmatprep.subr.mxu0 0.0
    %1785 = vmatpush1.msra.mxu0 0.0
    %1786 = vmatprep.subr.mxu0 0.0
    %1787 = vmatpush1.msra.mxu0 0.0
    %1788 = vmatprep.subr.mxu0 0.0
    %1789 = vmatpush1.msra.mxu0 0.0
    %1790 = vmatprep.subr.mxu0 0.0
    %1791 = vmatpush1.msra.mxu0 0.0
    %1792 = vmatprep.subr.mxu0 0.0
    %1793 = vmatpush1.msra.mxu0 0.0
    %1794 = vmatprep.subr.mxu0 0.0
    %1795 = vmatpush1.msra.mxu0 0.0
    %1796 = vmatprep.subr.mxu0 0.0
    %1797 = vmatpush1.msra.mxu0 0.0
    %1798 = vmatprep.subr.mxu0 0.0
    %1799 = vmatpush1.msra.mxu0 0.0
    %1800 = vmatprep.subr.mxu0 0.0
    %1801 = vmatpush1.msra.mxu0 0.0
    %1802 = vmatprep.subr.mxu0 0.0
    %1803 = vmatpush1.msra.mxu0 0.0
    %1804 = vmatprep.subr.mxu0 0.0
    %1805 = vmatpush1.msra.mxu0 0.0
    %1806 = vmatprep.mubr.f32.mxu0 0.0
    %1807 = vmatmul.mubr.f32.gmra.mrb[0].mxu0 %v1737
    %v1808 = vpop.f32.mrb[0].mxu0
    %v1809 = vadd.f32 0.0, %v1808
    %v1810 = vpop.f32.mrb[0].mxu0
    %1811 = vmatprep.mubr.f32.mxu0 0.0
    %1812 = vmatmul.mubr.f32.gmra.mrb[0].mxu0 %v1740
    %v1813 = vpop.f32.mrb[0].mxu0
    %v1814 = vadd.f32 0.0, %v1813
    %v1815 = vpop.f32.mrb[0].mxu0
    %1816 = vdwg.mxu0
    %v1817 = vpack.c.bf16 %v1814, %v1809
    %s1818 = scalar_lea.vmem %s9, 16
    %v1819 = vld [vmem:[%s1818] sm:$0xf]
    %v1820 = vld [vmem:[%s1818 + $0x4] sm:$0xf]
    %v1823 = vunpack.c.l.b16 %v1819
    %v1824 = vunpack.c.l.b16 %v1820
    %v1825 = vpack.c.b16 %v1824, %v1823
    %v1828 = vsel %vm732, %v1817, 0
    %1830 = vmatprep.subr.bf16.mxu0 0
    %1831 = vmatpush1.bf16.msra.mxu0 %v1825
    %1832 = vmatprep.subr.bf16.mxu0 0
    %1833 = vmatpush1.bf16.msra.mxu0 0
    %1834 = vmatprep.subr.bf16.mxu0 0
    %1835 = vmatpush1.bf16.msra.mxu0 0
    %1836 = vmatprep.subr.bf16.mxu0 0
    %1837 = vmatpush1.bf16.msra.mxu0 0
    %1838 = vmatprep.subr.bf16.mxu0 0
    %1839 = vmatpush1.bf16.msra.mxu0 0
    %1840 = vmatprep.subr.bf16.mxu0 0
    %1841 = vmatpush1.bf16.msra.mxu0 0
    %1842 = vmatprep.subr.bf16.mxu0 0
    %1843 = vmatpush1.bf16.msra.mxu0 0
    %1844 = vmatprep.subr.bf16.mxu0 0
    %1845 = vmatpush1.bf16.msra.mxu0 0
    %1846 = vmatprep.subr.bf16.mxu0 0
    %1847 = vmatpush1.bf16.msra.mxu0 0
    %1848 = vmatprep.subr.bf16.mxu0 0
    %1849 = vmatpush1.bf16.msra.mxu0 0
    %1850 = vmatprep.subr.bf16.mxu0 0
    %1851 = vmatpush1.bf16.msra.mxu0 0
    %1852 = vmatprep.subr.bf16.mxu0 0
    %1853 = vmatpush1.bf16.msra.mxu0 0
    %1854 = vmatprep.subr.bf16.mxu0 0
    %1855 = vmatpush1.bf16.msra.mxu0 0
    %1856 = vmatprep.subr.bf16.mxu0 0
    %1857 = vmatpush1.bf16.msra.mxu0 0
    %1858 = vmatprep.subr.bf16.mxu0 0
    %1859 = vmatpush1.bf16.msra.mxu0 0
    %1860 = vmatprep.subr.bf16.mxu0 0
    %1861 = vmatpush1.bf16.msra.mxu0 0
    %1862 = vmatprep.mubr.bf16.mxu0 0
    %1863 = vmatmul.mubr.bf16.gmra.mrb[0].mxu0 %v1828
    %v1864 = vpop.f32.mrb[0].mxu0
    %v1865 = vadd.f32 0.0, %v1864
    %v1866 = vpop.f32.mrb[0].mxu0
    %v1867 = vpop.f32.mrb[0].mxu0
    %v1868 = vadd.f32 0.0, %v1867
    %v1869 = vpop.f32.mrb[0].mxu0
    %1870 = vdwg.mxu0
    %v1871 = vadd.f32 %v1613, %v1865
    %v1872 = vadd.f32 %v1614, %v1868
    %1873 = vrot.lane.b32.xlu0 %v1599, 112
    %v1874 = vpop.permute.xlu0 %1873
    %1875 = vrot.lane.b32.xlu0 %v1602, 112
    %v1876 = vpop.permute.xlu0 %1875
    %1877 = vrot.lane.b32.xlu0 %v1599, 80
    %v1878 = vpop.permute.xlu0 %1877
    %1879 = vrot.lane.b32.xlu0 %v1602, 80
    %v1880 = vpop.permute.xlu0 %1879
    %v1881 = vsel %vm732, %v1874, 0
    %v1883 = vsel %vm732, %v1876, 0
    %v1885 = vsel %vm732, %v1878, 0
    %v1887 = vsel %vm732, %v1880, 0
    %1889 = vmatprep.subr.mxu0 0.0
    %1890 = vmatpush1.xpose.msra.mxu0 %v1885
    %1891 = vmatprep.subr.mxu0 0.0
    %1892 = vmatpush1.xpose.msra.mxu0 %v1887
    %1893 = vmatprep.subr.mxu0 0.0
    %1894 = vmatpush1.xpose.msra.mxu0 0.0
    %1895 = vmatprep.subr.mxu0 0.0
    %1896 = vmatpush1.xpose.msra.mxu0 0.0
    %1897 = vmatprep.subr.mxu0 0.0
    %1898 = vmatpush1.xpose.msra.mxu0 0.0
    %1899 = vmatprep.subr.mxu0 0.0
    %1900 = vmatpush1.xpose.msra.mxu0 0.0
    %1901 = vmatprep.subr.mxu0 0.0
    %1902 = vmatpush1.xpose.msra.mxu0 0.0
    %1903 = vmatprep.subr.mxu0 0.0
    %1904 = vmatpush1.xpose.msra.mxu0 0.0
    %1905 = vmatprep.subr.mxu0 0.0
    %1906 = vmatpush1.xpose.msra.mxu0 0.0
    %1907 = vmatprep.subr.mxu0 0.0
    %1908 = vmatpush1.xpose.msra.mxu0 0.0
    %1909 = vmatprep.subr.mxu0 0.0
    %1910 = vmatpush1.xpose.msra.mxu0 0.0
    %1911 = vmatprep.subr.mxu0 0.0
    %1912 = vmatpush1.xpose.msra.mxu0 0.0
    %1913 = vmatprep.subr.mxu0 0.0
    %1914 = vmatpush1.xpose.msra.mxu0 0.0
    %1915 = vmatprep.subr.mxu0 0.0
    %1916 = vmatpush1.xpose.msra.mxu0 0.0
    %1917 = vmatprep.subr.mxu0 0.0
    %1918 = vmatpush1.xpose.msra.mxu0 0.0
    %1919 = vmatprep.subr.mxu0 0.0
    %1920 = vmatpush1.xpose.msra.mxu0 0.0
    %1921 = vmatprep.subr.mxu0 0.0
    %1922 = vmatpush1.xpose.msra.mxu0 0.0
    %1923 = vmatprep.subr.mxu0 0.0
    %1924 = vmatpush1.xpose.msra.mxu0 0.0
    %1925 = vmatprep.subr.mxu0 0.0
    %1926 = vmatpush1.xpose.msra.mxu0 0.0
    %1927 = vmatprep.subr.mxu0 0.0
    %1928 = vmatpush1.xpose.msra.mxu0 0.0
    %1929 = vmatprep.subr.mxu0 0.0
    %1930 = vmatpush1.xpose.msra.mxu0 0.0
    %1931 = vmatprep.subr.mxu0 0.0
    %1932 = vmatpush1.xpose.msra.mxu0 0.0
    %1933 = vmatprep.subr.mxu0 0.0
    %1934 = vmatpush1.xpose.msra.mxu0 0.0
    %1935 = vmatprep.subr.mxu0 0.0
    %1936 = vmatpush1.xpose.msra.mxu0 0.0
    %1937 = vmatprep.subr.mxu0 0.0
    %1938 = vmatpush1.xpose.msra.mxu0 0.0
    %1939 = vmatprep.subr.mxu0 0.0
    %1940 = vmatpush1.xpose.msra.mxu0 0.0
    %1941 = vmatprep.subr.mxu0 0.0
    %1942 = vmatpush1.xpose.msra.mxu0 0.0
    %1943 = vmatprep.subr.mxu0 0.0
    %1944 = vmatpush1.xpose.msra.mxu0 0.0
    %1945 = vmatprep.subr.mxu0 0.0
    %1946 = vmatpush1.xpose.msra.mxu0 0.0
    %1947 = vmatprep.subr.mxu0 0.0
    %1948 = vmatpush1.xpose.msra.mxu0 0.0
    %1949 = vmatprep.subr.mxu0 0.0
    %1950 = vmatpush1.xpose.msra.mxu0 0.0
    %1951 = vmatprep.subr.mxu0 0.0
    %1952 = vmatpush1.xpose.msra.mxu0 0.0
    %1953 = vmatprep.mubr.f32.mxu0 0.0
    %1954 = vmatmul.mubr.f32.gmra.mrb[0].mxu0 %v1881
    %v1955 = vpop.f32.mrb[0].mxu0
    %v1956 = vadd.f32 0.0, %v1955
    %v1957 = vpop.f32.mrb[0].mxu0
    %1958 = vmatprep.mubr.f32.mxu0 0.0
    %1959 = vmatmul.mubr.f32.gmra.mrb[0].mxu0 %v1883
    %v1960 = vpop.f32.mrb[0].mxu0
    %v1961 = vadd.f32 0.0, %v1960
    %v1962 = vpop.f32.mrb[0].mxu0
    %1963 = vdwg.mxu0
    %v1964 = vmul.f32 %v1956, 0.25
    %v1965 = vmul.f32 %v1961, 0.25
    %v1966 = vadd.f32 %v1964, %v597
    %v1967 = vadd.f32 %v1965, %v598
    %v1968 = vsel %vm732, %v1966, -inf
    %1969 = vmax.xlane.f32.xlu0 %v1968
    %v1970 = vpop.xlane.xlu0 %1969
    %v1971 = vsel %vm732, %v1967, -inf
    %1972 = vmax.xlane.f32.xlu0 %v1971
    %v1973 = vpop.xlane.xlu0 %1972
    %v1974 = vsub.f32 %v1966, %v1970
    %v1975 = vsub.f32 %v1967, %v1973
    %v1976 = vmul.f32 %v1974, 1.442695
    %v1977 = vpow.pop %v1976
    %v1978 = vmul.f32 %v1975, 1.442695
    %v1979 = vpow.pop %v1978
    %v1980 = vsel %vm732, %v1977, 0.0
    %1981 = vadd.xlane.f32.xlu0 %v1980
    %v1982 = vpop.xlane.xlu0 %1981
    %v1983 = vsel %vm732, %v1979, 0.0
    %1984 = vadd.xlane.f32.xlu0 %v1983
    %v1985 = vpop.xlane.xlu0 %1984
    %v1986 = vrcp.pop %v1982
    %v1987 = vrcp.pop %v1985
    %v1988 = vmul.f32 %v1977, %v1986
    %v1989 = vmul.f32 %v1979, %v1987
    %1990 = vrot.lane.b32.xlu0 %v1599, 48
    %v1991 = vpop.permute.xlu0 %1990
    %1992 = vrot.lane.b32.xlu0 %v1602, 48
    %v1993 = vpop.permute.xlu0 %1992
    %v1997 = vsel %vm732, %v1988, 0
    %v2000 = vsel %vm732, %v1989, 0
    %2002 = vmatprep.subr.mxu0 0.0
    %2003 = vmatpush1.msra.mxu0 %v1991
    %2004 = vmatprep.subr.mxu0 0.0
    %2005 = vmatpush1.msra.mxu0 %v1993
    %2006 = vmatprep.subr.mxu0 0.0
    %2007 = vmatpush1.msra.mxu0 0.0
    %2008 = vmatprep.subr.mxu0 0.0
    %2009 = vmatpush1.msra.mxu0 0.0
    %2010 = vmatprep.subr.mxu0 0.0
    %2011 = vmatpush1.msra.mxu0 0.0
    %2012 = vmatprep.subr.mxu0 0.0
    %2013 = vmatpush1.msra.mxu0 0.0
    %2014 = vmatprep.subr.mxu0 0.0
    %2015 = vmatpush1.msra.mxu0 0.0
    %2016 = vmatprep.subr.mxu0 0.0
    %2017 = vmatpush1.msra.mxu0 0.0
    %2018 = vmatprep.subr.mxu0 0.0
    %2019 = vmatpush1.msra.mxu0 0.0
    %2020 = vmatprep.subr.mxu0 0.0
    %2021 = vmatpush1.msra.mxu0 0.0
    %2022 = vmatprep.subr.mxu0 0.0
    %2023 = vmatpush1.msra.mxu0 0.0
    %2024 = vmatprep.subr.mxu0 0.0
    %2025 = vmatpush1.msra.mxu0 0.0
    %2026 = vmatprep.subr.mxu0 0.0
    %2027 = vmatpush1.msra.mxu0 0.0
    %2028 = vmatprep.subr.mxu0 0.0
    %2029 = vmatpush1.msra.mxu0 0.0
    %2030 = vmatprep.subr.mxu0 0.0
    %2031 = vmatpush1.msra.mxu0 0.0
    %2032 = vmatprep.subr.mxu0 0.0
    %2033 = vmatpush1.msra.mxu0 0.0
    %2034 = vmatprep.subr.mxu0 0.0
    %2035 = vmatpush1.msra.mxu0 0.0
    %2036 = vmatprep.subr.mxu0 0.0
    %2037 = vmatpush1.msra.mxu0 0.0
    %2038 = vmatprep.subr.mxu0 0.0
    %2039 = vmatpush1.msra.mxu0 0.0
    %2040 = vmatprep.subr.mxu0 0.0
    %2041 = vmatpush1.msra.mxu0 0.0
    %2042 = vmatprep.subr.mxu0 0.0
    %2043 = vmatpush1.msra.mxu0 0.0
    %2044 = vmatprep.subr.mxu0 0.0
    %2045 = vmatpush1.msra.mxu0 0.0
    %2046 = vmatprep.subr.mxu0 0.0
    %2047 = vmatpush1.msra.mxu0 0.0
    %2048 = vmatprep.subr.mxu0 0.0
    %2049 = vmatpush1.msra.mxu0 0.0
    %2050 = vmatprep.subr.mxu0 0.0
    %2051 = vmatpush1.msra.mxu0 0.0
    %2052 = vmatprep.subr.mxu0 0.0
    %2053 = vmatpush1.msra.mxu0 0.0
    %2054 = vmatprep.subr.mxu0 0.0
    %2055 = vmatpush1.msra.mxu0 0.0
    %2056 = vmatprep.subr.mxu0 0.0
    %2057 = vmatpush1.msra.mxu0 0.0
    %2058 = vmatprep.subr.mxu0 0.0
    %2059 = vmatpush1.msra.mxu0 0.0
    %2060 = vmatprep.subr.mxu0 0.0
    %2061 = vmatpush1.msra.mxu0 0.0
    %2062 = vmatprep.subr.mxu0 0.0
    %2063 = vmatpush1.msra.mxu0 0.0
    %2064 = vmatprep.subr.mxu0 0.0
    %2065 = vmatpush1.msra.mxu0 0.0
    %2066 = vmatprep.mubr.f32.mxu0 0.0
    %2067 = vmatmul.mubr.f32.gmra.mrb[0].mxu0 %v1997
    %v2068 = vpop.f32.mrb[0].mxu0
    %v2069 = vadd.f32 0.0, %v2068
    %v2070 = vpop.f32.mrb[0].mxu0
    %2071 = vmatprep.mubr.f32.mxu0 0.0
    %2072 = vmatmul.mubr.f32.gmra.mrb[0].mxu0 %v2000
    %v2073 = vpop.f32.mrb[0].mxu0
    %v2074 = vadd.f32 0.0, %v2073
    %v2075 = vpop.f32.mrb[0].mxu0
    %2076 = vdwg.mxu0
    %v2077 = vpack.c.bf16 %v2074, %v2069
    %s2078 = scalar_lea.vmem %s9, 24
    %v2079 = vld [vmem:[%s2078] sm:$0xf]
    %v2080 = vld [vmem:[%s2078 + $0x4] sm:$0xf]
    %v2083 = vunpack.c.l.b16 %v2079
    %v2084 = vunpack.c.l.b16 %v2080
    %v2085 = vpack.c.b16 %v2084, %v2083
    %v2088 = vsel %vm732, %v2077, 0
    %2090 = vmatprep.subr.bf16.mxu0 0
    %2091 = vmatpush1.bf16.msra.mxu0 %v2085
    %2092 = vmatprep.subr.bf16.mxu0 0
    %2093 = vmatpush1.bf16.msra.mxu0 0
    %2094 = vmatprep.subr.bf16.mxu0 0
    %2095 = vmatpush1.bf16.msra.mxu0 0
    %2096 = vmatprep.subr.bf16.mxu0 0
    %2097 = vmatpush1.bf16.msra.mxu0 0
    %2098 = vmatprep.subr.bf16.mxu0 0
    %2099 = vmatpush1.bf16.msra.mxu0 0
    %2100 = vmatprep.subr.bf16.mxu0 0
    %2101 = vmatpush1.bf16.msra.mxu0 0
    %2102 = vmatprep.subr.bf16.mxu0 0
    %2103 = vmatpush1.bf16.msra.mxu0 0
    %2104 = vmatprep.subr.bf16.mxu0 0
    %2105 = vmatpush1.bf16.msra.mxu0 0
    %2106 = vmatprep.subr.bf16.mxu0 0
    %2107 = vmatpush1.bf16.msra.mxu0 0
    %2108 = vmatprep.subr.bf16.mxu0 0
    %2109 = vmatpush1.bf16.msra.mxu0 0
    %2110 = vmatprep.subr.bf16.mxu0 0
    %2111 = vmatpush1.bf16.msra.mxu0 0
    %2112 = vmatprep.subr.bf16.mxu0 0
    %2113 = vmatpush1.bf16.msra.mxu0 0
    %2114 = vmatprep.subr.bf16.mxu0 0
    %2115 = vmatpush1.bf16.msra.mxu0 0
    %2116 = vmatprep.subr.bf16.mxu0 0
    %2117 = vmatpush1.bf16.msra.mxu0 0
    %2118 = vmatprep.subr.bf16.mxu0 0
    %2119 = vmatpush1.bf16.msra.mxu0 0
    %2120 = vmatprep.subr.bf16.mxu0 0
    %2121 = vmatpush1.bf16.msra.mxu0 0
    %2122 = vmatprep.mubr.bf16.mxu0 0
    %2123 = vmatmul.mubr.bf16.gmra.mrb[0].mxu0 %v2088
    %v2124 = vpop.f32.mrb[0].mxu0
    %v2125 = vadd.f32 0.0, %v2124
    %v2126 = vpop.f32.mrb[0].mxu0
    %v2127 = vpop.f32.mrb[0].mxu0
    %v2128 = vadd.f32 0.0, %v2127
    %v2129 = vpop.f32.mrb[0].mxu0
    %2130 = vdwg.mxu0
    %v2131 = vadd.f32 %v1871, %v2125
    %v2132 = vadd.f32 %v1872, %v2128
    %s2133 = scalar_lea.vmem %s11, 1
    %v2134 = vld [vmem:[%s2133] sm:$0x1]
    %s2135 = scalar_lea.vmem %s12, 1
    %v2136 = vld [vmem:[%s2135] sm:$0x1]
    %v2137 = vsel %vm601, %v2131, 0.0
    %2138 = vadd.xlane.f32.xlu0 %v2137
    %v2139 = vpop.xlane.xlu0 %2138
    %v2140 = vsel %vm601, %v2132, 0.0
    %2141 = vadd.xlane.f32.xlu0 %v2140
    %v2142 = vpop.xlane.xlu0 %2141
    %v2143 = vmul.f32 %v2139, %v608
    %v2144 = vmul.f32 %v2142, %v608
    %v2145 = vmul.f32 %v2131, %v2131
    %v2146 = vmul.f32 %v2132, %v2132
    %v2147 = vsel %vm601, %v2145, 0.0
    %2148 = vadd.xlane.f32.xlu0 %v2147
    %v2149 = vpop.xlane.xlu0 %2148
    %v2150 = vsel %vm601, %v2146, 0.0
    %2151 = vadd.xlane.f32.xlu0 %v2150
    %v2152 = vpop.xlane.xlu0 %2151
    %v2153 = vmul.f32 %v2149, %v608
    %v2154 = vmul.f32 %v2152, %v608
    %v2155 = vmul.f32 %v2143, %v2143
    %v2156 = vmul.f32 %v2144, %v2144
    %v2157 = vsub.f32 %v2153, %v2155
    %v2158 = vsub.f32 %v2154, %v2156
    %v2159 = vsub.f32 %v2131, %v2143
    %v2160 = vsub.f32 %v2132, %v2144
    %v2161 = vadd.f32 %v2157, 1e-06
    %v2162 = vadd.f32 %v2158, 1e-06
    %v2163 = vrsqrt.pop %v2161
    %v2164 = vrsqrt.pop %v2162
    %v2165 = vmul.f32 %v2159, %v2163
    %v2166 = vmul.f32 %v2160, %v2164
    %v2168 = vlaneseq
    %v2169 = vshrl.u32 %v2168, 7
    %v2170 = vsub.s32 0, %v2169
    %v2171 = vrot.slane %v2134, %v2170
    %v2173 = vmul.f32 %v2165, %v2171
    %v2174 = vmul.f32 %v2166, %v2171
    %v2176 = vlaneseq
    %v2177 = vshrl.u32 %v2176, 7
    %v2178 = vsub.s32 0, %v2177
    %v2179 = vrot.slane %v2136, %v2178
    %v2181 = vadd.f32 %v2173, %v2179
    %v2182 = vadd.f32 %v2174, %v2179
    %v2183 = vpack.c.bf16 %v2182, %v2181
    %s2184 = scalar_lea.vmem %s13, 16
    %v2185 = vld [vmem:[%s2184] sm:$0xf]
    %v2186 = vld [vmem:[%s2184 + $0x4] sm:$0xf]
    %v2187 = vld [vmem:[%s2184 + $0x8] sm:$0xf]
    %v2188 = vld [vmem:[%s2184 + $0xc] sm:$0xf]
    %s2189 = scalar_lea.vmem %s14, 1
    %v2190 = vld [vmem:[%s2189] sm:$0x1]
    %v2192 = vlaneseq
    %v2193 = vshrl.u32 %v2192, 7
    %v2194 = vsub.s32 0, %v2193
    %v2195 = vrot.slane %v2190, %v2194
    %v2201 = vunpack.c.l.b16 %v2185
    %v2202 = vunpack.c.l.b16 %v2186
    %v2203 = vunpack.c.l.b16 %v2187
    %v2204 = vunpack.c.l.b16 %v2188
    %v2205 = vpack.c.b16 %v2202, %v2201
    %v2206 = vpack.c.b16 %v2204, %v2203
    %v2210 = vsel %vm601, %v2183, 0
    %2212 = vmatprep.subr.bf16.mxu0 0
    %2213 = vmatpush1.bf16.msra.mxu0 %v2205
    %2214 = vmatprep.subr.bf16.mxu0 0
    %2215 = vmatpush1.bf16.msra.mxu0 %v2206
    %2216 = vmatprep.subr.bf16.mxu0 0
    %2217 = vmatpush1.bf16.msra.mxu0 0
    %2218 = vmatprep.subr.bf16.mxu0 0
    %2219 = vmatpush1.bf16.msra.mxu0 0
    %2220 = vmatprep.subr.bf16.mxu0 0
    %2221 = vmatpush1.bf16.msra.mxu0 0
    %2222 = vmatprep.subr.bf16.mxu0 0
    %2223 = vmatpush1.bf16.msra.mxu0 0
    %2224 = vmatprep.subr.bf16.mxu0 0
    %2225 = vmatpush1.bf16.msra.mxu0 0
    %2226 = vmatprep.subr.bf16.mxu0 0
    %2227 = vmatpush1.bf16.msra.mxu0 0
    %2228 = vmatprep.subr.bf16.mxu0 0
    %2229 = vmatpush1.bf16.msra.mxu0 0
    %2230 = vmatprep.subr.bf16.mxu0 0
    %2231 = vmatpush1.bf16.msra.mxu0 0
    %2232 = vmatprep.subr.bf16.mxu0 0
    %2233 = vmatpush1.bf16.msra.mxu0 0
    %2234 = vmatprep.subr.bf16.mxu0 0
    %2235 = vmatpush1.bf16.msra.mxu0 0
    %2236 = vmatprep.subr.bf16.mxu0 0
    %2237 = vmatpush1.bf16.msra.mxu0 0
    %2238 = vmatprep.subr.bf16.mxu0 0
    %2239 = vmatpush1.bf16.msra.mxu0 0
    %2240 = vmatprep.subr.bf16.mxu0 0
    %2241 = vmatpush1.bf16.msra.mxu0 0
    %2242 = vmatprep.subr.bf16.mxu0 0
    %2243 = vmatpush1.bf16.msra.mxu0 0
    %2244 = vmatprep.mubr.bf16.mxu0 0
    %2245 = vmatmul.mubr.bf16.gmra.mrb[0].mxu0 %v2210
    %v2246 = vpop.f32.mrb[0].mxu0
    %v2247 = vadd.f32 %v2195, %v2246
    %v2248 = vpop.f32.mrb[0].mxu0
    %v2249 = vpop.f32.mrb[0].mxu0
    %v2250 = vadd.f32 %v2195, %v2249
    %v2251 = vpop.f32.mrb[0].mxu0
    %2252 = vdwg.mxu0
    %v2253 = vmul.f32 %v2247, 0.5
    %v2254 = vmul.f32 %v2250, 0.5
    %v2255 = vmul.f32 %v2247, 0.70710677
    %v2256 = vmul.f32 %v2250, 0.70710677
    %v2257 = verf.f32.pop %v2255
    %v2258 = verf.f32.pop %v2256
    %v2259 = vadd.f32 %v2257, 1.0
    %v2260 = vadd.f32 %v2258, 1.0
    %v2261 = vmul.f32 %v2253, %v2259
    %v2262 = vmul.f32 %v2254, %v2260
    %v2263 = vpack.c.bf16 %v2262, %v2261
    %s2264 = scalar_lea.vmem %s15, 64
    %v2265 = vld [vmem:[%s2264] sm:$0xf]
    %v2266 = vld [vmem:[%s2264 + $0x4] sm:$0xf]
    %v2267 = vld [vmem:[%s2264 + $0x8] sm:$0xf]
    %v2268 = vld [vmem:[%s2264 + $0xc] sm:$0xf]
    %v2269 = vld [vmem:[%s2264 + $0x10] sm:$0xf]
    %v2270 = vld [vmem:[%s2264 + $0x14] sm:$0xf]
    %v2271 = vld [vmem:[%s2264 + $0x18] sm:$0xf]
    %v2272 = vld [vmem:[%s2264 + $0x1c] sm:$0xf]
    %v2273 = vld [vmem:[%s2264 + $0x20] sm:$0xf]
    %v2274 = vld [vmem:[%s2264 + $0x24] sm:$0xf]
    %v2275 = vld [vmem:[%s2264 + $0x28] sm:$0xf]
    %v2276 = vld [vmem:[%s2264 + $0x2c] sm:$0xf]
    %v2277 = vld [vmem:[%s2264 + $0x30] sm:$0xf]
    %v2278 = vld [vmem:[%s2264 + $0x34] sm:$0xf]
    %v2279 = vld [vmem:[%s2264 + $0x38] sm:$0xf]
    %v2280 = vld [vmem:[%s2264 + $0x3c] sm:$0xf]
    %s2281 = scalar_lea.vmem %s16, 1
    %v2282 = vld [vmem:[%s2281] sm:$0x1]
    %v2284 = vlaneseq
    %v2285 = vshrl.u32 %v2284, 7
    %v2286 = vsub.s32 0, %v2285
    %v2287 = vrot.slane %v2282, %v2286
    %v2305 = vunpack.c.l.b16 %v2265
    %v2306 = vunpack.c.l.b16 %v2266
    %v2307 = vunpack.c.l.b16 %v2267
    %v2308 = vunpack.c.l.b16 %v2268
    %v2309 = vunpack.c.l.b16 %v2269
    %v2310 = vunpack.c.l.b16 %v2270
    %v2311 = vunpack.c.l.b16 %v2271
    %v2312 = vunpack.c.l.b16 %v2272
    %v2313 = vunpack.c.l.b16 %v2273
    %v2314 = vunpack.c.l.b16 %v2274
    %v2315 = vunpack.c.l.b16 %v2275
    %v2316 = vunpack.c.l.b16 %v2276
    %v2317 = vunpack.c.l.b16 %v2277
    %v2318 = vunpack.c.l.b16 %v2278
    %v2319 = vunpack.c.l.b16 %v2279
    %v2320 = vunpack.c.l.b16 %v2280
    %v2321 = vpack.c.b16 %v2306, %v2305
    %v2322 = vpack.c.b16 %v2308, %v2307
    %v2323 = vpack.c.b16 %v2310, %v2309
    %v2324 = vpack.c.b16 %v2312, %v2311
    %v2325 = vpack.c.b16 %v2314, %v2313
    %v2326 = vpack.c.b16 %v2316, %v2315
    %v2327 = vpack.c.b16 %v2318, %v2317
    %v2328 = vpack.c.b16 %v2320, %v2319
    %2337 = vmatprep.subr.bf16.mxu0 0
    %2338 = vmatpush1.bf16.msra.mxu0 %v2321
    %2339 = vmatprep.subr.bf16.mxu0 0
    %2340 = vmatpush1.bf16.msra.mxu0 %v2322
    %2341 = vmatprep.subr.bf16.mxu0 0
    %2342 = vmatpush1.bf16.msra.mxu0 %v2323
    %2343 = vmatprep.subr.bf16.mxu0 0
    %2344 = vmatpush1.bf16.msra.mxu0 %v2324
    %2345 = vmatprep.subr.bf16.mxu0 0
    %2346 = vmatpush1.bf16.msra.mxu0 %v2325
    %2347 = vmatprep.subr.bf16.mxu0 0
    %2348 = vmatpush1.bf16.msra.mxu0 %v2326
    %2349 = vmatprep.subr.bf16.mxu0 0
    %2350 = vmatpush1.bf16.msra.mxu0 %v2327
    %2351 = vmatprep.subr.bf16.mxu0 0
    %2352 = vmatpush1.bf16.msra.mxu0 %v2328
    %2353 = vmatprep.subr.bf16.mxu0 0
    %2354 = vmatpush1.bf16.msra.mxu0 0
    %2355 = vmatprep.subr.bf16.mxu0 0
    %2356 = vmatpush1.bf16.msra.mxu0 0
    %2357 = vmatprep.subr.bf16.mxu0 0
    %2358 = vmatpush1.bf16.msra.mxu0 0
    %2359 = vmatprep.subr.bf16.mxu0 0
    %2360 = vmatpush1.bf16.msra.mxu0 0
    %2361 = vmatprep.subr.bf16.mxu0 0
    %2362 = vmatpush1.bf16.msra.mxu0 0
    %2363 = vmatprep.subr.bf16.mxu0 0
    %2364 = vmatpush1.bf16.msra.mxu0 0
    %2365 = vmatprep.subr.bf16.mxu0 0
    %2366 = vmatpush1.bf16.msra.mxu0 0
    %2367 = vmatprep.subr.bf16.mxu0 0
    %2368 = vmatpush1.bf16.msra.mxu0 0
    %2369 = vmatprep.mubr.bf16.mxu0 0
    %2370 = vmatmul.mubr.bf16.gmra.mrb[0].mxu0 %v2263
    %v2371 = vpop.f32.mrb[0].mxu0
    %v2372 = vadd.f32 %v2287, %v2371
    %v2373 = vpop.f32.mrb[0].mxu0
    %v2374 = vpop.f32.mrb[0].mxu0
    %v2375 = vadd.f32 %v2287, %v2374
    %v2376 = vpop.f32.mrb[0].mxu0
    %2377 = vdwg.mxu0
    %v2378 = vadd.f32 %v2372, %v2131
    %v2379 = vadd.f32 %v2375, %v2132
    %v2380 = vld [vmem:[%s3] sm:$0x3]
    %v2382 = vsel %vm732, %v2380, 0
    %2384 = vmatprep.subr.mxu0 0.0
    %2385 = vmatpush1.msra.mxu0 %v2378
    %2386 = vmatprep.subr.mxu0 0.0
    %2387 = vmatpush1.msra.mxu0 %v2379
    %2388 = vmatprep.subr.mxu0 0.0
    %2389 = vmatpush1.msra.mxu0 0.0
    %2390 = vmatprep.subr.mxu0 0.0
    %2391 = vmatpush1.msra.mxu0 0.0
    %2392 = vmatprep.subr.mxu0 0.0
    %2393 = vmatpush1.msra.mxu0 0.0
    %2394 = vmatprep.subr.mxu0 0.0
    %2395 = vmatpush1.msra.mxu0 0.0
    %2396 = vmatprep.subr.mxu0 0.0
    %2397 = vmatpush1.msra.mxu0 0.0
    %2398 = vmatprep.subr.mxu0 0.0
    %2399 = vmatpush1.msra.mxu0 0.0
    %2400 = vmatprep.subr.mxu0 0.0
    %2401 = vmatpush1.msra.mxu0 0.0
    %2402 = vmatprep.subr.mxu0 0.0
    %2403 = vmatpush1.msra.mxu0 0.0
    %2404 = vmatprep.subr.mxu0 0.0
    %2405 = vmatpush1.msra.mxu0 0.0
    %2406 = vmatprep.subr.mxu0 0.0
    %2407 = vmatpush1.msra.mxu0 0.0
    %2408 = vmatprep.subr.mxu0 0.0
    %2409 = vmatpush1.msra.mxu0 0.0
    %2410 = vmatprep.subr.mxu0 0.0
    %2411 = vmatpush1.msra.mxu0 0.0
    %2412 = vmatprep.subr.mxu0 0.0
    %2413 = vmatpush1.msra.mxu0 0.0
    %2414 = vmatprep.subr.mxu0 0.0
    %2415 = vmatpush1.msra.mxu0 0.0
    %2416 = vmatprep.subr.mxu0 0.0
    %2417 = vmatpush1.msra.mxu0 0.0
    %2418 = vmatprep.subr.mxu0 0.0
    %2419 = vmatpush1.msra.mxu0 0.0
    %2420 = vmatprep.subr.mxu0 0.0
    %2421 = vmatpush1.msra.mxu0 0.0
    %2422 = vmatprep.subr.mxu0 0.0
    %2423 = vmatpush1.msra.mxu0 0.0
    %2424 = vmatprep.subr.mxu0 0.0
    %2425 = vmatpush1.msra.mxu0 0.0
    %2426 = vmatprep.subr.mxu0 0.0
    %2427 = vmatpush1.msra.mxu0 0.0
    %2428 = vmatprep.subr.mxu0 0.0
    %2429 = vmatpush1.msra.mxu0 0.0
    %2430 = vmatprep.subr.mxu0 0.0
    %2431 = vmatpush1.msra.mxu0 0.0
    %2432 = vmatprep.subr.mxu0 0.0
    %2433 = vmatpush1.msra.mxu0 0.0
    %2434 = vmatprep.subr.mxu0 0.0
    %2435 = vmatpush1.msra.mxu0 0.0
    %2436 = vmatprep.subr.mxu0 0.0
    %2437 = vmatpush1.msra.mxu0 0.0
    %2438 = vmatprep.subr.mxu0 0.0
    %2439 = vmatpush1.msra.mxu0 0.0
    %2440 = vmatprep.subr.mxu0 0.0
    %2441 = vmatpush1.msra.mxu0 0.0
    %2442 = vmatprep.subr.mxu0 0.0
    %2443 = vmatpush1.msra.mxu0 0.0
    %2444 = vmatprep.subr.mxu0 0.0
    %2445 = vmatpush1.msra.mxu0 0.0
    %2446 = vmatprep.subr.mxu0 0.0
    %2447 = vmatpush1.msra.mxu0 0.0
    %2448 = vmatprep.mubr.f32.mxu0 0.0
    %2449 = vmatmul.mubr.f32.gmra.mrb[0].mxu0 %v2382
    %v2450 = vpop.f32.mrb[0].mxu0
    %v2451 = vadd.f32 0.0, %v2450
    %v2452 = vpop.f32.mrb[0].mxu0
    %2453 = vdwg.mxu0
    %v2454 = vld [vmem:[%s17] sm:$0x1]
    %v2455 = vld [vmem:[%s18] sm:$0x1]
    %vm2456 = vcmask 254976
    %v2457 = vsel %vm2456, %v2451, 0.0
    %2458 = vadd.xlane.f32.xlu0 %v2457
    %v2459 = vpop.xlane.xlu0 %2458
    %v2460 = vmul.f32 %v2459, %v608
    %v2461 = vmul.f32 %v2451, %v2451
    %v2462 = vsel %vm2456, %v2461, 0.0
    %2463 = vadd.xlane.f32.xlu0 %v2462
    %v2464 = vpop.xlane.xlu0 %2463
    %v2465 = vmul.f32 %v2464, %v608
    %v2466 = vmul.f32 %v2460, %v2460
    %v2467 = vsub.f32 %v2465, %v2466
    %v2468 = vsub.f32 %v2451, %v2460
    %v2469 = vadd.f32 %v2467, 1e-06
    %v2470 = vrsqrt.pop %v2469
    %v2471 = vmul.f32 %v2468, %v2470
    %v2473 = vlaneseq
    %v2474 = vshrl.u32 %v2473, 7
    %v2475 = vsub.s32 0, %v2474
    %v2476 = vrot.slane %v2454, %v2475
    %v2478 = vmul.f32 %v2471, %v2476
    %v2480 = vlaneseq
    %v2481 = vshrl.u32 %v2480, 7
    %v2482 = vsub.s32 0, %v2481
    %v2483 = vrot.slane %v2455, %v2482
    %v2485 = vadd.f32 %v2478, %v2483
    %v2486 = vld [vmem:[%s19] sm:$0xff]
    %v2487 = vld [vmem:[%s19 + $0x8] sm:$0xff]
    %v2488 = vld [vmem:[%s19 + $0x10] sm:$0xff]
    %v2489 = vld [vmem:[%s19 + $0x18] sm:$0xff]
    %v2490 = vld [vmem:[%s20] sm:$0x1]
    %v2492 = vlaneseq
    %v2493 = vshrl.u32 %v2492, 7
    %v2494 = vsub.s32 0, %v2493
    %v2495 = vrot.slane %v2490, %v2494
    %v2498 = vsel %vm601, %v2485, 0
    %2500 = vmatprep.subr.mxu0 0.0
    %2501 = vmatpush1.msra.mxu0 %v2486
    %2502 = vmatprep.subr.mxu0 0.0
    %2503 = vmatpush1.msra.mxu0 %v2487
    %2504 = vmatprep.subr.mxu0 0.0
    %2505 = vmatpush1.msra.mxu0 %v2488
    %2506 = vmatprep.subr.mxu0 0.0
    %2507 = vmatpush1.msra.mxu0 %v2489
    %2508 = vmatprep.subr.mxu0 0.0
    %2509 = vmatpush1.msra.mxu0 0.0
    %2510 = vmatprep.subr.mxu0 0.0
    %2511 = vmatpush1.msra.mxu0 0.0
    %2512 = vmatprep.subr.mxu0 0.0
    %2513 = vmatpush1.msra.mxu0 0.0
    %2514 = vmatprep.subr.mxu0 0.0
    %2515 = vmatpush1.msra.mxu0 0.0
    %2516 = vmatprep.subr.mxu0 0.0
    %2517 = vmatpush1.msra.mxu0 0.0
    %2518 = vmatprep.subr.mxu0 0.0
    %2519 = vmatpush1.msra.mxu0 0.0
    %2520 = vmatprep.subr.mxu0 0.0
    %2521 = vmatpush1.msra.mxu0 0.0
    %2522 = vmatprep.subr.mxu0 0.0
    %2523 = vmatpush1.msra.mxu0 0.0
    %2524 = vmatprep.subr.mxu0 0.0
    %2525 = vmatpush1.msra.mxu0 0.0
    %2526 = vmatprep.subr.mxu0 0.0
    %2527 = vmatpush1.msra.mxu0 0.0
    %2528 = vmatprep.subr.mxu0 0.0
    %2529 = vmatpush1.msra.mxu0 0.0
    %2530 = vmatprep.subr.mxu0 0.0
    %2531 = vmatpush1.msra.mxu0 0.0
    %2532 = vmatprep.subr.mxu0 0.0
    %2533 = vmatpush1.msra.mxu0 0.0
    %2534 = vmatprep.subr.mxu0 0.0
    %2535 = vmatpush1.msra.mxu0 0.0
    %2536 = vmatprep.subr.mxu0 0.0
    %2537 = vmatpush1.msra.mxu0 0.0
    %2538 = vmatprep.subr.mxu0 0.0
    %2539 = vmatpush1.msra.mxu0 0.0
    %2540 = vmatprep.subr.mxu0 0.0
    %2541 = vmatpush1.msra.mxu0 0.0
    %2542 = vmatprep.subr.mxu0 0.0
    %2543 = vmatpush1.msra.mxu0 0.0
    %2544 = vmatprep.subr.mxu0 0.0
    %2545 = vmatpush1.msra.mxu0 0.0
    %2546 = vmatprep.subr.mxu0 0.0
    %2547 = vmatpush1.msra.mxu0 0.0
    %2548 = vmatprep.subr.mxu0 0.0
    %2549 = vmatpush1.msra.mxu0 0.0
    %2550 = vmatprep.subr.mxu0 0.0
    %2551 = vmatpush1.msra.mxu0 0.0
    %2552 = vmatprep.subr.mxu0 0.0
    %2553 = vmatpush1.msra.mxu0 0.0
    %2554 = vmatprep.subr.mxu0 0.0
    %2555 = vmatpush1.msra.mxu0 0.0
    %2556 = vmatprep.subr.mxu0 0.0
    %2557 = vmatpush1.msra.mxu0 0.0
    %2558 = vmatprep.subr.mxu0 0.0
    %2559 = vmatpush1.msra.mxu0 0.0
    %2560 = vmatprep.subr.mxu0 0.0
    %2561 = vmatpush1.msra.mxu0 0.0
    %2562 = vmatprep.subr.mxu0 0.0
    %2563 = vmatpush1.msra.mxu0 0.0
    %2564 = vmatprep.mubr.f32.mxu0 0.0
    %2565 = vmatmul.mubr.f32.gmra.mrb[0].mxu0 %v2498
    %v2566 = vpop.f32.mrb[0].mxu0
    %v2567 = vadd.f32 %v2495, %v2566
    %v2568 = vpop.f32.mrb[0].mxu0
    %2569 = vdwg.mxu0
    %vm2570 = vcmask 9216
    %v2571 = vsel %vm2570, %v2567, -inf
    %2572 = vmax.xlane.f32.xlu0 %v2571
    %v2573 = vpop.xlane.xlu0 %2572
    %v2574 = vsub.f32 %v2567, %v2573
    %v2575 = vmul.f32 %v2574, 1.442695
    %v2576 = vpow.pop %v2575
    %v2577 = vsel %vm2570, %v2576, 0.0
    %2578 = vadd.xlane.f32.xlu0 %v2577
    %v2579 = vpop.xlane.xlu0 %2578
    %v2580 = vrcp.pop %v2579
    %v2581 = vmul.f32 %v2576, %v2580
    %v2582 = vsel %vm2570, %v2581, 0.0
    %v2583 = vrot.slane %v2582, 4
    %v2584 = vadd.f32 %v2582, %v2583
    %v2585 = vrot.slane %v2584, 2
    %v2586 = vadd.f32 %v2584, %v2585
    %v2587 = vrot.slane %v2586, 1
    %v2588 = vadd.f32 %v2586, %v2587
    %v2589 = vrcp.pop 2.0
    %v2590 = vmul.f32 %v2588, %v2589
    %vm2591 = vcmask 8192
    %2592 = vst.msk [vmem:[#allocation2] sm:$0x1] %vm2591, %v2590
    // Predicated region
    $region86: #{_lambda_.1} parent=1 // pred_check
      _
    $region87: #{_lambda_.1} parent=1 // pred_check_branch
      %2594 = sbr.rel (0) target = $region89
    $region88: #{_lambda_.1} parent=1 // pred_region
      %s2596 = ssub.s32 16, 16
      %2597 = vsyncadd [#allocation3], %s2596
      %s2599 = sshll.u32 [#allocation2], 4
      %s2600 = int_to_ptr.vmem [resolvable:$true] %s2599
      %2602 = dma.vmem_to_hbm [thread:$0]  %s2600, 16, %s21, [#allocation3]
    $region89: #{_lambda_.1} parent=1 // pred_fallthru
      _
    // Predicated region
    $region90: #{_lambda_.1} parent=1 // pred_check
      _
    $region91: #{_lambda_.1} parent=1 // pred_check_branch
      %2604 = sbr.rel (0) target = $region93
    $region92: #{_lambda_.1} parent=1 // pred_region
      %2605 = dma.done [#allocation3], 16
    $region93: #{_lambda_.1} parent=1 // pred_fallthru
      _
    %2606 = vsyncpa [#allocation3], 1

</llo_original>
